<compile_context>
chip_gen: v7x
topology: tpu7x:2x2x1
jax: 0.10.0
libtpu: 0.0.40
codegen_flags: <defaults>
</compile_context>

<pallas_src>
import functools

import jax
import jax.numpy as jnp
import numpy as np
from jax import lax
from jax.experimental import pallas as pl
from jax.experimental.pallas import tpu as pltpu

NUM_GROUPS = 32
EPS = 1e-6


def _chunk_channel_range(j, t, C, T):
    """Channels c with c*T + t in [j*C, (j+1)*C): the (chunk j, time t) window."""
    c_lo = -((t - j * C) // T)          # ceil((j*C - t) / T)
    c_hi = -((t - (j + 1) * C) // T)    # ceil(((j+1)*C - t) / T)
    return max(0, c_lo), min(C, c_hi)


# -----------------------------------------------------------------------------
# Fused kernel: GroupNorm + q/k/v conv + "buggy" attention + proj_out + residual
# One grid step == one batch element; everything stays in VMEM.
# -----------------------------------------------------------------------------
def _fused_attn_kernel(x_ref, wqkv_ref, bqkv_ref, wp_ref, bp_ref,
                       gamma_ref, beta_ref, agg_ref, aggt_ref,
                       o_ref, qkv_scr, h_scr, *, C, T, HW, G):
    f32 = jnp.float32
    bf16 = jnp.bfloat16
    THW = T * HW
    gs = C // G

    x = x_ref[0].astype(f32)                                  # (C, THW)

    # ---- GroupNorm statistics: lane reductions + tiny group matmuls (no slab reshape)
    csum = jnp.sum(x, axis=-1, keepdims=True)                 # (C, 1)
    csq = jnp.sum(x * x, axis=-1, keepdims=True)              # (C, 1)
    inv_n = 1.0 / float(gs * THW)
    gmean = jnp.dot(agg_ref[...], csum, preferred_element_type=f32) * inv_n   # (G, 1)
    gex2 = jnp.dot(agg_ref[...], csq, preferred_element_type=f32) * inv_n     # (G, 1)
    grstd = lax.rsqrt(gex2 - gmean * gmean + EPS)                             # (G, 1)
    mean_c = jnp.dot(aggt_ref[...], gmean, preferred_element_type=f32)        # (C, 1)
    rstd_c = jnp.dot(aggt_ref[...], grstd, preferred_element_type=f32)        # (C, 1)

    # Fold norm+affine: h = x * a + shift; the shift goes into the qkv bias.
    a = gamma_ref[...] * rstd_c                               # (C, 1)
    shift = beta_ref[...] - a * mean_c                        # (C, 1)

    # ---- stacked q/k/v 1x1x1 conv on the MXU (bf16 operands, f32 accumulation) ----
    wqkv = wqkv_ref[...]                                      # (3C, C) bf16 (wq pre-scaled)
    b_eff = (jnp.dot(wqkv, shift.astype(bf16), preferred_element_type=f32)
             + bqkv_ref[...])                                 # (3C, 1)
    xs = (x * a).astype(bf16)                                 # (C, THW)
    qkv = jnp.dot(wqkv, xs, preferred_element_type=f32) + b_eff   # (3C, THW) f32
    qkv_scr[...] = qkv

    qoff, koff, voff = 0, C, 2 * C

    # ---- attention over the module's "buggy" (b*t, c, h*w) chunks ----
    # Chunk j == rows g = c*T + t with g in [j*C, (j+1)*C) of the row-major (C*T, HW)
    # view; per (chunk, time) that is a contiguous channel window, so only static
    # rectangular slices are needed.
    for j in range(T):
        s = None
        for t in range(T):
            c_lo, c_hi = _chunk_channel_range(j, t, C, T)
            if c_hi <= c_lo:
                continue
            qw = qkv_scr[qoff + c_lo:qoff + c_hi, t * HW:(t + 1) * HW].astype(bf16)
            kw = qkv_scr[koff + c_lo:koff + c_hi, t * HW:(t + 1) * HW].astype(bf16)
            # s[m, n] += sum_c qw[c, m] * kw[c, n]   (contract dim 0; no explicit .T)
            d = lax.dot_general(qw, kw, (((0,), (0,)), ((), ())),
                                preferred_element_type=f32)   # (HW, HW)
            s = d if s is None else s + d

        # softmax over keys (last axis); 1/sqrt(C) was folded into wq/bq
        s = s - jnp.max(s, axis=-1, keepdims=True)
        p = jnp.exp(s)
        p = p * pl.reciprocal(jnp.sum(p, axis=-1, keepdims=True), approx=True)
        pb = p.astype(bf16)

        for t in range(T):
            c_lo, c_hi = _chunk_channel_range(j, t, C, T)
            if c_hi <= c_lo:
                continue
            vw = qkv_scr[voff + c_lo:voff + c_hi, t * HW:(t + 1) * HW].astype(bf16)
            # h[c, m] = sum_n vw[c, n] * p[m, n]  -> lands at channels [c_lo,c_hi),
            # lanes [t*HW, (t+1)*HW) of the un-scrambled (C, THW) slab.
            hblk = lax.dot_general(vw, pb, (((1,), (1,)), ((), ())),
                                   preferred_element_type=f32)   # (nc, HW)
            h_scr[c_lo:c_hi, t * HW:(t + 1) * HW] = hblk

    # ---- proj_out (1x1x1 conv) + residual add ----
    proj = (jnp.dot(wp_ref[...], h_scr[...].astype(bf16), preferred_element_type=f32)
            + bp_ref[...])                                    # (C, THW)
    o_ref[0] = (x_ref[0].astype(f32) + proj).astype(o_ref.dtype)


# -----------------------------------------------------------------------------
# Wrapper
# -----------------------------------------------------------------------------
@jax.jit
def attn_block_3d(x, params):
    B, C, T, H, W = x.shape
    HW = H * W
    THW = T * HW
    G = NUM_GROUPS
    assert C % G == 0, "GroupNorm(32) requires in_channels % 32 == 0"
    f32 = jnp.float32
    bf16 = jnp.bfloat16

    x_flat = x.reshape(B, C, THW)

    # Fold the attention scale into wq/bq at trace time; stack q/k/v weights.
    scale = float(C) ** -0.5
    wqkv = jnp.concatenate(
        [params["wq"].astype(f32) * scale,
         params["wk"].astype(f32),
         params["wv"].astype(f32)], axis=0).astype(bf16)          # (3C, C)
    bqkv = jnp.concatenate(
        [params["bq"].astype(f32) * scale,
         params["bk"].astype(f32),
         params["bv"].astype(f32)], axis=0).reshape(3 * C, 1)     # (3C, 1) f32
    wp = params["wp"].astype(bf16)                                # (C, C)
    bp = params["bp"].reshape(C, 1).astype(f32)
    gamma = params["gamma"].reshape(C, 1).astype(f32)
    beta = params["beta"].reshape(C, 1).astype(f32)

    # Group-aggregation / broadcast-back matrices (trace-time constants).
    gs = C // G
    grp = np.arange(C, dtype=np.int32) // gs
    agg_np = (grp[None, :] == np.arange(G, dtype=np.int32)[:, None]).astype(np.float32)
    agg = jnp.asarray(agg_np)                                     # (G, C)
    aggt = jnp.asarray(np.ascontiguousarray(agg_np.T))            # (C, G)

    kernel = functools.partial(_fused_attn_kernel, C=C, T=T, HW=HW, G=G)

    slab = pl.BlockSpec((1, C, THW), lambda b: (b, 0, 0))

    def full2d(r, c):
        return pl.BlockSpec((r, c), lambda b: (0, 0))

    out_flat = pl.pallas_call(
        kernel,
        grid=(B,),
        in_specs=[slab,
                  full2d(3 * C, C), full2d(3 * C, 1),
                  full2d(C, C), full2d(C, 1),
                  full2d(C, 1), full2d(C, 1),
                  full2d(G, C), full2d(C, G)],
        out_specs=slab,
        out_shape=jax.ShapeDtypeStruct((B, C, THW), x.dtype),
        scratch_shapes=[pltpu.VMEM((3 * C, THW), jnp.float32),
                        pltpu.VMEM((C, THW), jnp.float32)],
        input_output_aliases={0: 0},
        compiler_params=pltpu.CompilerParams(
            dimension_semantics=("parallel",),
            vmem_limit_bytes=48 * 1024 * 1024),
    )(x_flat, wqkv, bqkv, wp, bp, gamma, beta, agg, aggt)

    return out_flat.reshape(B, C, T, H, W)


# -----------------------------------------------------------------------------
# Pure-JAX reference (mirrors the PyTorch forward line-by-line)
# -----------------------------------------------------------------------------
def ref_attn_block_3d(x, p):
    B, C, T, H, W = x.shape
    G = NUM_GROUPS
    xf = x.astype(jnp.float32)
    xg = xf.reshape(B, G, C // G, T, H, W)
    mean = xg.mean(axis=(2, 3, 4, 5), keepdims=True)
    var = jnp.square(xg - mean).mean(axis=(2, 3, 4, 5), keepdims=True)
    xn = ((xg - mean) / jnp.sqrt(var + EPS)).reshape(B, C, T, H, W)
    h = xn * p["gamma"][None, :, None, None, None] + p["beta"][None, :, None, None, None]

    def conv1x1(w, b, y):
        return jnp.einsum("oc,bcthw->bothw", w, y) + b[None, :, None, None, None]

    q = conv1x1(p["wq"], p["bq"], h)
    k = conv1x1(p["wk"], p["bk"], h)
    v = conv1x1(p["wv"], p["bv"], h)

    q2 = q.reshape(B * T, C, H * W).transpose(0, 2, 1)   # (bt, hw, c)
    k2 = k.reshape(B * T, C, H * W)                      # (bt, c, hw)
    w_ = jnp.einsum("bqc,bck->bqk", q2, k2) * (float(C) ** -0.5)
    w_ = jax.nn.softmax(w_, axis=2)
    v2 = v.reshape(B * T, C, H * W)
    h2 = jnp.einsum("bck,bqk->bcq", v2, w_)              # == bmm(v, w_.permute(0,2,1))
    h3 = h2.reshape(B, C, T, H, W)
    h3 = conv1x1(p["wp"], p["bp"], h3)
    return x + h3


if __name__ == "__main__":
    # in_channels must be divisible by GroupNorm's 32 groups -> C = 32.
    B, C, T, H, W = 2, 32, 2, 16, 16

    key = jax.random.PRNGKey(0)
    ks = jax.random.split(key, 12)
    x = jax.random.normal(ks[0], (B, C, T, H, W), jnp.float32)

    params = {
        "gamma": 1.0 + 0.1 * jax.random.normal(ks[1], (C,), jnp.float32),
        "beta": 0.1 * jax.random.normal(ks[2], (C,), jnp.float32),
        "wq": 0.1 * jax.random.normal(ks[3], (C, C), jnp.float32),
        "bq": 0.05 * jax.random.normal(ks[4], (C,), jnp.float32),
        "wk": 0.1 * jax.random.normal(ks[5], (C, C), jnp.float32),
        "bk": 0.05 * jax.random.normal(ks[6], (C,), jnp.float32),
        "wv": 0.1 * jax.random.normal(ks[7], (C, C), jnp.float32),
        "bv": 0.05 * jax.random.normal(ks[8], (C,), jnp.float32),
        "wp": 0.1 * jax.random.normal(ks[9], (C, C), jnp.float32),
        "bp": 0.05 * jax.random.normal(ks[10], (C,), jnp.float32),
    }

    out = jax.block_until_ready(attn_block_3d(x, params))
    ref = jax.block_until_ready(ref_attn_block_3d(x, params))

    assert out.shape == x.shape and out.dtype == x.dtype
    # Tolerance sized for bf16 MXU operands with f32 accumulation.
    np.testing.assert_allclose(np.asarray(out), np.asarray(ref), rtol=2e-2, atol=2e-2)
    print("KERNEL_OK")
</pallas_src>

<mosaic_0001>
module attributes {stable_mosaic.version = 11 : i64} {
  func.func @_fused_attn_kernel(%arg0: i32, %arg1: memref<1x32x512xf32, #tpu.memory_space<vmem>>, %arg2: memref<96x32xbf16, #tpu.memory_space<vmem>>, %arg3: memref<96x1xf32, #tpu.memory_space<vmem>>, %arg4: memref<32x32xbf16, #tpu.memory_space<vmem>>, %arg5: memref<32x1xf32, #tpu.memory_space<vmem>>, %arg6: memref<32x1xf32, #tpu.memory_space<vmem>>, %arg7: memref<32x1xf32, #tpu.memory_space<vmem>>, %arg8: memref<32x32xf32, #tpu.memory_space<vmem>>, %arg9: memref<32x32xf32, #tpu.memory_space<vmem>>, %arg10: memref<1x32x512xf32, #tpu.memory_space<vmem>>, %arg11: memref<96x512xf32, #tpu.memory_space<vmem>>, %arg12: memref<32x512xf32, #tpu.memory_space<vmem>>) attributes {dimension_semantics = [#tpu.dimension_semantics<parallel>], iteration_bounds = array<i64: 2>, scalar_prefetch = 0 : i64, scratch_operands = 2 : i64, tpu.core_type = #tpu.core_type<tc>, window_params = [{transform_indices = @transform_0, window_bounds = array<i64: 1, 32, 512>}, {pipeline_mode = #tpu.pipeline_mode<synchronous>, transform_indices = @transform_1, window_bounds = array<i64: 96, 32>}, {pipeline_mode = #tpu.pipeline_mode<synchronous>, transform_indices = @transform_2, window_bounds = array<i64: 96, 1>}, {pipeline_mode = #tpu.pipeline_mode<synchronous>, transform_indices = @transform_3, window_bounds = array<i64: 32, 32>}, {pipeline_mode = #tpu.pipeline_mode<synchronous>, transform_indices = @transform_4, window_bounds = array<i64: 32, 1>}, {pipeline_mode = #tpu.pipeline_mode<synchronous>, transform_indices = @transform_5, window_bounds = array<i64: 32, 1>}, {pipeline_mode = #tpu.pipeline_mode<synchronous>, transform_indices = @transform_6, window_bounds = array<i64: 32, 1>}, {pipeline_mode = #tpu.pipeline_mode<synchronous>, transform_indices = @transform_7, window_bounds = array<i64: 32, 32>}, {pipeline_mode = #tpu.pipeline_mode<synchronous>, transform_indices = @transform_8, window_bounds = array<i64: 32, 32>}, {transform_indices = @transform_9, window_bounds = array<i64: 1, 32, 512>}]} {
    %c0 = arith.constant 0 : index
    %c0_0 = arith.constant 0 : index
    %c0_1 = arith.constant 0 : index
    %0 = vector.load %arg1[%c0, %c0_0, %c0_1] : memref<1x32x512xf32, #tpu.memory_space<vmem>>, vector<1x32x512xf32>
    %1 = vector.shape_cast %0 : vector<1x32x512xf32> to vector<32x512xf32>
    %cst = arith.constant dense<0.000000e+00> : vector<32xf32>
    %2 = vector.multi_reduction <add>, %1, %cst [1] : vector<32x512xf32> to vector<32xf32>
    %3 = vector.shape_cast %2 : vector<32xf32> to vector<32x1xf32>
    %4 = arith.mulf %1, %1 : vector<32x512xf32>
    %cst_2 = arith.constant dense<0.000000e+00> : vector<32xf32>
    %5 = vector.multi_reduction <add>, %4, %cst_2 [1] : vector<32x512xf32> to vector<32xf32>
    %6 = vector.shape_cast %5 : vector<32xf32> to vector<32x1xf32>
    %c0_3 = arith.constant 0 : index
    %c0_4 = arith.constant 0 : index
    %7 = vector.load %arg8[%c0_3, %c0_4] : memref<32x32xf32, #tpu.memory_space<vmem>>, vector<32x32xf32>
    %cst_5 = arith.constant dense<0.000000e+00> : vector<32x1xf32>
    %8 = tpu.matmul %7, %3, %cst_5 {dimension_numbers = #tpu.dot_dimension_numbers<[1], [0], [0], [1], [0, 0, 1, 1], [], []>} : vector<32x32xf32>, vector<32x1xf32>, vector<32x1xf32> -> vector<32x1xf32>
    %cst_6 = arith.constant 0.001953125 : f32
    %9 = vector.broadcast %cst_6 : f32 to vector<32x1xf32>
    %10 = arith.mulf %8, %9 : vector<32x1xf32>
    %c0_7 = arith.constant 0 : index
    %c0_8 = arith.constant 0 : index
    %11 = vector.load %arg8[%c0_7, %c0_8] : memref<32x32xf32, #tpu.memory_space<vmem>>, vector<32x32xf32>
    %cst_9 = arith.constant dense<0.000000e+00> : vector<32x1xf32>
    %12 = tpu.matmul %11, %6, %cst_9 {dimension_numbers = #tpu.dot_dimension_numbers<[1], [0], [0], [1], [0, 0, 1, 1], [], []>} : vector<32x32xf32>, vector<32x1xf32>, vector<32x1xf32> -> vector<32x1xf32>
    %cst_10 = arith.constant 0.001953125 : f32
    %13 = vector.broadcast %cst_10 : f32 to vector<32x1xf32>
    %14 = arith.mulf %12, %13 : vector<32x1xf32>
    %15 = arith.mulf %10, %10 : vector<32x1xf32>
    %16 = arith.subf %14, %15 : vector<32x1xf32>
    %cst_11 = arith.constant 9.99999997E-7 : f32
    %17 = vector.broadcast %cst_11 : f32 to vector<32x1xf32>
    %18 = arith.addf %16, %17 : vector<32x1xf32>
    %19 = math.rsqrt %18 : vector<32x1xf32>
    %c0_12 = arith.constant 0 : index
    %c0_13 = arith.constant 0 : index
    %20 = vector.load %arg9[%c0_12, %c0_13] : memref<32x32xf32, #tpu.memory_space<vmem>>, vector<32x32xf32>
    %cst_14 = arith.constant dense<0.000000e+00> : vector<32x1xf32>
    %21 = tpu.matmul %20, %10, %cst_14 {dimension_numbers = #tpu.dot_dimension_numbers<[1], [0], [0], [1], [0, 0, 1, 1], [], []>} : vector<32x32xf32>, vector<32x1xf32>, vector<32x1xf32> -> vector<32x1xf32>
    %c0_15 = arith.constant 0 : index
    %c0_16 = arith.constant 0 : index
    %22 = vector.load %arg9[%c0_15, %c0_16] : memref<32x32xf32, #tpu.memory_space<vmem>>, vector<32x32xf32>
    %cst_17 = arith.constant dense<0.000000e+00> : vector<32x1xf32>
    %23 = tpu.matmul %22, %19, %cst_17 {dimension_numbers = #tpu.dot_dimension_numbers<[1], [0], [0], [1], [0, 0, 1, 1], [], []>} : vector<32x32xf32>, vector<32x1xf32>, vector<32x1xf32> -> vector<32x1xf32>
    %c0_18 = arith.constant 0 : index
    %c0_19 = arith.constant 0 : index
    %24 = vector.load %arg6[%c0_18, %c0_19] : memref<32x1xf32, #tpu.memory_space<vmem>>, vector<32x1xf32>
    %25 = arith.mulf %24, %23 : vector<32x1xf32>
    %c0_20 = arith.constant 0 : index
    %c0_21 = arith.constant 0 : index
    %26 = vector.load %arg7[%c0_20, %c0_21] : memref<32x1xf32, #tpu.memory_space<vmem>>, vector<32x1xf32>
    %27 = arith.mulf %25, %21 : vector<32x1xf32>
    %28 = arith.subf %26, %27 : vector<32x1xf32>
    %c0_22 = arith.constant 0 : index
    %c0_23 = arith.constant 0 : index
    %29 = vector.load %arg2[%c0_22, %c0_23] : memref<96x32xbf16, #tpu.memory_space<vmem>>, vector<96x32xbf16>
    %30 = arith.truncf %28 : vector<32x1xf32> to vector<32x1xbf16>
    %cst_24 = arith.constant dense<0.000000e+00> : vector<96x1xf32>
    %31 = tpu.matmul %29, %30, %cst_24 {dimension_numbers = #tpu.dot_dimension_numbers<[1], [0], [0], [1], [0, 0, 1, 1], [], []>} : vector<96x32xbf16>, vector<32x1xbf16>, vector<96x1xf32> -> vector<96x1xf32>
    %c0_25 = arith.constant 0 : index
    %c0_26 = arith.constant 0 : index
    %32 = vector.load %arg3[%c0_25, %c0_26] : memref<96x1xf32, #tpu.memory_space<vmem>>, vector<96x1xf32>
    %33 = arith.addf %31, %32 : vector<96x1xf32>
    %34 = vector.broadcast %25 : vector<32x1xf32> to vector<32x512xf32>
    %35 = arith.mulf %1, %34 : vector<32x512xf32>
    %36 = arith.truncf %35 : vector<32x512xf32> to vector<32x512xbf16>
    %cst_27 = arith.constant dense<0.000000e+00> : vector<96x512xf32>
    %37 = tpu.matmul %29, %36, %cst_27 {dimension_numbers = #tpu.dot_dimension_numbers<[1], [0], [0], [1], [0, 0, 1, 1], [], []>} : vector<96x32xbf16>, vector<32x512xbf16>, vector<96x512xf32> -> vector<96x512xf32>
    %38 = vector.broadcast %33 : vector<96x1xf32> to vector<96x512xf32>
    %39 = arith.addf %37, %38 : vector<96x512xf32>
    %c0_28 = arith.constant 0 : index
    %c0_29 = arith.constant 0 : index
    %40 = vector.load %arg11[%c0_28, %c0_29] : memref<96x512xf32, #tpu.memory_space<vmem>>, vector<96x512xf32>
    tpu.vector_store %arg11[%c0_28, %c0_29], %39 {strides = array<i32>} : memref<96x512xf32, #tpu.memory_space<vmem>>, vector<96x512xf32>,
    %c0_30 = arith.constant 0 : index
    %c0_31 = arith.constant 0 : index
    %41 = vector.load %arg11[%c0_30, %c0_31] : memref<96x512xf32, #tpu.memory_space<vmem>>, vector<16x256xf32>
    %42 = arith.truncf %41 : vector<16x256xf32> to vector<16x256xbf16>
    %c32 = arith.constant 32 : index
    %c0_32 = arith.constant 0 : index
    %43 = vector.load %arg11[%c32, %c0_32] : memref<96x512xf32, #tpu.memory_space<vmem>>, vector<16x256xf32>
    %44 = arith.truncf %43 : vector<16x256xf32> to vector<16x256xbf16>
    %cst_33 = arith.constant dense<0.000000e+00> : vector<256x256xf32>
    %45 = tpu.matmul %42, %44, %cst_33 {dimension_numbers = #tpu.dot_dimension_numbers<[0], [0], [1], [1], [0, 1, 1, 1], [], []>} : vector<16x256xbf16>, vector<16x256xbf16>, vector<256x256xf32> -> vector<256x256xf32>
    %c0_34 = arith.constant 0 : index
    %c256 = arith.constant 256 : index
    %46 = vector.load %arg11[%c0_34, %c256] : memref<96x512xf32, #tpu.memory_space<vmem>>, vector<16x256xf32>
    %47 = arith.truncf %46 : vector<16x256xf32> to vector<16x256xbf16>
    %c32_35 = arith.constant 32 : index
    %c256_36 = arith.constant 256 : index
    %48 = vector.load %arg11[%c32_35, %c256_36] : memref<96x512xf32, #tpu.memory_space<vmem>>, vector<16x256xf32>
    %49 = arith.truncf %48 : vector<16x256xf32> to vector<16x256xbf16>
    %cst_37 = arith.constant dense<0.000000e+00> : vector<256x256xf32>
    %50 = tpu.matmul %47, %49, %cst_37 {dimension_numbers = #tpu.dot_dimension_numbers<[0], [0], [1], [1], [0, 1, 1, 1], [], []>} : vector<16x256xbf16>, vector<16x256xbf16>, vector<256x256xf32> -> vector<256x256xf32>
    %51 = arith.addf %45, %50 : vector<256x256xf32>
    %cst_38 = arith.constant dense<0xFF800000> : vector<256xf32>
    %52 = vector.multi_reduction <maximumf>, %51, %cst_38 [1] : vector<256x256xf32> to vector<256xf32>
    %53 = vector.shape_cast %52 : vector<256xf32> to vector<256x1xf32>
    %54 = vector.broadcast %53 : vector<256x1xf32> to vector<256x256xf32>
    %55 = arith.subf %51, %54 : vector<256x256xf32>
    %56 = math.exp %55 : vector<256x256xf32>
    %cst_39 = arith.constant dense<0.000000e+00> : vector<256xf32>
    %57 = vector.multi_reduction <add>, %56, %cst_39 [1] : vector<256x256xf32> to vector<256xf32>
    %58 = vector.shape_cast %57 : vector<256xf32> to vector<256x1xf32>
    %59 = tpu.reciprocal %58 {approx = true} : vector<256x1xf32> -> vector<256x1xf32>
    %60 = vector.broadcast %59 : vector<256x1xf32> to vector<256x256xf32>
    %61 = arith.mulf %56, %60 : vector<256x256xf32>
    %62 = arith.truncf %61 : vector<256x256xf32> to vector<256x256xbf16>
    %c64 = arith.constant 64 : index
    %c0_40 = arith.constant 0 : index
    %63 = vector.load %arg11[%c64, %c0_40] : memref<96x512xf32, #tpu.memory_space<vmem>>, vector<16x256xf32>
    %64 = arith.truncf %63 : vector<16x256xf32> to vector<16x256xbf16>
    %cst_41 = arith.constant dense<0.000000e+00> : vector<16x256xf32>
    %65 = tpu.matmul %64, %62, %cst_41 {dimension_numbers = #tpu.dot_dimension_numbers<[1], [1], [0], [0], [0, 0, 1, 0], [], []>} : vector<16x256xbf16>, vector<256x256xbf16>, vector<16x256xf32> -> vector<16x256xf32>
    %c0_42 = arith.constant 0 : index
    %c0_43 = arith.constant 0 : index
    %66 = vector.load %arg12[%c0_42, %c0_43] : memref<32x512xf32, #tpu.memory_space<vmem>>, vector<16x256xf32>
    tpu.vector_store %arg12[%c0_42, %c0_43], %65 {strides = array<i32>} : memref<32x512xf32, #tpu.memory_space<vmem>>, vector<16x256xf32>,
    %c64_44 = arith.constant 64 : index
    %c256_45 = arith.constant 256 : index
    %67 = vector.load %arg11[%c64_44, %c256_45] : memref<96x512xf32, #tpu.memory_space<vmem>>, vector<16x256xf32>
    %68 = arith.truncf %67 : vector<16x256xf32> to vector<16x256xbf16>
    %cst_46 = arith.constant dense<0.000000e+00> : vector<16x256xf32>
    %69 = tpu.matmul %68, %62, %cst_46 {dimension_numbers = #tpu.dot_dimension_numbers<[1], [1], [0], [0], [0, 0, 1, 0], [], []>} : vector<16x256xbf16>, vector<256x256xbf16>, vector<16x256xf32> -> vector<16x256xf32>
    %c0_47 = arith.constant 0 : index
    %c256_48 = arith.constant 256 : index
    %70 = vector.load %arg12[%c0_47, %c256_48] : memref<32x512xf32, #tpu.memory_space<vmem>>, vector<16x256xf32>
    tpu.vector_store %arg12[%c0_47, %c256_48], %69 {strides = array<i32>} : memref<32x512xf32, #tpu.memory_space<vmem>>, vector<16x256xf32>,
    %c16 = arith.constant 16 : index
    %c0_49 = arith.constant 0 : index
    %71 = vector.load %arg11[%c16, %c0_49] : memref<96x512xf32, #tpu.memory_space<vmem>>, vector<16x256xf32>
    %72 = arith.truncf %71 : vector<16x256xf32> to vector<16x256xbf16>
    %c48 = arith.constant 48 : index
    %c0_50 = arith.constant 0 : index
    %73 = vector.load %arg11[%c48, %c0_50] : memref<96x512xf32, #tpu.memory_space<vmem>>, vector<16x256xf32>
    %74 = arith.truncf %73 : vector<16x256xf32> to vector<16x256xbf16>
    %cst_51 = arith.constant dense<0.000000e+00> : vector<256x256xf32>
    %75 = tpu.matmul %72, %74, %cst_51 {dimension_numbers = #tpu.dot_dimension_numbers<[0], [0], [1], [1], [0, 1, 1, 1], [], []>} : vector<16x256xbf16>, vector<16x256xbf16>, vector<256x256xf32> -> vector<256x256xf32>
    %c16_52 = arith.constant 16 : index
    %c256_53 = arith.constant 256 : index
    %76 = vector.load %arg11[%c16_52, %c256_53] : memref<96x512xf32, #tpu.memory_space<vmem>>, vector<16x256xf32>
    %77 = arith.truncf %76 : vector<16x256xf32> to vector<16x256xbf16>
    %c48_54 = arith.constant 48 : index
    %c256_55 = arith.constant 256 : index
    %78 = vector.load %arg11[%c48_54, %c256_55] : memref<96x512xf32, #tpu.memory_space<vmem>>, vector<16x256xf32>
    %79 = arith.truncf %78 : vector<16x256xf32> to vector<16x256xbf16>
    %cst_56 = arith.constant dense<0.000000e+00> : vector<256x256xf32>
    %80 = tpu.matmul %77, %79, %cst_56 {dimension_numbers = #tpu.dot_dimension_numbers<[0], [0], [1], [1], [0, 1, 1, 1], [], []>} : vector<16x256xbf16>, vector<16x256xbf16>, vector<256x256xf32> -> vector<256x256xf32>
    %81 = arith.addf %75, %80 : vector<256x256xf32>
    %cst_57 = arith.constant dense<0xFF800000> : vector<256xf32>
    %82 = vector.multi_reduction <maximumf>, %81, %cst_57 [1] : vector<256x256xf32> to vector<256xf32>
    %83 = vector.shape_cast %82 : vector<256xf32> to vector<256x1xf32>
    %84 = vector.broadcast %83 : vector<256x1xf32> to vector<256x256xf32>
    %85 = arith.subf %81, %84 : vector<256x256xf32>
    %86 = math.exp %85 : vector<256x256xf32>
    %cst_58 = arith.constant dense<0.000000e+00> : vector<256xf32>
    %87 = vector.multi_reduction <add>, %86, %cst_58 [1] : vector<256x256xf32> to vector<256xf32>
    %88 = vector.shape_cast %87 : vector<256xf32> to vector<256x1xf32>
    %89 = tpu.reciprocal %88 {approx = true} : vector<256x1xf32> -> vector<256x1xf32>
    %90 = vector.broadcast %89 : vector<256x1xf32> to vector<256x256xf32>
    %91 = arith.mulf %86, %90 : vector<256x256xf32>
    %92 = arith.truncf %91 : vector<256x256xf32> to vector<256x256xbf16>
    %c80 = arith.constant 80 : index
    %c0_59 = arith.constant 0 : index
    %93 = vector.load %arg11[%c80, %c0_59] : memref<96x512xf32, #tpu.memory_space<vmem>>, vector<16x256xf32>
    %94 = arith.truncf %93 : vector<16x256xf32> to vector<16x256xbf16>
    %cst_60 = arith.constant dense<0.000000e+00> : vector<16x256xf32>
    %95 = tpu.matmul %94, %92, %cst_60 {dimension_numbers = #tpu.dot_dimension_numbers<[1], [1], [0], [0], [0, 0, 1, 0], [], []>} : vector<16x256xbf16>, vector<256x256xbf16>, vector<16x256xf32> -> vector<16x256xf32>
    %c16_61 = arith.constant 16 : index
    %c0_62 = arith.constant 0 : index
    %96 = vector.load %arg12[%c16_61, %c0_62] : memref<32x512xf32, #tpu.memory_space<vmem>>, vector<16x256xf32>
    tpu.vector_store %arg12[%c16_61, %c0_62], %95 {strides = array<i32>} : memref<32x512xf32, #tpu.memory_space<vmem>>, vector<16x256xf32>,
    %c80_63 = arith.constant 80 : index
    %c256_64 = arith.constant 256 : index
    %97 = vector.load %arg11[%c80_63, %c256_64] : memref<96x512xf32, #tpu.memory_space<vmem>>, vector<16x256xf32>
    %98 = arith.truncf %97 : vector<16x256xf32> to vector<16x256xbf16>
    %cst_65 = arith.constant dense<0.000000e+00> : vector<16x256xf32>
    %99 = tpu.matmul %98, %92, %cst_65 {dimension_numbers = #tpu.dot_dimension_numbers<[1], [1], [0], [0], [0, 0, 1, 0], [], []>} : vector<16x256xbf16>, vector<256x256xbf16>, vector<16x256xf32> -> vector<16x256xf32>
    %c16_66 = arith.constant 16 : index
    %c256_67 = arith.constant 256 : index
    %100 = vector.load %arg12[%c16_66, %c256_67] : memref<32x512xf32, #tpu.memory_space<vmem>>, vector<16x256xf32>
    tpu.vector_store %arg12[%c16_66, %c256_67], %99 {strides = array<i32>} : memref<32x512xf32, #tpu.memory_space<vmem>>, vector<16x256xf32>,
    %c0_68 = arith.constant 0 : index
    %c0_69 = arith.constant 0 : index
    %101 = vector.load %arg4[%c0_68, %c0_69] : memref<32x32xbf16, #tpu.memory_space<vmem>>, vector<32x32xbf16>
    %c0_70 = arith.constant 0 : index
    %c0_71 = arith.constant 0 : index
    %102 = vector.load %arg12[%c0_70, %c0_71] : memref<32x512xf32, #tpu.memory_space<vmem>>, vector<32x512xf32>
    %103 = arith.truncf %102 : vector<32x512xf32> to vector<32x512xbf16>
    %cst_72 = arith.constant dense<0.000000e+00> : vector<32x512xf32>
    %104 = tpu.matmul %101, %103, %cst_72 {dimension_numbers = #tpu.dot_dimension_numbers<[1], [0], [0], [1], [0, 0, 1, 1], [], []>} : vector<32x32xbf16>, vector<32x512xbf16>, vector<32x512xf32> -> vector<32x512xf32>
    %c0_73 = arith.constant 0 : index
    %c0_74 = arith.constant 0 : index
    %105 = vector.load %arg5[%c0_73, %c0_74] : memref<32x1xf32, #tpu.memory_space<vmem>>, vector<32x1xf32>
    %106 = vector.broadcast %105 : vector<32x1xf32> to vector<32x512xf32>
    %107 = arith.addf %104, %106 : vector<32x512xf32>
    %c0_75 = arith.constant 0 : index
    %c0_76 = arith.constant 0 : index
    %c0_77 = arith.constant 0 : index
    %108 = vector.load %arg1[%c0_75, %c0_76, %c0_77] : memref<1x32x512xf32, #tpu.memory_space<vmem>>, vector<1x32x512xf32>
    %109 = vector.shape_cast %108 : vector<1x32x512xf32> to vector<32x512xf32>
    %110 = arith.addf %109, %107 : vector<32x512xf32>
    %c0_78 = arith.constant 0 : index
    %c0_79 = arith.constant 0 : index
    %c0_80 = arith.constant 0 : index
    %111 = vector.load %arg10[%c0_78, %c0_79, %c0_80] : memref<1x32x512xf32, #tpu.memory_space<vmem>>, vector<1x32x512xf32>
    %112 = vector.shape_cast %111 : vector<1x32x512xf32> to vector<32x512xf32>
    %113 = vector.shape_cast %110 : vector<32x512xf32> to vector<1x32x512xf32>
    tpu.vector_store %arg10[%c0_78, %c0_79, %c0_80], %113 {strides = array<i32>} : memref<1x32x512xf32, #tpu.memory_space<vmem>>, vector<1x32x512xf32>,
    return
  }
  func.func @transform_0(%arg0: i32) -> (i32, i32, i32) {
    %c0_i32 = arith.constant 0 : i32
    %c0_i32_0 = arith.constant 0 : i32
    %c0_i32_1 = arith.constant 0 : i32
    return %arg0, %c0_i32, %c0_i32_0 : i32, i32, i32
  }
  func.func @transform_1(%arg0: i32) -> (i32, i32) {
    %c0_i32 = arith.constant 0 : i32
    %c0_i32_0 = arith.constant 0 : i32
    %c0_i32_1 = arith.constant 0 : i32
    return %c0_i32, %c0_i32_0 : i32, i32
  }
  func.func @transform_2(%arg0: i32) -> (i32, i32) {
    %c0_i32 = arith.constant 0 : i32
    %c0_i32_0 = arith.constant 0 : i32
    %c0_i32_1 = arith.constant 0 : i32
    return %c0_i32, %c0_i32_0 : i32, i32
  }
  func.func @transform_3(%arg0: i32) -> (i32, i32) {
    %c0_i32 = arith.constant 0 : i32
    %c0_i32_0 = arith.constant 0 : i32
    %c0_i32_1 = arith.constant 0 : i32
    return %c0_i32, %c0_i32_0 : i32, i32
  }
  func.func @transform_4(%arg0: i32) -> (i32, i32) {
    %c0_i32 = arith.constant 0 : i32
    %c0_i32_0 = arith.constant 0 : i32
    %c0_i32_1 = arith.constant 0 : i32
    return %c0_i32, %c0_i32_0 : i32, i32
  }
  func.func @transform_5(%arg0: i32) -> (i32, i32) {
    %c0_i32 = arith.constant 0 : i32
    %c0_i32_0 = arith.constant 0 : i32
    %c0_i32_1 = arith.constant 0 : i32
    return %c0_i32, %c0_i32_0 : i32, i32
  }
  func.func @transform_6(%arg0: i32) -> (i32, i32) {
    %c0_i32 = arith.constant 0 : i32
    %c0_i32_0 = arith.constant 0 : i32
    %c0_i32_1 = arith.constant 0 : i32
    return %c0_i32, %c0_i32_0 : i32, i32
  }
  func.func @transform_7(%arg0: i32) -> (i32, i32) {
    %c0_i32 = arith.constant 0 : i32
    %c0_i32_0 = arith.constant 0 : i32
    %c0_i32_1 = arith.constant 0 : i32
    return %c0_i32, %c0_i32_0 : i32, i32
  }
  func.func @transform_8(%arg0: i32) -> (i32, i32) {
    %c0_i32 = arith.constant 0 : i32
    %c0_i32_0 = arith.constant 0 : i32
    %c0_i32_1 = arith.constant 0 : i32
    return %c0_i32, %c0_i32_0 : i32, i32
  }
  func.func @transform_9(%arg0: i32) -> (i32, i32, i32) {
    %c0_i32 = arith.constant 0 : i32
    %c0_i32_0 = arith.constant 0 : i32
    %c0_i32_1 = arith.constant 0 : i32
    return %arg0, %c0_i32, %c0_i32_0 : i32, i32, i32
  }
}

</mosaic_0001>

<llo_original>
// kernel: attn_block_3d.1
$region0: #{attn_block_3d.1}
  #allocation0 [shape = 'u32[]', space=smem, size = 0x4, offset = 0x4, fixed_abs, tag = 'smem constant byte address 0x4 - core index']
  #allocation1 [shape = 'u32[144,128]{1,0:T(1,128)}', space=vmem, size = 0x12000, scoped, tag = 'internal scratch']
  #allocation2 [shape = 'f32[96,512]{1,0:T(8,128)}', space=vmem, size = 0x30000, scoped, tag = 'scratch operand']
  #allocation3 [shape = 'f32[32,512]{1,0:T(8,128)}', space=vmem, size = 0x10000, scoped, tag = 'scratch operand']
  %s0 = inlined_call_operand.vmem [shape: f32[2,32,512], index: 0, kind: input, shape index: {}, may-alias: {0,9}]
  %s1 = inlined_call_operand.vmem [shape: bf16[96,32], index: 1, kind: input, shape index: {}]
  %s2 = inlined_call_operand.vmem [shape: f32[96,1], index: 2, kind: input, shape index: {}]
  %s3 = inlined_call_operand.vmem [shape: bf16[32,32], index: 3, kind: input, shape index: {}]
  %s4 = inlined_call_operand.vmem [shape: f32[32,1], index: 4, kind: input, shape index: {}]
  %s5 = inlined_call_operand.vmem [shape: f32[32,1], index: 5, kind: input, shape index: {}]
  %s6 = inlined_call_operand.vmem [shape: f32[32,1], index: 6, kind: input, shape index: {}]
  %s7 = inlined_call_operand.vmem [shape: f32[32,32], index: 7, kind: input, shape index: {}, may-alias: {7,8}]
  %s8 = inlined_call_operand.vmem [shape: f32[32,32], index: 8, kind: input, shape index: {}, may-alias: {7,8}]
  %s9 = inlined_call_operand.vmem [shape: f32[2,32,512], index: 9, kind: output, shape index: {}, may-alias: {0,9}]
  %s10 = sld [smem:[#allocation0]]
  $region69: #{attn_block_3d.1} parent=0
    _
  %s12 = ssub.s32 1, %s10
  %s13 = scalar_select 0, %s12, %s10
  loop: start=0, step=1, limit=4
  $region2: #{attn_block_3d.1} parent=0 // loop_pre_header
    _
  $region3: #{attn_block_3d.1} parent=0 // loop_header
    %s15 = sphi 0, %s19
    %p16 = scmp.ge.s32.totalorder %s15, 4
    %s25 = sphi 0, %s27
    %s28 = sphi 0, %s25
    %s29 = sphi 0, %s28
    %s45 = sphi 0, %s29
    %s49 = sphi 0, %s49
    %s51 = sphi 0, %s49
    %s52 = sphi 0, %s51
    %s66 = sphi 0, %s52
    %s70 = sphi 0, %s70
    %s72 = sphi 0, %s70
    %s73 = sphi 0, %s72
    %s87 = sphi 0, %s73
    %s91 = sphi 0, %s91
    %s93 = sphi 0, %s91
    %s94 = sphi 0, %s93
    %s108 = sphi 0, %s94
    %s112 = sphi 0, %s112
    %s114 = sphi 0, %s112
    %s115 = sphi 0, %s114
    %s129 = sphi 0, %s115
    %s133 = sphi 0, %s133
    %s135 = sphi 0, %s133
    %s136 = sphi 0, %s135
    %s150 = sphi 0, %s136
    %s154 = sphi 0, %s154
    %s156 = sphi 0, %s154
    %s157 = sphi 0, %s156
    %s171 = sphi 0, %s157
    %s175 = sphi 0, %s175
    %s177 = sphi 0, %s175
    %s178 = sphi 0, %s177
    %s192 = sphi 0, %s178
    %s196 = sphi 0, %s196
    %s198 = sphi 0, %s196
    %s199 = sphi 0, %s198
    %s213 = sphi 0, %s199
    %s219 = sphi 0, %s221
    %s222 = sphi 0, %s219
    %s223 = sphi 0, %s222
    %s239 = sphi 0, %s223
  $region4: #{attn_block_3d.1} parent=0 // loop_header_branch
    %18 = sbr.rel (%p16) target = $region8
  $region5: #{attn_block_3d.1} parent=0 // loop_body
    %s20 = ssub.s32 %s15, 1
    %s21 = ssub.s32 %s15, 2
    %s22 = sadd.s32 %s15, 1
    %s23 = ssub.s32 %s15, %s22
    %p24 = scmp.eq.s32.totalorder %s23, 0
    %s26 = sadd.s32 %s25, 1
    %s27 = scalar_select %p24, %s25, %s26
    %p30 = pneg %p24
    %p31 = scmp.eq.s32.totalorder %s15, 1
    %p32 = por %p30, %p31
    %p33 = scmp.ne.s32.totalorder %s25, %s28
    %p34 = scmp.eq.s32.totalorder %s15, 0
    %p35 = por %p33, %p34
    %p36 = scmp.ne.s32.totalorder %s25, %s28
    %p37 = scmp.eq.s32.totalorder %s20, 1
    %p38 = por %p36, %p37
    %p39 = scmp.ne.s32.totalorder %s28, %s29
    %p40 = scmp.eq.s32.totalorder %s20, 0
    %p41 = por %p39, %p40
    %p42 = scmp.ne.s32.totalorder %s28, %s29
    %p43 = scmp.eq.s32.totalorder %s21, 1
    %p44 = por %p42, %p43
    %p46 = scmp.ne.s32.totalorder %s29, %s45
    %p47 = scmp.eq.s32.totalorder %s21, 0
    %p48 = por %p46, %p47
    %s50 = sadd.s32 %s49, 1
    %p53 = scmp.eq.s32.totalorder %s15, 1
    %p54 = scmp.ne.s32.totalorder %s49, %s51
    %p55 = scmp.eq.s32.totalorder %s15, 0
    %p56 = por %p54, %p55
    %p57 = scmp.ne.s32.totalorder %s49, %s51
    %p58 = scmp.eq.s32.totalorder %s20, 1
    %p59 = por %p57, %p58
    %p60 = scmp.ne.s32.totalorder %s51, %s52
    %p61 = scmp.eq.s32.totalorder %s20, 0
    %p62 = por %p60, %p61
    %p63 = scmp.ne.s32.totalorder %s51, %s52
    %p64 = scmp.eq.s32.totalorder %s21, 1
    %p65 = por %p63, %p64
    %p67 = scmp.ne.s32.totalorder %s52, %s66
    %p68 = scmp.eq.s32.totalorder %s21, 0
    %p69 = por %p67, %p68
    %s71 = sadd.s32 %s70, 1
    %p74 = scmp.eq.s32.totalorder %s15, 1
    %p75 = scmp.ne.s32.totalorder %s70, %s72
    %p76 = scmp.eq.s32.totalorder %s15, 0
    %p77 = por %p75, %p76
    %p78 = scmp.ne.s32.totalorder %s70, %s72
    %p79 = scmp.eq.s32.totalorder %s20, 1
    %p80 = por %p78, %p79
    %p81 = scmp.ne.s32.totalorder %s72, %s73
    %p82 = scmp.eq.s32.totalorder %s20, 0
    %p83 = por %p81, %p82
    %p84 = scmp.ne.s32.totalorder %s72, %s73
    %p85 = scmp.eq.s32.totalorder %s21, 1
    %p86 = por %p84, %p85
    %p88 = scmp.ne.s32.totalorder %s73, %s87
    %p89 = scmp.eq.s32.totalorder %s21, 0
    %p90 = por %p88, %p89
    %s92 = sadd.s32 %s91, 1
    %p95 = scmp.eq.s32.totalorder %s15, 1
    %p96 = scmp.ne.s32.totalorder %s91, %s93
    %p97 = scmp.eq.s32.totalorder %s15, 0
    %p98 = por %p96, %p97
    %p99 = scmp.ne.s32.totalorder %s91, %s93
    %p100 = scmp.eq.s32.totalorder %s20, 1
    %p101 = por %p99, %p100
    %p102 = scmp.ne.s32.totalorder %s93, %s94
    %p103 = scmp.eq.s32.totalorder %s20, 0
    %p104 = por %p102, %p103
    %p105 = scmp.ne.s32.totalorder %s93, %s94
    %p106 = scmp.eq.s32.totalorder %s21, 1
    %p107 = por %p105, %p106
    %p109 = scmp.ne.s32.totalorder %s94, %s108
    %p110 = scmp.eq.s32.totalorder %s21, 0
    %p111 = por %p109, %p110
    %s113 = sadd.s32 %s112, 1
    %p116 = scmp.eq.s32.totalorder %s15, 1
    %p117 = scmp.ne.s32.totalorder %s112, %s114
    %p118 = scmp.eq.s32.totalorder %s15, 0
    %p119 = por %p117, %p118
    %p120 = scmp.ne.s32.totalorder %s112, %s114
    %p121 = scmp.eq.s32.totalorder %s20, 1
    %p122 = por %p120, %p121
    %p123 = scmp.ne.s32.totalorder %s114, %s115
    %p124 = scmp.eq.s32.totalorder %s20, 0
    %p125 = por %p123, %p124
    %p126 = scmp.ne.s32.totalorder %s114, %s115
    %p127 = scmp.eq.s32.totalorder %s21, 1
    %p128 = por %p126, %p127
    %p130 = scmp.ne.s32.totalorder %s115, %s129
    %p131 = scmp.eq.s32.totalorder %s21, 0
    %p132 = por %p130, %p131
    %s134 = sadd.s32 %s133, 1
    %p137 = scmp.eq.s32.totalorder %s15, 1
    %p138 = scmp.ne.s32.totalorder %s133, %s135
    %p139 = scmp.eq.s32.totalorder %s15, 0
    %p140 = por %p138, %p139
    %p141 = scmp.ne.s32.totalorder %s133, %s135
    %p142 = scmp.eq.s32.totalorder %s20, 1
    %p143 = por %p141, %p142
    %p144 = scmp.ne.s32.totalorder %s135, %s136
    %p145 = scmp.eq.s32.totalorder %s20, 0
    %p146 = por %p144, %p145
    %p147 = scmp.ne.s32.totalorder %s135, %s136
    %p148 = scmp.eq.s32.totalorder %s21, 1
    %p149 = por %p147, %p148
    %p151 = scmp.ne.s32.totalorder %s136, %s150
    %p152 = scmp.eq.s32.totalorder %s21, 0
    %p153 = por %p151, %p152
    %s155 = sadd.s32 %s154, 1
    %p158 = scmp.eq.s32.totalorder %s15, 1
    %p159 = scmp.ne.s32.totalorder %s154, %s156
    %p160 = scmp.eq.s32.totalorder %s15, 0
    %p161 = por %p159, %p160
    %p162 = scmp.ne.s32.totalorder %s154, %s156
    %p163 = scmp.eq.s32.totalorder %s20, 1
    %p164 = por %p162, %p163
    %p165 = scmp.ne.s32.totalorder %s156, %s157
    %p166 = scmp.eq.s32.totalorder %s20, 0
    %p167 = por %p165, %p166
    %p168 = scmp.ne.s32.totalorder %s156, %s157
    %p169 = scmp.eq.s32.totalorder %s21, 1
    %p170 = por %p168, %p169
    %p172 = scmp.ne.s32.totalorder %s157, %s171
    %p173 = scmp.eq.s32.totalorder %s21, 0
    %p174 = por %p172, %p173
    %s176 = sadd.s32 %s175, 1
    %p179 = scmp.eq.s32.totalorder %s15, 1
    %p180 = scmp.ne.s32.totalorder %s175, %s177
    %p181 = scmp.eq.s32.totalorder %s15, 0
    %p182 = por %p180, %p181
    %p183 = scmp.ne.s32.totalorder %s175, %s177
    %p184 = scmp.eq.s32.totalorder %s20, 1
    %p185 = por %p183, %p184
    %p186 = scmp.ne.s32.totalorder %s177, %s178
    %p187 = scmp.eq.s32.totalorder %s20, 0
    %p188 = por %p186, %p187
    %p189 = scmp.ne.s32.totalorder %s177, %s178
    %p190 = scmp.eq.s32.totalorder %s21, 1
    %p191 = por %p189, %p190
    %p193 = scmp.ne.s32.totalorder %s178, %s192
    %p194 = scmp.eq.s32.totalorder %s21, 0
    %p195 = por %p193, %p194
    %s197 = sadd.s32 %s196, 1
    %p200 = scmp.eq.s32.totalorder %s15, 1
    %p201 = scmp.ne.s32.totalorder %s196, %s198
    %p202 = scmp.eq.s32.totalorder %s15, 0
    %p203 = por %p201, %p202
    %p204 = scmp.ne.s32.totalorder %s196, %s198
    %p205 = scmp.eq.s32.totalorder %s20, 1
    %p206 = por %p204, %p205
    %p207 = scmp.ne.s32.totalorder %s198, %s199
    %p208 = scmp.eq.s32.totalorder %s20, 0
    %p209 = por %p207, %p208
    %p210 = scmp.ne.s32.totalorder %s198, %s199
    %p211 = scmp.eq.s32.totalorder %s21, 1
    %p212 = por %p210, %p211
    %p214 = scmp.ne.s32.totalorder %s199, %s213
    %p215 = scmp.eq.s32.totalorder %s21, 0
    %p216 = por %p214, %p215
    %s217 = ssub.s32 %s15, %s22
    %p218 = scmp.eq.s32.totalorder %s217, 0
    %s220 = sadd.s32 %s219, 1
    %s221 = scalar_select %p218, %s219, %s220
    %p224 = pneg %p218
    %p225 = scmp.eq.s32.totalorder %s15, 1
    %p226 = por %p224, %p225
    %p227 = scmp.ne.s32.totalorder %s219, %s222
    %p228 = scmp.eq.s32.totalorder %s15, 0
    %p229 = por %p227, %p228
    %p230 = scmp.ne.s32.totalorder %s219, %s222
    %p231 = scmp.eq.s32.totalorder %s20, 1
    %p232 = por %p230, %p231
    %p233 = scmp.ne.s32.totalorder %s222, %s223
    %p234 = scmp.eq.s32.totalorder %s20, 0
    %p235 = por %p233, %p234
    %p236 = scmp.ne.s32.totalorder %s222, %s223
    %p237 = scmp.eq.s32.totalorder %s21, 1
    %p238 = por %p236, %p237
    %p240 = scmp.ne.s32.totalorder %s223, %s239
    %p241 = scmp.eq.s32.totalorder %s21, 0
    %p242 = por %p240, %p241
    %p243 = scmp.le.s32.totalorder 1, %s15
    %p244 = scmp.lt.s32.totalorder %s15, 3
    %p245 = pnand %p243, %p244
    %p246 = pneg %p245
    // Predicated region
    $region9: #{attn_block_3d.1} parent=5 // pred_check
      _
    $region10: #{attn_block_3d.1} parent=5 // pred_check_branch
      %248 = sbr.rel (%p245) target = $region12
    $region11: #{attn_block_3d.1} parent=5 // pred_region
      %s249 = ssub.s32 %s15, 1
      // Predicated region
      $region13: #{attn_block_3d.1} parent=11 // pred_check
        %p250 = pneg %p62
      $region14: #{attn_block_3d.1} parent=11 // pred_check_branch
        %252 = sbr.rel (%p250) target = $region16
      $region15: #{attn_block_3d.1} parent=11 // pred_region
        _
      $region16: #{attn_block_3d.1} parent=11 // pred_fallthru
        _
      // Predicated region
      $region17: #{attn_block_3d.1} parent=11 // pred_check
        %p253 = pneg %p83
      $region18: #{attn_block_3d.1} parent=11 // pred_check_branch
        %255 = sbr.rel (%p253) target = $region20
      $region19: #{attn_block_3d.1} parent=11 // pred_region
        _
      $region20: #{attn_block_3d.1} parent=11 // pred_fallthru
        _
      // Predicated region
      $region21: #{attn_block_3d.1} parent=11 // pred_check
        %p256 = pneg %p104
      $region22: #{attn_block_3d.1} parent=11 // pred_check_branch
        %258 = sbr.rel (%p256) target = $region24
      $region23: #{attn_block_3d.1} parent=11 // pred_region
        _
      $region24: #{attn_block_3d.1} parent=11 // pred_fallthru
        _
      // Predicated region
      $region25: #{attn_block_3d.1} parent=11 // pred_check
        %p259 = pneg %p125
      $region26: #{attn_block_3d.1} parent=11 // pred_check_branch
        %261 = sbr.rel (%p259) target = $region28
      $region27: #{attn_block_3d.1} parent=11 // pred_region
        _
      $region28: #{attn_block_3d.1} parent=11 // pred_fallthru
        _
      // Predicated region
      $region29: #{attn_block_3d.1} parent=11 // pred_check
        %p262 = pneg %p146
      $region30: #{attn_block_3d.1} parent=11 // pred_check_branch
        %264 = sbr.rel (%p262) target = $region32
      $region31: #{attn_block_3d.1} parent=11 // pred_region
        _
      $region32: #{attn_block_3d.1} parent=11 // pred_fallthru
        _
      // Predicated region
      $region33: #{attn_block_3d.1} parent=11 // pred_check
        %p265 = pneg %p167
      $region34: #{attn_block_3d.1} parent=11 // pred_check_branch
        %267 = sbr.rel (%p265) target = $region36
      $region35: #{attn_block_3d.1} parent=11 // pred_region
        _
      $region36: #{attn_block_3d.1} parent=11 // pred_fallthru
        _
      // Predicated region
      $region37: #{attn_block_3d.1} parent=11 // pred_check
        %p268 = pneg %p188
      $region38: #{attn_block_3d.1} parent=11 // pred_check_branch
        %270 = sbr.rel (%p268) target = $region40
      $region39: #{attn_block_3d.1} parent=11 // pred_region
        _
      $region40: #{attn_block_3d.1} parent=11 // pred_fallthru
        _
      // Predicated region
      $region41: #{attn_block_3d.1} parent=11 // pred_check
        %p271 = pneg %p209
      $region42: #{attn_block_3d.1} parent=11 // pred_check_branch
        %273 = sbr.rel (%p271) target = $region44
      $region43: #{attn_block_3d.1} parent=11 // pred_region
        _
      $region44: #{attn_block_3d.1} parent=11 // pred_fallthru
        _
    $region12: #{attn_block_3d.1} parent=5 // pred_fallthru
      _
    %p274 = scmp.lt.s32.totalorder %s15, 2
    // Predicated region
    $region45: #{attn_block_3d.1} parent=5 // pred_check
      %p275 = pneg %p274
    $region46: #{attn_block_3d.1} parent=5 // pred_check_branch
      %277 = sbr.rel (%p275) target = $region48
    $region47: #{attn_block_3d.1} parent=5 // pred_region
      // Predicated region
      $region49: #{attn_block_3d.1} parent=47 // pred_check
        %p278 = pneg %p35
      $region50: #{attn_block_3d.1} parent=47 // pred_check_branch
        %280 = sbr.rel (%p278) target = $region52
      $region51: #{attn_block_3d.1} parent=47 // pred_region
        %p281 = scmp.lt.s32.totalorder %s15, 1
        %s282 = scalar_select %p281, %s15, 1
        %s283 = smul.addr %s282, 16
        %s284 = smul.addr %s283, 8
        %s285 = scalar_lea.vmem %s0, %s284
      $region52: #{attn_block_3d.1} parent=47 // pred_fallthru
        _
    $region48: #{attn_block_3d.1} parent=5 // pred_fallthru
      _
    %p286 = scmp.le.s32.totalorder 1, %s15
    %p287 = scmp.lt.s32.totalorder %s15, 3
    %p288 = pnand %p286, %p287
    %p289 = pneg %p288
    // Predicated region
    $region53: #{attn_block_3d.1} parent=5 // pred_check
      _
    $region54: #{attn_block_3d.1} parent=5 // pred_check_branch
      %291 = sbr.rel (%p288) target = $region56
    $region55: #{attn_block_3d.1} parent=5 // pred_region
      %s292 = ssub.s32 %s15, 1
      %p293 = scmp.lt.s32.totalorder %s20, 1
      %s294 = scalar_select %p293, %s20, 1
      %s295 = smul.addr %s294, 16
      %s296 = smul.addr %s295, 8
      %s297 = scalar_lea.vmem %s0, %s296
      %p298 = pneg %p41
      %p299 = pneg %p38
      %p300 = pneg %p62
      %p301 = pneg %p59
      %p302 = pneg %p83
      %p303 = pneg %p80
      %p304 = pneg %p104
      %p305 = pneg %p101
      %p306 = pneg %p125
      %p307 = pneg %p122
      %p308 = pneg %p146
      %p309 = pneg %p143
      %p310 = pneg %p167
      %p311 = pneg %p164
      %p312 = pneg %p188
      %p313 = pneg %p185
      %p314 = pneg %p209
      %p315 = pneg %p206
      %p316 = pneg %p235
      %p317 = pneg %p232
      %p318 = scmp.lt.s32.totalorder %s20, 1
      %s319 = scalar_select %p318, %s20, 1
      %s320 = smul.addr %s319, 16
      %s321 = smul.addr %s320, 8
      %s322 = scalar_lea.vmem %s9, %s321
      %p323 = scmp.lt.s32.totalorder %s20, 1
      %s324 = scalar_select %p323, %s20, 1
      %s325 = smul.addr %s324, 16
      %s326 = smul.addr %s325, 8
      %s327 = scalar_lea.vmem %s0, %s326
      %p328 = scmp.lt.s32.totalorder %s20, 1
      %s329 = scalar_select %p328, %s20, 1
      %s330 = smul.addr %s329, 16
      %s331 = smul.addr %s330, 8
      %s332 = scalar_lea.vmem %s9, %s331
      %v334 = vld [vmem:[%s327] sm:$0xff]
      %v335 = vld [vmem:[%s327 + $0x8] sm:$0xff]
      %v336 = vld [vmem:[%s327 + $0x10] sm:$0xff]
      %v337 = vld [vmem:[%s327 + $0x18] sm:$0xff]
      %v338 = vld [vmem:[%s327 + $0x20] sm:$0xff]
      %v339 = vld [vmem:[%s327 + $0x28] sm:$0xff]
      %v340 = vld [vmem:[%s327 + $0x30] sm:$0xff]
      %v341 = vld [vmem:[%s327 + $0x38] sm:$0xff]
      %v342 = vld [vmem:[%s327 + $0x40] sm:$0xff]
      %v343 = vld [vmem:[%s327 + $0x48] sm:$0xff]
      %v344 = vld [vmem:[%s327 + $0x50] sm:$0xff]
      %v345 = vld [vmem:[%s327 + $0x58] sm:$0xff]
      %v346 = vld [vmem:[%s327 + $0x60] sm:$0xff]
      %v347 = vld [vmem:[%s327 + $0x68] sm:$0xff]
      %v348 = vld [vmem:[%s327 + $0x70] sm:$0xff]
      %v349 = vld [vmem:[%s327 + $0x78] sm:$0xff]
      %v350 = vadd.f32 %v334, %v335
      %v351 = vadd.f32 %v350, %v336
      %v352 = vadd.f32 %v351, %v337
      %353 = vadd.xlane.f32.xlu0 %v352
      %v354 = vpop.xlane.xlu0 %353
      %v355 = vadd.f32 %v338, %v339
      %v356 = vadd.f32 %v355, %v340
      %v357 = vadd.f32 %v356, %v341
      %358 = vadd.xlane.f32.xlu0 %v357
      %v359 = vpop.xlane.xlu0 %358
      %v360 = vadd.f32 %v342, %v343
      %v361 = vadd.f32 %v360, %v344
      %v362 = vadd.f32 %v361, %v345
      %363 = vadd.xlane.f32.xlu0 %v362
      %v364 = vpop.xlane.xlu0 %363
      %v365 = vadd.f32 %v346, %v347
      %v366 = vadd.f32 %v365, %v348
      %v367 = vadd.f32 %v366, %v349
      %368 = vadd.xlane.f32.xlu0 %v367
      %v369 = vpop.xlane.xlu0 %368
      %v370 = vmul.f32 %v334, %v334
      %v371 = vmul.f32 %v335, %v335
      %v372 = vmul.f32 %v336, %v336
      %v373 = vmul.f32 %v337, %v337
      %v374 = vmul.f32 %v338, %v338
      %v375 = vmul.f32 %v339, %v339
      %v376 = vmul.f32 %v340, %v340
      %v377 = vmul.f32 %v341, %v341
      %v378 = vmul.f32 %v342, %v342
      %v379 = vmul.f32 %v343, %v343
      %v380 = vmul.f32 %v344, %v344
      %v381 = vmul.f32 %v345, %v345
      %v382 = vmul.f32 %v346, %v346
      %v383 = vmul.f32 %v347, %v347
      %v384 = vmul.f32 %v348, %v348
      %v385 = vmul.f32 %v349, %v349
      %v386 = vadd.f32 %v370, %v371
      %v387 = vadd.f32 %v386, %v372
      %v388 = vadd.f32 %v387, %v373
      %389 = vadd.xlane.f32.xlu0 %v388
      %v390 = vpop.xlane.xlu0 %389
      %v391 = vadd.f32 %v374, %v375
      %v392 = vadd.f32 %v391, %v376
      %v393 = vadd.f32 %v392, %v377
      %394 = vadd.xlane.f32.xlu0 %v393
      %v395 = vpop.xlane.xlu0 %394
      %v396 = vadd.f32 %v378, %v379
      %v397 = vadd.f32 %v396, %v380
      %v398 = vadd.f32 %v397, %v381
      %399 = vadd.xlane.f32.xlu0 %v398
      %v400 = vpop.xlane.xlu0 %399
      %v401 = vadd.f32 %v382, %v383
      %v402 = vadd.f32 %v401, %v384
      %v403 = vadd.f32 %v402, %v385
      %404 = vadd.xlane.f32.xlu0 %v403
      %v405 = vpop.xlane.xlu0 %404
      %v406 = vld [vmem:[%s7] sm:$0xff]
      %v407 = vld [vmem:[%s7 + $0x8] sm:$0xff]
      %v408 = vld [vmem:[%s7 + $0x10] sm:$0xff]
      %v409 = vld [vmem:[%s7 + $0x18] sm:$0xff]
      %vm410 = vcmask 261120
      %v412 = vsel %vm410, %v406, 0
      %v415 = vsel %vm410, %v407, 0
      %v418 = vsel %vm410, %v408, 0
      %v421 = vsel %vm410, %v409, 0
      %423 = vmatprep.subr.mxu0 0.0
      %424 = vmatpush1.msra.mxu0 %v354
      %425 = vmatprep.subr.mxu0 0.0
      %426 = vmatpush1.msra.mxu0 %v359
      %427 = vmatprep.subr.mxu0 0.0
      %428 = vmatpush1.msra.mxu0 %v364
      %429 = vmatprep.subr.mxu0 0.0
      %430 = vmatpush1.msra.mxu0 %v369
      %431 = vmatprep.subr.mxu0 0.0
      %432 = vmatpush1.msra.mxu0 0.0
      %433 = vmatprep.subr.mxu0 0.0
      %434 = vmatpush1.msra.mxu0 0.0
      %435 = vmatprep.subr.mxu0 0.0
      %436 = vmatpush1.msra.mxu0 0.0
      %437 = vmatprep.subr.mxu0 0.0
      %438 = vmatpush1.msra.mxu0 0.0
      %439 = vmatprep.subr.mxu0 0.0
      %440 = vmatpush1.msra.mxu0 0.0
      %441 = vmatprep.subr.mxu0 0.0
      %442 = vmatpush1.msra.mxu0 0.0
      %443 = vmatprep.subr.mxu0 0.0
      %444 = vmatpush1.msra.mxu0 0.0
      %445 = vmatprep.subr.mxu0 0.0
      %446 = vmatpush1.msra.mxu0 0.0
      %447 = vmatprep.subr.mxu0 0.0
      %448 = vmatpush1.msra.mxu0 0.0
      %449 = vmatprep.subr.mxu0 0.0
      %450 = vmatpush1.msra.mxu0 0.0
      %451 = vmatprep.subr.mxu0 0.0
      %452 = vmatpush1.msra.mxu0 0.0
      %453 = vmatprep.subr.mxu0 0.0
      %454 = vmatpush1.msra.mxu0 0.0
      %455 = vmatprep.subr.mxu0 0.0
      %456 = vmatpush1.msra.mxu0 0.0
      %457 = vmatprep.subr.mxu0 0.0
      %458 = vmatpush1.msra.mxu0 0.0
      %459 = vmatprep.subr.mxu0 0.0
      %460 = vmatpush1.msra.mxu0 0.0
      %461 = vmatprep.subr.mxu0 0.0
      %462 = vmatpush1.msra.mxu0 0.0
      %463 = vmatprep.subr.mxu0 0.0
      %464 = vmatpush1.msra.mxu0 0.0
      %465 = vmatprep.subr.mxu0 0.0
      %466 = vmatpush1.msra.mxu0 0.0
      %467 = vmatprep.subr.mxu0 0.0
      %468 = vmatpush1.msra.mxu0 0.0
      %469 = vmatprep.subr.mxu0 0.0
      %470 = vmatpush1.msra.mxu0 0.0
      %471 = vmatprep.subr.mxu0 0.0
      %472 = vmatpush1.msra.mxu0 0.0
      %473 = vmatprep.subr.mxu0 0.0
      %474 = vmatpush1.msra.mxu0 0.0
      %475 = vmatprep.subr.mxu0 0.0
      %476 = vmatpush1.msra.mxu0 0.0
      %477 = vmatprep.subr.mxu0 0.0
      %478 = vmatpush1.msra.mxu0 0.0
      %479 = vmatprep.subr.mxu0 0.0
      %480 = vmatpush1.msra.mxu0 0.0
      %481 = vmatprep.subr.mxu0 0.0
      %482 = vmatpush1.msra.mxu0 0.0
      %483 = vmatprep.subr.mxu0 0.0
      %484 = vmatpush1.msra.mxu0 0.0
      %485 = vmatprep.subr.mxu0 0.0
      %486 = vmatpush1.msra.mxu0 0.0
      %487 = vmatprep.mubr.f32.mxu0 0.0
      %488 = vmatmul.mubr.f32.gmra.mrb[0].mxu0 %v412
      %v489 = vpop.f32.mrb[0].mxu0
      %v490 = vadd.f32 0.0, %v489
      %v491 = vpop.f32.mrb[0].mxu0
      %492 = vmatprep.mubr.f32.mxu0 0.0
      %493 = vmatmul.mubr.f32.gmra.mrb[0].mxu0 %v415
      %v494 = vpop.f32.mrb[0].mxu0
      %v495 = vadd.f32 0.0, %v494
      %v496 = vpop.f32.mrb[0].mxu0
      %497 = vmatprep.mubr.f32.mxu0 0.0
      %498 = vmatmul.mubr.f32.gmra.mrb[0].mxu0 %v418
      %v499 = vpop.f32.mrb[0].mxu0
      %v500 = vadd.f32 0.0, %v499
      %v501 = vpop.f32.mrb[0].mxu0
      %502 = vmatprep.mubr.f32.mxu0 0.0
      %503 = vmatmul.mubr.f32.gmra.mrb[0].mxu0 %v421
      %v504 = vpop.f32.mrb[0].mxu0
      %v505 = vadd.f32 0.0, %v504
      %v506 = vpop.f32.mrb[0].mxu0
      %507 = vdwg.mxu0
      %v508 = vmul.f32 %v490, 0.001953125
      %v509 = vmul.f32 %v495, 0.001953125
      %v510 = vmul.f32 %v500, 0.001953125
      %v511 = vmul.f32 %v505, 0.001953125
      %512 = vmatprep.subr.mxu0 0.0
      %513 = vmatpush1.msra.mxu0 %v390
      %514 = vmatprep.subr.mxu0 0.0
      %515 = vmatpush1.msra.mxu0 %v395
      %516 = vmatprep.subr.mxu0 0.0
      %517 = vmatpush1.msra.mxu0 %v400
      %518 = vmatprep.subr.mxu0 0.0
      %519 = vmatpush1.msra.mxu0 %v405
      %520 = vmatprep.subr.mxu0 0.0
      %521 = vmatpush1.msra.mxu0 0.0
      %522 = vmatprep.subr.mxu0 0.0
      %523 = vmatpush1.msra.mxu0 0.0
      %524 = vmatprep.subr.mxu0 0.0
      %525 = vmatpush1.msra.mxu0 0.0
      %526 = vmatprep.subr.mxu0 0.0
      %527 = vmatpush1.msra.mxu0 0.0
      %528 = vmatprep.subr.mxu0 0.0
      %529 = vmatpush1.msra.mxu0 0.0
      %530 = vmatprep.subr.mxu0 0.0
      %531 = vmatpush1.msra.mxu0 0.0
      %532 = vmatprep.subr.mxu0 0.0
      %533 = vmatpush1.msra.mxu0 0.0
      %534 = vmatprep.subr.mxu0 0.0
      %535 = vmatpush1.msra.mxu0 0.0
      %536 = vmatprep.subr.mxu0 0.0
      %537 = vmatpush1.msra.mxu0 0.0
      %538 = vmatprep.subr.mxu0 0.0
      %539 = vmatpush1.msra.mxu0 0.0
      %540 = vmatprep.subr.mxu0 0.0
      %541 = vmatpush1.msra.mxu0 0.0
      %542 = vmatprep.subr.mxu0 0.0
      %543 = vmatpush1.msra.mxu0 0.0
      %544 = vmatprep.subr.mxu0 0.0
      %545 = vmatpush1.msra.mxu0 0.0
      %546 = vmatprep.subr.mxu0 0.0
      %547 = vmatpush1.msra.mxu0 0.0
      %548 = vmatprep.subr.mxu0 0.0
      %549 = vmatpush1.msra.mxu0 0.0
      %550 = vmatprep.subr.mxu0 0.0
      %551 = vmatpush1.msra.mxu0 0.0
      %552 = vmatprep.subr.mxu0 0.0
      %553 = vmatpush1.msra.mxu0 0.0
      %554 = vmatprep.subr.mxu0 0.0
      %555 = vmatpush1.msra.mxu0 0.0
      %556 = vmatprep.subr.mxu0 0.0
      %557 = vmatpush1.msra.mxu0 0.0
      %558 = vmatprep.subr.mxu0 0.0
      %559 = vmatpush1.msra.mxu0 0.0
      %560 = vmatprep.subr.mxu0 0.0
      %561 = vmatpush1.msra.mxu0 0.0
      %562 = vmatprep.subr.mxu0 0.0
      %563 = vmatpush1.msra.mxu0 0.0
      %564 = vmatprep.subr.mxu0 0.0
      %565 = vmatpush1.msra.mxu0 0.0
      %566 = vmatprep.subr.mxu0 0.0
      %567 = vmatpush1.msra.mxu0 0.0
      %568 = vmatprep.subr.mxu0 0.0
      %569 = vmatpush1.msra.mxu0 0.0
      %570 = vmatprep.subr.mxu0 0.0
      %571 = vmatpush1.msra.mxu0 0.0
      %572 = vmatprep.subr.mxu0 0.0
      %573 = vmatpush1.msra.mxu0 0.0
      %574 = vmatprep.subr.mxu0 0.0
      %575 = vmatpush1.msra.mxu0 0.0
      %576 = vmatprep.mubr.f32.mxu0 0.0
      %577 = vmatmul.mubr.f32.gmra.mrb[0].mxu0 %v412
      %v578 = vpop.f32.mrb[0].mxu0
      %v579 = vadd.f32 0.0, %v578
      %v580 = vpop.f32.mrb[0].mxu0
      %581 = vmatprep.mubr.f32.mxu0 0.0
      %582 = vmatmul.mubr.f32.gmra.mrb[0].mxu0 %v415
      %v583 = vpop.f32.mrb[0].mxu0
      %v584 = vadd.f32 0.0, %v583
      %v585 = vpop.f32.mrb[0].mxu0
      %586 = vmatprep.mubr.f32.mxu0 0.0
      %587 = vmatmul.mubr.f32.gmra.mrb[0].mxu0 %v418
      %v588 = vpop.f32.mrb[0].mxu0
      %v589 = vadd.f32 0.0, %v588
      %v590 = vpop.f32.mrb[0].mxu0
      %591 = vmatprep.mubr.f32.mxu0 0.0
      %592 = vmatmul.mubr.f32.gmra.mrb[0].mxu0 %v421
      %v593 = vpop.f32.mrb[0].mxu0
      %v594 = vadd.f32 0.0, %v593
      %v595 = vpop.f32.mrb[0].mxu0
      %596 = vdwg.mxu0
      %v597 = vmul.f32 %v579, 0.001953125
      %v598 = vmul.f32 %v584, 0.001953125
      %v599 = vmul.f32 %v589, 0.001953125
      %v600 = vmul.f32 %v594, 0.001953125
      %v601 = vmul.f32 %v508, %v508
      %v602 = vmul.f32 %v509, %v509
      %v603 = vmul.f32 %v510, %v510
      %v604 = vmul.f32 %v511, %v511
      %v605 = vsub.f32 %v597, %v601
      %v606 = vsub.f32 %v598, %v602
      %v607 = vsub.f32 %v599, %v603
      %v608 = vsub.f32 %v600, %v604
      %v609 = vadd.f32 %v605, 1e-06
      %v610 = vadd.f32 %v606, 1e-06
      %v611 = vadd.f32 %v607, 1e-06
      %v612 = vadd.f32 %v608, 1e-06
      %v613 = vrsqrt.pop %v609
      %v614 = vrsqrt.pop %v610
      %v615 = vrsqrt.pop %v611
      %v616 = vrsqrt.pop %v612
      %v617 = vld [vmem:[%s8] sm:$0xff]
      %v618 = vld [vmem:[%s8 + $0x8] sm:$0xff]
      %v619 = vld [vmem:[%s8 + $0x10] sm:$0xff]
      %v620 = vld [vmem:[%s8 + $0x18] sm:$0xff]
      %v622 = vsel %vm410, %v617, 0
      %v625 = vsel %vm410, %v618, 0
      %v628 = vsel %vm410, %v619, 0
      %v631 = vsel %vm410, %v620, 0
      %633 = vmatprep.subr.mxu0 0.0
      %634 = vmatpush1.msra.mxu0 %v508
      %635 = vmatprep.subr.mxu0 0.0
      %636 = vmatpush1.msra.mxu0 %v509
      %637 = vmatprep.subr.mxu0 0.0
      %638 = vmatpush1.msra.mxu0 %v510
      %639 = vmatprep.subr.mxu0 0.0
      %640 = vmatpush1.msra.mxu0 %v511
      %641 = vmatprep.subr.mxu0 0.0
      %642 = vmatpush1.msra.mxu0 0.0
      %643 = vmatprep.subr.mxu0 0.0
      %644 = vmatpush1.msra.mxu0 0.0
      %645 = vmatprep.subr.mxu0 0.0
      %646 = vmatpush1.msra.mxu0 0.0
      %647 = vmatprep.subr.mxu0 0.0
      %648 = vmatpush1.msra.mxu0 0.0
      %649 = vmatprep.subr.mxu0 0.0
      %650 = vmatpush1.msra.mxu0 0.0
      %651 = vmatprep.subr.mxu0 0.0
      %652 = vmatpush1.msra.mxu0 0.0
      %653 = vmatprep.subr.mxu0 0.0
      %654 = vmatpush1.msra.mxu0 0.0
      %655 = vmatprep.subr.mxu0 0.0
      %656 = vmatpush1.msra.mxu0 0.0
      %657 = vmatprep.subr.mxu0 0.0
      %658 = vmatpush1.msra.mxu0 0.0
      %659 = vmatprep.subr.mxu0 0.0
      %660 = vmatpush1.msra.mxu0 0.0
      %661 = vmatprep.subr.mxu0 0.0
      %662 = vmatpush1.msra.mxu0 0.0
      %663 = vmatprep.subr.mxu0 0.0
      %664 = vmatpush1.msra.mxu0 0.0
      %665 = vmatprep.subr.mxu0 0.0
      %666 = vmatpush1.msra.mxu0 0.0
      %667 = vmatprep.subr.mxu0 0.0
      %668 = vmatpush1.msra.mxu0 0.0
      %669 = vmatprep.subr.mxu0 0.0
      %670 = vmatpush1.msra.mxu0 0.0
      %671 = vmatprep.subr.mxu0 0.0
      %672 = vmatpush1.msra.mxu0 0.0
      %673 = vmatprep.subr.mxu0 0.0
      %674 = vmatpush1.msra.mxu0 0.0
      %675 = vmatprep.subr.mxu0 0.0
      %676 = vmatpush1.msra.mxu0 0.0
      %677 = vmatprep.subr.mxu0 0.0
      %678 = vmatpush1.msra.mxu0 0.0
      %679 = vmatprep.subr.mxu0 0.0
      %680 = vmatpush1.msra.mxu0 0.0
      %681 = vmatprep.subr.mxu0 0.0
      %682 = vmatpush1.msra.mxu0 0.0
      %683 = vmatprep.subr.mxu0 0.0
      %684 = vmatpush1.msra.mxu0 0.0
      %685 = vmatprep.subr.mxu0 0.0
      %686 = vmatpush1.msra.mxu0 0.0
      %687 = vmatprep.subr.mxu0 0.0
      %688 = vmatpush1.msra.mxu0 0.0
      %689 = vmatprep.subr.mxu0 0.0
      %690 = vmatpush1.msra.mxu0 0.0
      %691 = vmatprep.subr.mxu0 0.0
      %692 = vmatpush1.msra.mxu0 0.0
      %693 = vmatprep.subr.mxu0 0.0
      %694 = vmatpush1.msra.mxu0 0.0
      %695 = vmatprep.subr.mxu0 0.0
      %696 = vmatpush1.msra.mxu0 0.0
      %697 = vmatprep.mubr.f32.mxu0 0.0
      %698 = vmatmul.mubr.f32.gmra.mrb[0].mxu0 %v622
      %v699 = vpop.f32.mrb[0].mxu0
      %v700 = vadd.f32 0.0, %v699
      %v701 = vpop.f32.mrb[0].mxu0
      %702 = vmatprep.mubr.f32.mxu0 0.0
      %703 = vmatmul.mubr.f32.gmra.mrb[0].mxu0 %v625
      %v704 = vpop.f32.mrb[0].mxu0
      %v705 = vadd.f32 0.0, %v704
      %v706 = vpop.f32.mrb[0].mxu0
      %707 = vmatprep.mubr.f32.mxu0 0.0
      %708 = vmatmul.mubr.f32.gmra.mrb[0].mxu0 %v628
      %v709 = vpop.f32.mrb[0].mxu0
      %v710 = vadd.f32 0.0, %v709
      %v711 = vpop.f32.mrb[0].mxu0
      %712 = vmatprep.mubr.f32.mxu0 0.0
      %713 = vmatmul.mubr.f32.gmra.mrb[0].mxu0 %v631
      %v714 = vpop.f32.mrb[0].mxu0
      %v715 = vadd.f32 0.0, %v714
      %v716 = vpop.f32.mrb[0].mxu0
      %717 = vdwg.mxu0
      %718 = vmatprep.subr.mxu0 0.0
      %719 = vmatpush1.msra.mxu0 %v613
      %720 = vmatprep.subr.mxu0 0.0
      %721 = vmatpush1.msra.mxu0 %v614
      %722 = vmatprep.subr.mxu0 0.0
      %723 = vmatpush1.msra.mxu0 %v615
      %724 = vmatprep.subr.mxu0 0.0
      %725 = vmatpush1.msra.mxu0 %v616
      %726 = vmatprep.subr.mxu0 0.0
      %727 = vmatpush1.msra.mxu0 0.0
      %728 = vmatprep.subr.mxu0 0.0
      %729 = vmatpush1.msra.mxu0 0.0
      %730 = vmatprep.subr.mxu0 0.0
      %731 = vmatpush1.msra.mxu0 0.0
      %732 = vmatprep.subr.mxu0 0.0
      %733 = vmatpush1.msra.mxu0 0.0
      %734 = vmatprep.subr.mxu0 0.0
      %735 = vmatpush1.msra.mxu0 0.0
      %736 = vmatprep.subr.mxu0 0.0
      %737 = vmatpush1.msra.mxu0 0.0
      %738 = vmatprep.subr.mxu0 0.0
      %739 = vmatpush1.msra.mxu0 0.0
      %740 = vmatprep.subr.mxu0 0.0
      %741 = vmatpush1.msra.mxu0 0.0
      %742 = vmatprep.subr.mxu0 0.0
      %743 = vmatpush1.msra.mxu0 0.0
      %744 = vmatprep.subr.mxu0 0.0
      %745 = vmatpush1.msra.mxu0 0.0
      %746 = vmatprep.subr.mxu0 0.0
      %747 = vmatpush1.msra.mxu0 0.0
      %748 = vmatprep.subr.mxu0 0.0
      %749 = vmatpush1.msra.mxu0 0.0
      %750 = vmatprep.subr.mxu0 0.0
      %751 = vmatpush1.msra.mxu0 0.0
      %752 = vmatprep.subr.mxu0 0.0
      %753 = vmatpush1.msra.mxu0 0.0
      %754 = vmatprep.subr.mxu0 0.0
      %755 = vmatpush1.msra.mxu0 0.0
      %756 = vmatprep.subr.mxu0 0.0
      %757 = vmatpush1.msra.mxu0 0.0
      %758 = vmatprep.subr.mxu0 0.0
      %759 = vmatpush1.msra.mxu0 0.0
      %760 = vmatprep.subr.mxu0 0.0
      %761 = vmatpush1.msra.mxu0 0.0
      %762 = vmatprep.subr.mxu0 0.0
      %763 = vmatpush1.msra.mxu0 0.0
      %764 = vmatprep.subr.mxu0 0.0
      %765 = vmatpush1.msra.mxu0 0.0
      %766 = vmatprep.subr.mxu0 0.0
      %767 = vmatpush1.msra.mxu0 0.0
      %768 = vmatprep.subr.mxu0 0.0
      %769 = vmatpush1.msra.mxu0 0.0
      %770 = vmatprep.subr.mxu0 0.0
      %771 = vmatpush1.msra.mxu0 0.0
      %772 = vmatprep.subr.mxu0 0.0
      %773 = vmatpush1.msra.mxu0 0.0
      %774 = vmatprep.subr.mxu0 0.0
      %775 = vmatpush1.msra.mxu0 0.0
      %776 = vmatprep.subr.mxu0 0.0
      %777 = vmatpush1.msra.mxu0 0.0
      %778 = vmatprep.subr.mxu0 0.0
      %779 = vmatpush1.msra.mxu0 0.0
      %780 = vmatprep.subr.mxu0 0.0
      %781 = vmatpush1.msra.mxu0 0.0
      %782 = vmatprep.mubr.f32.mxu0 0.0
      %783 = vmatmul.mubr.f32.gmra.mrb[0].mxu0 %v622
      %v784 = vpop.f32.mrb[0].mxu0
      %v785 = vadd.f32 0.0, %v784
      %v786 = vpop.f32.mrb[0].mxu0
      %787 = vmatprep.mubr.f32.mxu0 0.0
      %788 = vmatmul.mubr.f32.gmra.mrb[0].mxu0 %v625
      %v789 = vpop.f32.mrb[0].mxu0
      %v790 = vadd.f32 0.0, %v789
      %v791 = vpop.f32.mrb[0].mxu0
      %792 = vmatprep.mubr.f32.mxu0 0.0
      %793 = vmatmul.mubr.f32.gmra.mrb[0].mxu0 %v628
      %v794 = vpop.f32.mrb[0].mxu0
      %v795 = vadd.f32 0.0, %v794
      %v796 = vpop.f32.mrb[0].mxu0
      %797 = vmatprep.mubr.f32.mxu0 0.0
      %798 = vmatmul.mubr.f32.gmra.mrb[0].mxu0 %v631
      %v799 = vpop.f32.mrb[0].mxu0
      %v800 = vadd.f32 0.0, %v799
      %v801 = vpop.f32.mrb[0].mxu0
      %802 = vdwg.mxu0
      %v803 = vld [vmem:[%s5] sm:$0xff]
      %v804 = vld [vmem:[%s5 + $0x8] sm:$0xff]
      %v805 = vld [vmem:[%s5 + $0x10] sm:$0xff]
      %v806 = vld [vmem:[%s5 + $0x18] sm:$0xff]
      %v807 = vmul.f32 %v803, %v785
      %v808 = vmul.f32 %v804, %v790
      %v809 = vmul.f32 %v805, %v795
      %v810 = vmul.f32 %v806, %v800
      %v811 = vld [vmem:[%s6] sm:$0xff]
      %v812 = vld [vmem:[%s6 + $0x8] sm:$0xff]
      %v813 = vld [vmem:[%s6 + $0x10] sm:$0xff]
      %v814 = vld [vmem:[%s6 + $0x18] sm:$0xff]
      %v815 = vmul.f32 %v807, %v700
      %v816 = vmul.f32 %v808, %v705
      %v817 = vmul.f32 %v809, %v710
      %v818 = vmul.f32 %v810, %v715
      %v819 = vsub.f32 %v811, %v815
      %v820 = vsub.f32 %v812, %v816
      %v821 = vsub.f32 %v813, %v817
      %v822 = vsub.f32 %v814, %v818
      %v823 = vld [vmem:[%s1] sm:$0xf]
      %v824 = vld [vmem:[%s1 + $0x4] sm:$0xf]
      %v825 = vld [vmem:[%s1 + $0x8] sm:$0xf]
      %v826 = vld [vmem:[%s1 + $0xc] sm:$0xf]
      %v827 = vld [vmem:[%s1 + $0x10] sm:$0xf]
      %v828 = vld [vmem:[%s1 + $0x14] sm:$0xf]
      %v829 = vld [vmem:[%s1 + $0x18] sm:$0xf]
      %v830 = vld [vmem:[%s1 + $0x1c] sm:$0xf]
      %v831 = vld [vmem:[%s1 + $0x20] sm:$0xf]
      %v832 = vld [vmem:[%s1 + $0x24] sm:$0xf]
      %v833 = vld [vmem:[%s1 + $0x28] sm:$0xf]
      %v834 = vld [vmem:[%s1 + $0x2c] sm:$0xf]
      %v835 = vpack.c.bf16 %v820, %v819
      %v836 = vpack.c.bf16 %v822, %v821
      %v837 = vld [vmem:[%s2] sm:$0xff]
      %v838 = vld [vmem:[%s2 + $0x8] sm:$0xff]
      %v839 = vld [vmem:[%s2 + $0x10] sm:$0xff]
      %v840 = vld [vmem:[%s2 + $0x18] sm:$0xff]
      %v841 = vld [vmem:[%s2 + $0x20] sm:$0xff]
      %v842 = vld [vmem:[%s2 + $0x28] sm:$0xff]
      %v843 = vld [vmem:[%s2 + $0x30] sm:$0xff]
      %v844 = vld [vmem:[%s2 + $0x38] sm:$0xff]
      %v845 = vld [vmem:[%s2 + $0x40] sm:$0xff]
      %v846 = vld [vmem:[%s2 + $0x48] sm:$0xff]
      %v847 = vld [vmem:[%s2 + $0x50] sm:$0xff]
      %v848 = vld [vmem:[%s2 + $0x58] sm:$0xff]
      %v861 = vunpack.c.l.b16 %v823
      %v862 = vunpack.c.l.b16 %v824
      %v863 = vunpack.c.l.b16 %v825
      %v864 = vunpack.c.l.b16 %v826
      %v865 = vunpack.c.l.b16 %v827
      %v866 = vunpack.c.l.b16 %v828
      %v867 = vunpack.c.l.b16 %v829
      %v868 = vunpack.c.l.b16 %v830
      %v869 = vunpack.c.l.b16 %v831
      %v870 = vunpack.c.l.b16 %v832
      %v871 = vunpack.c.l.b16 %v833
      %v872 = vunpack.c.l.b16 %v834
      %v873 = vpack.c.b16 %v862, %v861
      %v874 = vpack.c.b16 %v864, %v863
      %v875 = vpack.c.b16 %v866, %v865
      %v876 = vpack.c.b16 %v868, %v867
      %v877 = vpack.c.b16 %v870, %v869
      %v878 = vpack.c.b16 %v872, %v871
      %v880 = vsel %vm410, %v873, 0
      %v883 = vsel %vm410, %v874, 0
      %v886 = vsel %vm410, %v875, 0
      %v889 = vsel %vm410, %v876, 0
      %v892 = vsel %vm410, %v877, 0
      %v895 = vsel %vm410, %v878, 0
      %897 = vmatprep.subr.bf16.mxu0 0
      %898 = vmatpush1.bf16.msra.mxu0 %v835
      %899 = vmatprep.subr.bf16.mxu0 0
      %900 = vmatpush1.bf16.msra.mxu0 %v836
      %901 = vmatprep.subr.bf16.mxu0 0
      %902 = vmatpush1.bf16.msra.mxu0 0
      %903 = vmatprep.subr.bf16.mxu0 0
      %904 = vmatpush1.bf16.msra.mxu0 0
      %905 = vmatprep.subr.bf16.mxu0 0
      %906 = vmatpush1.bf16.msra.mxu0 0
      %907 = vmatprep.subr.bf16.mxu0 0
      %908 = vmatpush1.bf16.msra.mxu0 0
      %909 = vmatprep.subr.bf16.mxu0 0
      %910 = vmatpush1.bf16.msra.mxu0 0
      %911 = vmatprep.subr.bf16.mxu0 0
      %912 = vmatpush1.bf16.msra.mxu0 0
      %913 = vmatprep.subr.bf16.mxu0 0
      %914 = vmatpush1.bf16.msra.mxu0 0
      %915 = vmatprep.subr.bf16.mxu0 0
      %916 = vmatpush1.bf16.msra.mxu0 0
      %917 = vmatprep.subr.bf16.mxu0 0
      %918 = vmatpush1.bf16.msra.mxu0 0
      %919 = vmatprep.subr.bf16.mxu0 0
      %920 = vmatpush1.bf16.msra.mxu0 0
      %921 = vmatprep.subr.bf16.mxu0 0
      %922 = vmatpush1.bf16.msra.mxu0 0
      %923 = vmatprep.subr.bf16.mxu0 0
      %924 = vmatpush1.bf16.msra.mxu0 0
      %925 = vmatprep.subr.bf16.mxu0 0
      %926 = vmatpush1.bf16.msra.mxu0 0
      %927 = vmatprep.subr.bf16.mxu0 0
      %928 = vmatpush1.bf16.msra.mxu0 0
      %929 = vmatprep.mubr.bf16.mxu0 0
      %930 = vmatmul.mubr.bf16.gmra.mrb[0].mxu0 %v880
      %v931 = vpop.f32.mrb[0].mxu0
      %v932 = vadd.f32 %v837, %v931
      %v933 = vpop.f32.mrb[0].mxu0
      %v934 = vpop.f32.mrb[0].mxu0
      %v935 = vadd.f32 %v838, %v934
      %v936 = vpop.f32.mrb[0].mxu0
      %937 = vmatprep.mubr.bf16.mxu0 0
      %938 = vmatmul.mubr.bf16.gmra.mrb[0].mxu0 %v883
      %v939 = vpop.f32.mrb[0].mxu0
      %v940 = vadd.f32 %v839, %v939
      %v941 = vpop.f32.mrb[0].mxu0
      %v942 = vpop.f32.mrb[0].mxu0
      %v943 = vadd.f32 %v840, %v942
      %v944 = vpop.f32.mrb[0].mxu0
      %945 = vmatprep.mubr.bf16.mxu0 0
      %946 = vmatmul.mubr.bf16.gmra.mrb[0].mxu0 %v886
      %v947 = vpop.f32.mrb[0].mxu0
      %v948 = vadd.f32 %v841, %v947
      %v949 = vpop.f32.mrb[0].mxu0
      %v950 = vpop.f32.mrb[0].mxu0
      %v951 = vadd.f32 %v842, %v950
      %v952 = vpop.f32.mrb[0].mxu0
      %953 = vmatprep.mubr.bf16.mxu0 0
      %954 = vmatmul.mubr.bf16.gmra.mrb[0].mxu0 %v889
      %v955 = vpop.f32.mrb[0].mxu0
      %v956 = vadd.f32 %v843, %v955
      %v957 = vpop.f32.mrb[0].mxu0
      %v958 = vpop.f32.mrb[0].mxu0
      %v959 = vadd.f32 %v844, %v958
      %v960 = vpop.f32.mrb[0].mxu0
      %961 = vmatprep.mubr.bf16.mxu0 0
      %962 = vmatmul.mubr.bf16.gmra.mrb[0].mxu0 %v892
      %v963 = vpop.f32.mrb[0].mxu0
      %v964 = vadd.f32 %v845, %v963
      %v965 = vpop.f32.mrb[0].mxu0
      %v966 = vpop.f32.mrb[0].mxu0
      %v967 = vadd.f32 %v846, %v966
      %v968 = vpop.f32.mrb[0].mxu0
      %969 = vmatprep.mubr.bf16.mxu0 0
      %970 = vmatmul.mubr.bf16.gmra.mrb[0].mxu0 %v895
      %v971 = vpop.f32.mrb[0].mxu0
      %v972 = vadd.f32 %v847, %v971
      %v973 = vpop.f32.mrb[0].mxu0
      %v974 = vpop.f32.mrb[0].mxu0
      %v975 = vadd.f32 %v848, %v974
      %v976 = vpop.f32.mrb[0].mxu0
      %977 = vdwg.mxu0
      %979 = vset.pattern.permute.xlu0 0
      %980 = vperm.xlu0 %979, %v807
      %v981 = vpop.permute.xlu0 %980
      %984 = vset.pattern.permute.xlu0 0
      %985 = vperm.xlu0 %984, %v808
      %v986 = vpop.permute.xlu0 %985
      %989 = vset.pattern.permute.xlu0 0
      %990 = vperm.xlu0 %989, %v809
      %v991 = vpop.permute.xlu0 %990
      %994 = vset.pattern.permute.xlu0 0
      %995 = vperm.xlu0 %994, %v810
      %v996 = vpop.permute.xlu0 %995
      %v998 = vmul.f32 %v334, %v981
      %v999 = vmul.f32 %v335, %v981
      %v1000 = vmul.f32 %v336, %v981
      %v1001 = vmul.f32 %v337, %v981
      %v1002 = vmul.f32 %v338, %v986
      %v1003 = vmul.f32 %v339, %v986
      %v1004 = vmul.f32 %v340, %v986
      %v1005 = vmul.f32 %v341, %v986
      %v1006 = vmul.f32 %v342, %v991
      %v1007 = vmul.f32 %v343, %v991
      %v1008 = vmul.f32 %v344, %v991
      %v1009 = vmul.f32 %v345, %v991
      %v1010 = vmul.f32 %v346, %v996
      %v1011 = vmul.f32 %v347, %v996
      %v1012 = vmul.f32 %v348, %v996
      %v1013 = vmul.f32 %v349, %v996
      %v1014 = vpack.c.bf16 %v1002, %v998
      %v1015 = vpack.c.bf16 %v1003, %v999
      %v1016 = vpack.c.bf16 %v1004, %v1000
      %v1017 = vpack.c.bf16 %v1005, %v1001
      %v1018 = vpack.c.bf16 %v1010, %v1006
      %v1019 = vpack.c.bf16 %v1011, %v1007
      %v1020 = vpack.c.bf16 %v1012, %v1008
      %v1021 = vpack.c.bf16 %v1013, %v1009
      %1023 = vset.pattern.permute.xlu0 0
      %1024 = vperm.xlu0 %1023, %v932
      %v1025 = vpop.permute.xlu0 %1024
      %1028 = vset.pattern.permute.xlu0 0
      %1029 = vperm.xlu0 %1028, %v935
      %v1030 = vpop.permute.xlu0 %1029
      %1033 = vset.pattern.permute.xlu0 0
      %1034 = vperm.xlu0 %1033, %v940
      %v1035 = vpop.permute.xlu0 %1034
      %1038 = vset.pattern.permute.xlu0 0
      %1039 = vperm.xlu0 %1038, %v943
      %v1040 = vpop.permute.xlu0 %1039
      %1043 = vset.pattern.permute.xlu0 0
      %1044 = vperm.xlu0 %1043, %v948
      %v1045 = vpop.permute.xlu0 %1044
      %1048 = vset.pattern.permute.xlu0 0
      %1049 = vperm.xlu0 %1048, %v951
      %v1050 = vpop.permute.xlu0 %1049
      %1053 = vset.pattern.permute.xlu0 0
      %1054 = vperm.xlu0 %1053, %v956
      %v1055 = vpop.permute.xlu0 %1054
      %1058 = vset.pattern.permute.xlu0 0
      %1059 = vperm.xlu0 %1058, %v959
      %v1060 = vpop.permute.xlu0 %1059
      %1063 = vset.pattern.permute.xlu0 0
      %1064 = vperm.xlu0 %1063, %v964
      %v1065 = vpop.permute.xlu0 %1064
      %1068 = vset.pattern.permute.xlu0 0
      %1069 = vperm.xlu0 %1068, %v967
      %v1070 = vpop.permute.xlu0 %1069
      %1073 = vset.pattern.permute.xlu0 0
      %1074 = vperm.xlu0 %1073, %v972
      %v1075 = vpop.permute.xlu0 %1074
      %1078 = vset.pattern.permute.xlu0 0
      %1079 = vperm.xlu0 %1078, %v975
      %v1080 = vpop.permute.xlu0 %1079
      %1082 = vmatprep.subr.bf16.mxu0 %v1015
      %1083 = vmatpush1.bf16.msra.mxu0 %v1014
      %1084 = vmatprep.subr.bf16.mxu0 %v1019
      %1085 = vmatpush1.bf16.msra.mxu0 %v1018
      %1086 = vmatprep.subr.bf16.mxu0 0
      %1087 = vmatpush1.bf16.msra.mxu0 0
      %1088 = vmatprep.subr.bf16.mxu0 0
      %1089 = vmatpush1.bf16.msra.mxu0 0
      %1090 = vmatprep.subr.bf16.mxu0 0
      %1091 = vmatpush1.bf16.msra.mxu0 0
      %1092 = vmatprep.subr.bf16.mxu0 0
      %1093 = vmatpush1.bf16.msra.mxu0 0
      %1094 = vmatprep.subr.bf16.mxu0 0
      %1095 = vmatpush1.bf16.msra.mxu0 0
      %1096 = vmatprep.subr.bf16.mxu0 0
      %1097 = vmatpush1.bf16.msra.mxu0 0
      %1098 = vmatprep.subr.bf16.mxu0 0
      %1099 = vmatpush1.bf16.msra.mxu0 0
      %1100 = vmatprep.subr.bf16.mxu0 0
      %1101 = vmatpush1.bf16.msra.mxu0 0
      %1102 = vmatprep.subr.bf16.mxu0 0
      %1103 = vmatpush1.bf16.msra.mxu0 0
      %1104 = vmatprep.subr.bf16.mxu0 0
      %1105 = vmatpush1.bf16.msra.mxu0 0
      %1106 = vmatprep.subr.bf16.mxu0 0
      %1107 = vmatpush1.bf16.msra.mxu0 0
      %1108 = vmatprep.subr.bf16.mxu0 0
      %1109 = vmatpush1.bf16.msra.mxu0 0
      %1110 = vmatprep.subr.bf16.mxu0 0
      %1111 = vmatpush1.bf16.msra.mxu0 0
      %1112 = vmatprep.subr.bf16.mxu0 0
      %1113 = vmatpush1.bf16.msra.mxu0 0
      %1114 = vmatprep.mubr.bf16.mxu0 0
      %1115 = vmatmul.mubr.bf16.gmra.mrb[0].mxu0 %v880
      %v1116 = vpop.f32.mrb[0].mxu0
      %v1117 = vadd.f32 %v1025, %v1116
      %v1118 = vpop.f32.mrb[0].mxu0
      %v1119 = vadd.f32 %v1025, %v1118
      %v1120 = vpop.f32.mrb[0].mxu0
      %v1121 = vadd.f32 %v1030, %v1120
      %v1122 = vpop.f32.mrb[0].mxu0
      %v1123 = vadd.f32 %v1030, %v1122
      %1124 = vmatprep.mubr.bf16.mxu0 0
      %1125 = vmatmul.mubr.bf16.gmra.mrb[0].mxu0 %v883
      %v1126 = vpop.f32.mrb[0].mxu0
      %v1127 = vadd.f32 %v1035, %v1126
      %v1128 = vpop.f32.mrb[0].mxu0
      %v1129 = vadd.f32 %v1035, %v1128
      %v1130 = vpop.f32.mrb[0].mxu0
      %v1131 = vadd.f32 %v1040, %v1130
      %v1132 = vpop.f32.mrb[0].mxu0
      %v1133 = vadd.f32 %v1040, %v1132
      %1134 = vmatprep.mubr.bf16.mxu0 0
      %1135 = vmatmul.mubr.bf16.gmra.mrb[0].mxu0 %v886
      %v1136 = vpop.f32.mrb[0].mxu0
      %v1137 = vadd.f32 %v1045, %v1136
      %v1138 = vpop.f32.mrb[0].mxu0
      %v1139 = vadd.f32 %v1045, %v1138
      %v1140 = vpop.f32.mrb[0].mxu0
      %v1141 = vadd.f32 %v1050, %v1140
      %v1142 = vpop.f32.mrb[0].mxu0
      %v1143 = vadd.f32 %v1050, %v1142
      %1144 = vmatprep.mubr.bf16.mxu0 0
      %1145 = vmatmul.mubr.bf16.gmra.mrb[0].mxu0 %v889
      %v1146 = vpop.f32.mrb[0].mxu0
      %v1147 = vadd.f32 %v1055, %v1146
      %v1148 = vpop.f32.mrb[0].mxu0
      %v1149 = vadd.f32 %v1055, %v1148
      %v1150 = vpop.f32.mrb[0].mxu0
      %v1151 = vadd.f32 %v1060, %v1150
      %v1152 = vpop.f32.mrb[0].mxu0
      %v1153 = vadd.f32 %v1060, %v1152
      %1154 = vmatprep.mubr.bf16.mxu0 0
      %1155 = vmatmul.mubr.bf16.gmra.mrb[0].mxu0 %v892
      %v1156 = vpop.f32.mrb[0].mxu0
      %v1157 = vadd.f32 %v1065, %v1156
      %v1158 = vpop.f32.mrb[0].mxu0
      %v1159 = vadd.f32 %v1065, %v1158
      %v1160 = vpop.f32.mrb[0].mxu0
      %v1161 = vadd.f32 %v1070, %v1160
      %v1162 = vpop.f32.mrb[0].mxu0
      %v1163 = vadd.f32 %v1070, %v1162
      %1164 = vmatprep.mubr.bf16.mxu0 0
      %1165 = vmatmul.mubr.bf16.gmra.mrb[0].mxu0 %v895
      %v1166 = vpop.f32.mrb[0].mxu0
      %v1167 = vadd.f32 %v1075, %v1166
      %v1168 = vpop.f32.mrb[0].mxu0
      %v1169 = vadd.f32 %v1075, %v1168
      %v1170 = vpop.f32.mrb[0].mxu0
      %v1171 = vadd.f32 %v1080, %v1170
      %v1172 = vpop.f32.mrb[0].mxu0
      %v1173 = vadd.f32 %v1080, %v1172
      %1174 = vdwg.mxu0
      %1175 = vmatprep.subr.bf16.mxu0 %v1017
      %1176 = vmatpush1.bf16.msra.mxu0 %v1016
      %1177 = vmatprep.subr.bf16.mxu0 %v1021
      %1178 = vmatpush1.bf16.msra.mxu0 %v1020
      %1179 = vmatprep.subr.bf16.mxu0 0
      %1180 = vmatpush1.bf16.msra.mxu0 0
      %1181 = vmatprep.subr.bf16.mxu0 0
      %1182 = vmatpush1.bf16.msra.mxu0 0
      %1183 = vmatprep.subr.bf16.mxu0 0
      %1184 = vmatpush1.bf16.msra.mxu0 0
      %1185 = vmatprep.subr.bf16.mxu0 0
      %1186 = vmatpush1.bf16.msra.mxu0 0
      %1187 = vmatprep.subr.bf16.mxu0 0
      %1188 = vmatpush1.bf16.msra.mxu0 0
      %1189 = vmatprep.subr.bf16.mxu0 0
      %1190 = vmatpush1.bf16.msra.mxu0 0
      %1191 = vmatprep.subr.bf16.mxu0 0
      %1192 = vmatpush1.bf16.msra.mxu0 0
      %1193 = vmatprep.subr.bf16.mxu0 0
      %1194 = vmatpush1.bf16.msra.mxu0 0
      %1195 = vmatprep.subr.bf16.mxu0 0
      %1196 = vmatpush1.bf16.msra.mxu0 0
      %1197 = vmatprep.subr.bf16.mxu0 0
      %1198 = vmatpush1.bf16.msra.mxu0 0
      %1199 = vmatprep.subr.bf16.mxu0 0
      %1200 = vmatpush1.bf16.msra.mxu0 0
      %1201 = vmatprep.subr.bf16.mxu0 0
      %1202 = vmatpush1.bf16.msra.mxu0 0
      %1203 = vmatprep.subr.bf16.mxu0 0
      %1204 = vmatpush1.bf16.msra.mxu0 0
      %1205 = vmatprep.subr.bf16.mxu0 0
      %1206 = vmatpush1.bf16.msra.mxu0 0
      %1207 = vmatprep.mubr.bf16.mxu0 0
      %1208 = vmatmul.mubr.bf16.gmra.mrb[0].mxu0 %v880
      %v1209 = vpop.f32.mrb[0].mxu0
      %v1210 = vadd.f32 %v1025, %v1209
      %v1211 = vpop.f32.mrb[0].mxu0
      %v1212 = vadd.f32 %v1025, %v1211
      %v1213 = vpop.f32.mrb[0].mxu0
      %v1214 = vadd.f32 %v1030, %v1213
      %v1215 = vpop.f32.mrb[0].mxu0
      %v1216 = vadd.f32 %v1030, %v1215
      %1217 = vmatprep.mubr.bf16.mxu0 0
      %1218 = vmatmul.mubr.bf16.gmra.mrb[0].mxu0 %v883
      %v1219 = vpop.f32.mrb[0].mxu0
      %v1220 = vadd.f32 %v1035, %v1219
      %v1221 = vpop.f32.mrb[0].mxu0
      %v1222 = vadd.f32 %v1035, %v1221
      %v1223 = vpop.f32.mrb[0].mxu0
      %v1224 = vadd.f32 %v1040, %v1223
      %v1225 = vpop.f32.mrb[0].mxu0
      %v1226 = vadd.f32 %v1040, %v1225
      %1227 = vmatprep.mubr.bf16.mxu0 0
      %1228 = vmatmul.mubr.bf16.gmra.mrb[0].mxu0 %v886
      %v1229 = vpop.f32.mrb[0].mxu0
      %v1230 = vadd.f32 %v1045, %v1229
      %v1231 = vpop.f32.mrb[0].mxu0
      %v1232 = vadd.f32 %v1045, %v1231
      %v1233 = vpop.f32.mrb[0].mxu0
      %v1234 = vadd.f32 %v1050, %v1233
      %v1235 = vpop.f32.mrb[0].mxu0
      %v1236 = vadd.f32 %v1050, %v1235
      %1237 = vmatprep.mubr.bf16.mxu0 0
      %1238 = vmatmul.mubr.bf16.gmra.mrb[0].mxu0 %v889
      %v1239 = vpop.f32.mrb[0].mxu0
      %v1240 = vadd.f32 %v1055, %v1239
      %v1241 = vpop.f32.mrb[0].mxu0
      %v1242 = vadd.f32 %v1055, %v1241
      %v1243 = vpop.f32.mrb[0].mxu0
      %v1244 = vadd.f32 %v1060, %v1243
      %v1245 = vpop.f32.mrb[0].mxu0
      %v1246 = vadd.f32 %v1060, %v1245
      %1247 = vmatprep.mubr.bf16.mxu0 0
      %1248 = vmatmul.mubr.bf16.gmra.mrb[0].mxu0 %v892
      %v1249 = vpop.f32.mrb[0].mxu0
      %v1250 = vadd.f32 %v1065, %v1249
      %v1251 = vpop.f32.mrb[0].mxu0
      %v1252 = vadd.f32 %v1065, %v1251
      %v1253 = vpop.f32.mrb[0].mxu0
      %v1254 = vadd.f32 %v1070, %v1253
      %v1255 = vpop.f32.mrb[0].mxu0
      %v1256 = vadd.f32 %v1070, %v1255
      %1257 = vmatprep.mubr.bf16.mxu0 0
      %1258 = vmatmul.mubr.bf16.gmra.mrb[0].mxu0 %v895
      %v1259 = vpop.f32.mrb[0].mxu0
      %v1260 = vadd.f32 %v1075, %v1259
      %v1261 = vpop.f32.mrb[0].mxu0
      %v1262 = vadd.f32 %v1075, %v1261
      %v1263 = vpop.f32.mrb[0].mxu0
      %v1264 = vadd.f32 %v1080, %v1263
      %v1265 = vpop.f32.mrb[0].mxu0
      %v1266 = vadd.f32 %v1080, %v1265
      %1267 = vdwg.mxu0
      %1268 = vst [vmem:[#allocation2] sm:$0xff] %v1117
      %1269 = vst [vmem:[#allocation2 + $0x8] sm:$0xff] %v1119
      %1270 = vst [vmem:[#allocation2 + $0x10] sm:$0xff] %v1210
      %1271 = vst [vmem:[#allocation2 + $0x18] sm:$0xff] %v1212
      %1272 = vst [vmem:[#allocation2 + $0x20] sm:$0xff] %v1121
      %1273 = vst [vmem:[#allocation2 + $0x28] sm:$0xff] %v1123
      %1274 = vst [vmem:[#allocation2 + $0x30] sm:$0xff] %v1214
      %1275 = vst [vmem:[#allocation2 + $0x38] sm:$0xff] %v1216
      %1276 = vst [vmem:[#allocation2 + $0x40] sm:$0xff] %v1127
      %1277 = vst [vmem:[#allocation2 + $0x48] sm:$0xff] %v1129
      %1278 = vst [vmem:[#allocation2 + $0x50] sm:$0xff] %v1220
      %1279 = vst [vmem:[#allocation2 + $0x58] sm:$0xff] %v1222
      %1280 = vst [vmem:[#allocation2 + $0x60] sm:$0xff] %v1131
      %1281 = vst [vmem:[#allocation2 + $0x68] sm:$0xff] %v1133
      %1282 = vst [vmem:[#allocation2 + $0x70] sm:$0xff] %v1224
      %1283 = vst [vmem:[#allocation2 + $0x78] sm:$0xff] %v1226
      %1284 = vst [vmem:[#allocation2 + $0x80] sm:$0xff] %v1137
      %1285 = vst [vmem:[#allocation2 + $0x88] sm:$0xff] %v1139
      %1286 = vst [vmem:[#allocation2 + $0x90] sm:$0xff] %v1230
      %1287 = vst [vmem:[#allocation2 + $0x98] sm:$0xff] %v1232
      %1288 = vst [vmem:[#allocation2 + $0xa0] sm:$0xff] %v1141
      %1289 = vst [vmem:[#allocation2 + $0xa8] sm:$0xff] %v1143
      %1290 = vst [vmem:[#allocation2 + $0xb0] sm:$0xff] %v1234
      %1291 = vst [vmem:[#allocation2 + $0xb8] sm:$0xff] %v1236
      %1292 = vst [vmem:[#allocation2 + $0xc0] sm:$0xff] %v1147
      %1293 = vst [vmem:[#allocation2 + $0xc8] sm:$0xff] %v1149
      %1294 = vst [vmem:[#allocation2 + $0xd0] sm:$0xff] %v1240
      %1295 = vst [vmem:[#allocation2 + $0xd8] sm:$0xff] %v1242
      %1296 = vst [vmem:[#allocation2 + $0xe0] sm:$0xff] %v1151
      %1297 = vst [vmem:[#allocation2 + $0xe8] sm:$0xff] %v1153
      %1298 = vst [vmem:[#allocation2 + $0xf0] sm:$0xff] %v1244
      %1299 = vst [vmem:[#allocation2 + $0xf8] sm:$0xff] %v1246
      %1300 = vst [vmem:[#allocation2 + $0x100] sm:$0xff] %v1157
      %1301 = vst [vmem:[#allocation2 + $0x108] sm:$0xff] %v1159
      %1302 = vst [vmem:[#allocation2 + $0x110] sm:$0xff] %v1250
      %1303 = vst [vmem:[#allocation2 + $0x118] sm:$0xff] %v1252
      %1304 = vst [vmem:[#allocation2 + $0x120] sm:$0xff] %v1161
      %1305 = vst [vmem:[#allocation2 + $0x128] sm:$0xff] %v1163
      %1306 = vst [vmem:[#allocation2 + $0x130] sm:$0xff] %v1254
      %1307 = vst [vmem:[#allocation2 + $0x138] sm:$0xff] %v1256
      %1308 = vst [vmem:[#allocation2 + $0x140] sm:$0xff] %v1167
      %1309 = vst [vmem:[#allocation2 + $0x148] sm:$0xff] %v1169
      %1310 = vst [vmem:[#allocation2 + $0x150] sm:$0xff] %v1260
      %1311 = vst [vmem:[#allocation2 + $0x158] sm:$0xff] %v1262
      %1312 = vst [vmem:[#allocation2 + $0x160] sm:$0xff] %v1171
      %1313 = vst [vmem:[#allocation2 + $0x168] sm:$0xff] %v1173
      %1314 = vst [vmem:[#allocation2 + $0x170] sm:$0xff] %v1264
      %1315 = vst [vmem:[#allocation2 + $0x178] sm:$0xff] %v1266
      %v1316 = vld [vmem:[#allocation2] sm:$0xff]
      %v1317 = vld [vmem:[#allocation2 + $0x8] sm:$0xff]
      %v1318 = vld [vmem:[#allocation2 + $0x20] sm:$0xff]
      %v1319 = vld [vmem:[#allocation2 + $0x28] sm:$0xff]
      %v1320 = vpack.c.bf16 %v1318, %v1316
      %v1321 = vpack.c.bf16 %v1319, %v1317
      %v1322 = vld [vmem:[#allocation2 + $0x80] sm:$0xff]
      %v1323 = vld [vmem:[#allocation2 + $0x88] sm:$0xff]
      %v1324 = vld [vmem:[#allocation2 + $0xa0] sm:$0xff]
      %v1325 = vld [vmem:[#allocation2 + $0xa8] sm:$0xff]
      %v1326 = vpack.c.bf16 %v1324, %v1322
      %v1327 = vpack.c.bf16 %v1325, %v1323
      %v1328 = vld [vmem:[#allocation2 + $0x10] sm:$0xff]
      %v1329 = vld [vmem:[#allocation2 + $0x18] sm:$0xff]
      %v1330 = vld [vmem:[#allocation2 + $0x30] sm:$0xff]
      %v1331 = vld [vmem:[#allocation2 + $0x38] sm:$0xff]
      %v1332 = vpack.c.bf16 %v1330, %v1328
      %v1333 = vpack.c.bf16 %v1331, %v1329
      %v1334 = vld [vmem:[#allocation2 + $0x90] sm:$0xff]
      %v1335 = vld [vmem:[#allocation2 + $0x98] sm:$0xff]
      %v1336 = vld [vmem:[#allocation2 + $0xb0] sm:$0xff]
      %v1337 = vld [vmem:[#allocation2 + $0xb8] sm:$0xff]
      %v1338 = vpack.c.bf16 %v1336, %v1334
      %v1339 = vpack.c.bf16 %v1337, %v1335
      %1340 = vxpose.xlu0.c.b16.start [1/8] %v1332, 128
      %1341 = vxpose.xlu0.c.b16.cont [2/8] 0, 128
      %1342 = vxpose.xlu0.c.b16.cont [3/8] 0, 128
      %1343 = vxpose.xlu0.c.b16.cont [4/8] 0, 128
      %1344 = vxpose.xlu0.c.b16.cont [5/8] 0, 128
      %1345 = vxpose.xlu0.c.b16.cont [6/8] 0, 128
      %1346 = vxpose.xlu0.c.b16.cont [7/8] 0, 128
      %1347 = vxpose.xlu0.c.b16.end [8/8] 0, 128
      %v1348 = vpop.trf.xlu0
      %v1349 = vpop.trf.xlu0
      %v1350 = vpop.trf.xlu0
      %v1351 = vpop.trf.xlu0
      %v1352 = vpop.trf.xlu0
      %v1353 = vpop.trf.xlu0
      %v1354 = vpop.trf.xlu0
      %v1355 = vpop.trf.xlu0
      %1356 = vxpose.xlu0.c.b16.start [1/8] %v1333, 128
      %1357 = vxpose.xlu0.c.b16.cont [2/8] 0, 128
      %1358 = vxpose.xlu0.c.b16.cont [3/8] 0, 128
      %1359 = vxpose.xlu0.c.b16.cont [4/8] 0, 128
      %1360 = vxpose.xlu0.c.b16.cont [5/8] 0, 128
      %1361 = vxpose.xlu0.c.b16.cont [6/8] 0, 128
      %1362 = vxpose.xlu0.c.b16.cont [7/8] 0, 128
      %1363 = vxpose.xlu0.c.b16.end [8/8] 0, 128
      %v1364 = vpop.trf.xlu0
      %v1365 = vpop.trf.xlu0
      %v1366 = vpop.trf.xlu0
      %v1367 = vpop.trf.xlu0
      %v1368 = vpop.trf.xlu0
      %v1369 = vpop.trf.xlu0
      %v1370 = vpop.trf.xlu0
      %v1371 = vpop.trf.xlu0
      %vm1372 = vcmask 130048
      %v1374 = vsel %vm1372, %v1348, 0
      %v1377 = vsel %vm1372, %v1349, 0
      %v1380 = vsel %vm1372, %v1350, 0
      %v1383 = vsel %vm1372, %v1351, 0
      %v1386 = vsel %vm1372, %v1352, 0
      %v1389 = vsel %vm1372, %v1353, 0
      %v1392 = vsel %vm1372, %v1354, 0
      %v1395 = vsel %vm1372, %v1355, 0
      %v1398 = vsel %vm1372, %v1364, 0
      %v1401 = vsel %vm1372, %v1365, 0
      %v1404 = vsel %vm1372, %v1366, 0
      %v1407 = vsel %vm1372, %v1367, 0
      %v1410 = vsel %vm1372, %v1368, 0
      %v1413 = vsel %vm1372, %v1369, 0
      %v1416 = vsel %vm1372, %v1370, 0
      %v1419 = vsel %vm1372, %v1371, 0
      %1421 = vmatprep.subr.bf16.mxu0 %v1339
      %1422 = vmatpush1.bf16.msra.mxu0 %v1338
      %1423 = vmatprep.subr.bf16.mxu0 0
      %1424 = vmatpush1.bf16.msra.mxu0 0
      %1425 = vmatprep.subr.bf16.mxu0 0
      %1426 = vmatpush1.bf16.msra.mxu0 0
      %1427 = vmatprep.subr.bf16.mxu0 0
      %1428 = vmatpush1.bf16.msra.mxu0 0
      %1429 = vmatprep.subr.bf16.mxu0 0
      %1430 = vmatpush1.bf16.msra.mxu0 0
      %1431 = vmatprep.subr.bf16.mxu0 0
      %1432 = vmatpush1.bf16.msra.mxu0 0
      %1433 = vmatprep.subr.bf16.mxu0 0
      %1434 = vmatpush1.bf16.msra.mxu0 0
      %1435 = vmatprep.subr.bf16.mxu0 0
      %1436 = vmatpush1.bf16.msra.mxu0 0
      %1437 = vmatprep.subr.bf16.mxu0 0
      %1438 = vmatpush1.bf16.msra.mxu0 0
      %1439 = vmatprep.subr.bf16.mxu0 0
      %1440 = vmatpush1.bf16.msra.mxu0 0
      %1441 = vmatprep.subr.bf16.mxu0 0
      %1442 = vmatpush1.bf16.msra.mxu0 0
      %1443 = vmatprep.subr.bf16.mxu0 0
      %1444 = vmatpush1.bf16.msra.mxu0 0
      %1445 = vmatprep.subr.bf16.mxu0 0
      %1446 = vmatpush1.bf16.msra.mxu0 0
      %1447 = vmatprep.subr.bf16.mxu0 0
      %1448 = vmatpush1.bf16.msra.mxu0 0
      %1449 = vmatprep.subr.bf16.mxu0 0
      %1450 = vmatpush1.bf16.msra.mxu0 0
      %1451 = vmatprep.subr.bf16.mxu0 0
      %1452 = vmatpush1.bf16.msra.mxu0 0
      %1453 = vmatprep.mubr.bf16.mxu0 0
      %1454 = vmatmul.mubr.bf16.gmra.mrb[0].mxu0 %v1374
      %v1455 = vpop.f32.mrb[0].mxu0
      %v1456 = vadd.f32 0.0, %v1455
      %v1457 = vpop.f32.mrb[0].mxu0
      %v1458 = vadd.f32 0.0, %v1457
      %v1459 = vpop.f32.mrb[0].mxu0
      %v1460 = vadd.f32 0.0, %v1459
      %v1461 = vpop.f32.mrb[0].mxu0
      %v1462 = vadd.f32 0.0, %v1461
      %1463 = vmatprep.mubr.bf16.mxu0 0
      %1464 = vmatmul.mubr.bf16.gmra.mrb[0].mxu0 %v1377
      %v1465 = vpop.f32.mrb[0].mxu0
      %v1466 = vadd.f32 0.0, %v1465
      %v1467 = vpop.f32.mrb[0].mxu0
      %v1468 = vadd.f32 0.0, %v1467
      %v1469 = vpop.f32.mrb[0].mxu0
      %v1470 = vadd.f32 0.0, %v1469
      %v1471 = vpop.f32.mrb[0].mxu0
      %v1472 = vadd.f32 0.0, %v1471
      %1473 = vmatprep.mubr.bf16.mxu0 0
      %1474 = vmatmul.mubr.bf16.gmra.mrb[0].mxu0 %v1380
      %v1475 = vpop.f32.mrb[0].mxu0
      %v1476 = vadd.f32 0.0, %v1475
      %v1477 = vpop.f32.mrb[0].mxu0
      %v1478 = vadd.f32 0.0, %v1477
      %v1479 = vpop.f32.mrb[0].mxu0
      %v1480 = vadd.f32 0.0, %v1479
      %v1481 = vpop.f32.mrb[0].mxu0
      %v1482 = vadd.f32 0.0, %v1481
      %1483 = vmatprep.mubr.bf16.mxu0 0
      %1484 = vmatmul.mubr.bf16.gmra.mrb[0].mxu0 %v1383
      %v1485 = vpop.f32.mrb[0].mxu0
      %v1486 = vadd.f32 0.0, %v1485
      %v1487 = vpop.f32.mrb[0].mxu0
      %v1488 = vadd.f32 0.0, %v1487
      %v1489 = vpop.f32.mrb[0].mxu0
      %v1490 = vadd.f32 0.0, %v1489
      %v1491 = vpop.f32.mrb[0].mxu0
      %v1492 = vadd.f32 0.0, %v1491
      %1493 = vmatprep.mubr.bf16.mxu0 0
      %1494 = vmatmul.mubr.bf16.gmra.mrb[0].mxu0 %v1386
      %v1495 = vpop.f32.mrb[0].mxu0
      %v1496 = vadd.f32 0.0, %v1495
      %v1497 = vpop.f32.mrb[0].mxu0
      %v1498 = vadd.f32 0.0, %v1497
      %v1499 = vpop.f32.mrb[0].mxu0
      %v1500 = vadd.f32 0.0, %v1499
      %v1501 = vpop.f32.mrb[0].mxu0
      %v1502 = vadd.f32 0.0, %v1501
      %1503 = vmatprep.mubr.bf16.mxu0 0
      %1504 = vmatmul.mubr.bf16.gmra.mrb[0].mxu0 %v1389
      %v1505 = vpop.f32.mrb[0].mxu0
      %v1506 = vadd.f32 0.0, %v1505
      %v1507 = vpop.f32.mrb[0].mxu0
      %v1508 = vadd.f32 0.0, %v1507
      %v1509 = vpop.f32.mrb[0].mxu0
      %v1510 = vadd.f32 0.0, %v1509
      %v1511 = vpop.f32.mrb[0].mxu0
      %v1512 = vadd.f32 0.0, %v1511
      %1513 = vmatprep.mubr.bf16.mxu0 0
      %1514 = vmatmul.mubr.bf16.gmra.mrb[0].mxu0 %v1392
      %v1515 = vpop.f32.mrb[0].mxu0
      %v1516 = vadd.f32 0.0, %v1515
      %v1517 = vpop.f32.mrb[0].mxu0
      %v1518 = vadd.f32 0.0, %v1517
      %v1519 = vpop.f32.mrb[0].mxu0
      %v1520 = vadd.f32 0.0, %v1519
      %v1521 = vpop.f32.mrb[0].mxu0
      %v1522 = vadd.f32 0.0, %v1521
      %1523 = vmatprep.mubr.bf16.mxu0 0
      %1524 = vmatmul.mubr.bf16.gmra.mrb[0].mxu0 %v1395
      %v1525 = vpop.f32.mrb[0].mxu0
      %v1526 = vadd.f32 0.0, %v1525
      %v1527 = vpop.f32.mrb[0].mxu0
      %v1528 = vadd.f32 0.0, %v1527
      %v1529 = vpop.f32.mrb[0].mxu0
      %v1530 = vadd.f32 0.0, %v1529
      %v1531 = vpop.f32.mrb[0].mxu0
      %v1532 = vadd.f32 0.0, %v1531
      %1533 = vmatprep.mubr.bf16.mxu0 0
      %1534 = vmatmul.mubr.bf16.gmra.mrb[0].mxu0 %v1398
      %v1535 = vpop.f32.mrb[0].mxu0
      %v1536 = vadd.f32 0.0, %v1535
      %v1537 = vpop.f32.mrb[0].mxu0
      %v1538 = vadd.f32 0.0, %v1537
      %v1539 = vpop.f32.mrb[0].mxu0
      %v1540 = vadd.f32 0.0, %v1539
      %v1541 = vpop.f32.mrb[0].mxu0
      %v1542 = vadd.f32 0.0, %v1541
      %1543 = vmatprep.mubr.bf16.mxu0 0
      %1544 = vmatmul.mubr.bf16.gmra.mrb[0].mxu0 %v1401
      %v1545 = vpop.f32.mrb[0].mxu0
      %v1546 = vadd.f32 0.0, %v1545
      %v1547 = vpop.f32.mrb[0].mxu0
      %v1548 = vadd.f32 0.0, %v1547
      %v1549 = vpop.f32.mrb[0].mxu0
      %v1550 = vadd.f32 0.0, %v1549
      %v1551 = vpop.f32.mrb[0].mxu0
      %v1552 = vadd.f32 0.0, %v1551
      %1553 = vmatprep.mubr.bf16.mxu0 0
      %1554 = vmatmul.mubr.bf16.gmra.mrb[0].mxu0 %v1404
      %v1555 = vpop.f32.mrb[0].mxu0
      %v1556 = vadd.f32 0.0, %v1555
      %v1557 = vpop.f32.mrb[0].mxu0
      %v1558 = vadd.f32 0.0, %v1557
      %v1559 = vpop.f32.mrb[0].mxu0
      %v1560 = vadd.f32 0.0, %v1559
      %v1561 = vpop.f32.mrb[0].mxu0
      %v1562 = vadd.f32 0.0, %v1561
      %1563 = vmatprep.mubr.bf16.mxu0 0
      %1564 = vmatmul.mubr.bf16.gmra.mrb[0].mxu0 %v1407
      %v1565 = vpop.f32.mrb[0].mxu0
      %v1566 = vadd.f32 0.0, %v1565
      %v1567 = vpop.f32.mrb[0].mxu0
      %v1568 = vadd.f32 0.0, %v1567
      %v1569 = vpop.f32.mrb[0].mxu0
      %v1570 = vadd.f32 0.0, %v1569
      %v1571 = vpop.f32.mrb[0].mxu0
      %v1572 = vadd.f32 0.0, %v1571
      %1573 = vmatprep.mubr.bf16.mxu0 0
      %1574 = vmatmul.mubr.bf16.gmra.mrb[0].mxu0 %v1410
      %v1575 = vpop.f32.mrb[0].mxu0
      %v1576 = vadd.f32 0.0, %v1575
      %v1577 = vpop.f32.mrb[0].mxu0
      %v1578 = vadd.f32 0.0, %v1577
      %v1579 = vpop.f32.mrb[0].mxu0
      %v1580 = vadd.f32 0.0, %v1579
      %v1581 = vpop.f32.mrb[0].mxu0
      %v1582 = vadd.f32 0.0, %v1581
      %1583 = vmatprep.mubr.bf16.mxu0 0
      %1584 = vmatmul.mubr.bf16.gmra.mrb[0].mxu0 %v1413
      %v1585 = vpop.f32.mrb[0].mxu0
      %v1586 = vadd.f32 0.0, %v1585
      %v1587 = vpop.f32.mrb[0].mxu0
      %v1588 = vadd.f32 0.0, %v1587
      %v1589 = vpop.f32.mrb[0].mxu0
      %v1590 = vadd.f32 0.0, %v1589
      %v1591 = vpop.f32.mrb[0].mxu0
      %v1592 = vadd.f32 0.0, %v1591
      %1593 = vmatprep.mubr.bf16.mxu0 0
      %1594 = vmatmul.mubr.bf16.gmra.mrb[0].mxu0 %v1416
      %v1595 = vpop.f32.mrb[0].mxu0
      %v1596 = vadd.f32 0.0, %v1595
      %v1597 = vpop.f32.mrb[0].mxu0
      %v1598 = vadd.f32 0.0, %v1597
      %v1599 = vpop.f32.mrb[0].mxu0
      %v1600 = vadd.f32 0.0, %v1599
      %v1601 = vpop.f32.mrb[0].mxu0
      %v1602 = vadd.f32 0.0, %v1601
      %1603 = vmatprep.mubr.bf16.mxu0 0
      %1604 = vmatmul.mubr.bf16.gmra.mrb[0].mxu0 %v1419
      %v1605 = vpop.f32.mrb[0].mxu0
      %v1606 = vadd.f32 0.0, %v1605
      %v1607 = vpop.f32.mrb[0].mxu0
      %v1608 = vadd.f32 0.0, %v1607
      %v1609 = vpop.f32.mrb[0].mxu0
      %v1610 = vadd.f32 0.0, %v1609
      %v1611 = vpop.f32.mrb[0].mxu0
      %v1612 = vadd.f32 0.0, %v1611
      %1613 = vdwg.mxu0
      %1614 = vxpose.xlu0.c.b16.start [1/8] %v1320, 128
      %1615 = vxpose.xlu0.c.b16.cont [2/8] 0, 128
      %1616 = vxpose.xlu0.c.b16.cont [3/8] 0, 128
      %1617 = vxpose.xlu0.c.b16.cont [4/8] 0, 128
      %1618 = vxpose.xlu0.c.b16.cont [5/8] 0, 128
      %1619 = vxpose.xlu0.c.b16.cont [6/8] 0, 128
      %1620 = vxpose.xlu0.c.b16.cont [7/8] 0, 128
      %1621 = vxpose.xlu0.c.b16.end [8/8] 0, 128
      %v1622 = vpop.trf.xlu0
      %v1623 = vpop.trf.xlu0
      %v1624 = vpop.trf.xlu0
      %v1625 = vpop.trf.xlu0
      %v1626 = vpop.trf.xlu0
      %v1627 = vpop.trf.xlu0
      %v1628 = vpop.trf.xlu0
      %v1629 = vpop.trf.xlu0
      %1630 = vxpose.xlu0.c.b16.start [1/8] %v1321, 128
      %1631 = vxpose.xlu0.c.b16.cont [2/8] 0, 128
      %1632 = vxpose.xlu0.c.b16.cont [3/8] 0, 128
      %1633 = vxpose.xlu0.c.b16.cont [4/8] 0, 128
      %1634 = vxpose.xlu0.c.b16.cont [5/8] 0, 128
      %1635 = vxpose.xlu0.c.b16.cont [6/8] 0, 128
      %1636 = vxpose.xlu0.c.b16.cont [7/8] 0, 128
      %1637 = vxpose.xlu0.c.b16.end [8/8] 0, 128
      %v1638 = vpop.trf.xlu0
      %v1639 = vpop.trf.xlu0
      %v1640 = vpop.trf.xlu0
      %v1641 = vpop.trf.xlu0
      %v1642 = vpop.trf.xlu0
      %v1643 = vpop.trf.xlu0
      %v1644 = vpop.trf.xlu0
      %v1645 = vpop.trf.xlu0
      %v1647 = vsel %vm1372, %v1622, 0
      %v1650 = vsel %vm1372, %v1623, 0
      %v1653 = vsel %vm1372, %v1624, 0
      %v1656 = vsel %vm1372, %v1625, 0
      %v1659 = vsel %vm1372, %v1626, 0
      %v1662 = vsel %vm1372, %v1627, 0
      %v1665 = vsel %vm1372, %v1628, 0
      %v1668 = vsel %vm1372, %v1629, 0
      %v1671 = vsel %vm1372, %v1638, 0
      %v1674 = vsel %vm1372, %v1639, 0
      %v1677 = vsel %vm1372, %v1640, 0
      %v1680 = vsel %vm1372, %v1641, 0
      %v1683 = vsel %vm1372, %v1642, 0
      %v1686 = vsel %vm1372, %v1643, 0
      %v1689 = vsel %vm1372, %v1644, 0
      %v1692 = vsel %vm1372, %v1645, 0
      %1694 = vmatprep.subr.bf16.mxu0 %v1327
      %1695 = vmatpush1.bf16.msra.mxu0 %v1326
      %1696 = vmatprep.subr.bf16.mxu0 0
      %1697 = vmatpush1.bf16.msra.mxu0 0
      %1698 = vmatprep.subr.bf16.mxu0 0
      %1699 = vmatpush1.bf16.msra.mxu0 0
      %1700 = vmatprep.subr.bf16.mxu0 0
      %1701 = vmatpush1.bf16.msra.mxu0 0
      %1702 = vmatprep.subr.bf16.mxu0 0
      %1703 = vmatpush1.bf16.msra.mxu0 0
      %1704 = vmatprep.subr.bf16.mxu0 0
      %1705 = vmatpush1.bf16.msra.mxu0 0
      %1706 = vmatprep.subr.bf16.mxu0 0
      %1707 = vmatpush1.bf16.msra.mxu0 0
      %1708 = vmatprep.subr.bf16.mxu0 0
      %1709 = vmatpush1.bf16.msra.mxu0 0
      %1710 = vmatprep.subr.bf16.mxu0 0
      %1711 = vmatpush1.bf16.msra.mxu0 0
      %1712 = vmatprep.subr.bf16.mxu0 0
      %1713 = vmatpush1.bf16.msra.mxu0 0
      %1714 = vmatprep.subr.bf16.mxu0 0
      %1715 = vmatpush1.bf16.msra.mxu0 0
      %1716 = vmatprep.subr.bf16.mxu0 0
      %1717 = vmatpush1.bf16.msra.mxu0 0
      %1718 = vmatprep.subr.bf16.mxu0 0
      %1719 = vmatpush1.bf16.msra.mxu0 0
      %1720 = vmatprep.subr.bf16.mxu0 0
      %1721 = vmatpush1.bf16.msra.mxu0 0
      %1722 = vmatprep.subr.bf16.mxu0 0
      %1723 = vmatpush1.bf16.msra.mxu0 0
      %1724 = vmatprep.subr.bf16.mxu0 0
      %1725 = vmatpush1.bf16.msra.mxu0 0
      %1726 = vmatprep.mubr.bf16.mxu0 0
      %1727 = vmatmul.mubr.bf16.gmra.mrb[0].mxu0 %v1647
      %v1728 = vpop.f32.mrb[0].mxu0
      %v1729 = vadd.f32 %v1456, %v1728
      %v1730 = vpop.f32.mrb[0].mxu0
      %v1731 = vadd.f32 %v1458, %v1730
      %v1732 = vpop.f32.mrb[0].mxu0
      %v1733 = vadd.f32 %v1460, %v1732
      %v1734 = vpop.f32.mrb[0].mxu0
      %v1735 = vadd.f32 %v1462, %v1734
      %1736 = vmatprep.mubr.bf16.mxu0 0
      %1737 = vmatmul.mubr.bf16.gmra.mrb[0].mxu0 %v1650
      %v1738 = vpop.f32.mrb[0].mxu0
      %v1739 = vadd.f32 %v1466, %v1738
      %v1740 = vpop.f32.mrb[0].mxu0
      %v1741 = vadd.f32 %v1468, %v1740
      %v1742 = vpop.f32.mrb[0].mxu0
      %v1743 = vadd.f32 %v1470, %v1742
      %v1744 = vpop.f32.mrb[0].mxu0
      %v1745 = vadd.f32 %v1472, %v1744
      %1746 = vmatprep.mubr.bf16.mxu0 0
      %1747 = vmatmul.mubr.bf16.gmra.mrb[0].mxu0 %v1653
      %v1748 = vpop.f32.mrb[0].mxu0
      %v1749 = vadd.f32 %v1476, %v1748
      %v1750 = vpop.f32.mrb[0].mxu0
      %v1751 = vadd.f32 %v1478, %v1750
      %v1752 = vpop.f32.mrb[0].mxu0
      %v1753 = vadd.f32 %v1480, %v1752
      %v1754 = vpop.f32.mrb[0].mxu0
      %v1755 = vadd.f32 %v1482, %v1754
      %1756 = vmatprep.mubr.bf16.mxu0 0
      %1757 = vmatmul.mubr.bf16.gmra.mrb[0].mxu0 %v1656
      %v1758 = vpop.f32.mrb[0].mxu0
      %v1759 = vadd.f32 %v1486, %v1758
      %v1760 = vpop.f32.mrb[0].mxu0
      %v1761 = vadd.f32 %v1488, %v1760
      %v1762 = vpop.f32.mrb[0].mxu0
      %v1763 = vadd.f32 %v1490, %v1762
      %v1764 = vpop.f32.mrb[0].mxu0
      %v1765 = vadd.f32 %v1492, %v1764
      %1766 = vmatprep.mubr.bf16.mxu0 0
      %1767 = vmatmul.mubr.bf16.gmra.mrb[0].mxu0 %v1659
      %v1768 = vpop.f32.mrb[0].mxu0
      %v1769 = vadd.f32 %v1496, %v1768
      %v1770 = vpop.f32.mrb[0].mxu0
      %v1771 = vadd.f32 %v1498, %v1770
      %v1772 = vpop.f32.mrb[0].mxu0
      %v1773 = vadd.f32 %v1500, %v1772
      %v1774 = vpop.f32.mrb[0].mxu0
      %v1775 = vadd.f32 %v1502, %v1774
      %1776 = vmatprep.mubr.bf16.mxu0 0
      %1777 = vmatmul.mubr.bf16.gmra.mrb[0].mxu0 %v1662
      %v1778 = vpop.f32.mrb[0].mxu0
      %v1779 = vadd.f32 %v1506, %v1778
      %v1780 = vpop.f32.mrb[0].mxu0
      %v1781 = vadd.f32 %v1508, %v1780
      %v1782 = vpop.f32.mrb[0].mxu0
      %v1783 = vadd.f32 %v1510, %v1782
      %v1784 = vpop.f32.mrb[0].mxu0
      %v1785 = vadd.f32 %v1512, %v1784
      %1786 = vmatprep.mubr.bf16.mxu0 0
      %1787 = vmatmul.mubr.bf16.gmra.mrb[0].mxu0 %v1665
      %v1788 = vpop.f32.mrb[0].mxu0
      %v1789 = vadd.f32 %v1516, %v1788
      %v1790 = vpop.f32.mrb[0].mxu0
      %v1791 = vadd.f32 %v1518, %v1790
      %v1792 = vpop.f32.mrb[0].mxu0
      %v1793 = vadd.f32 %v1520, %v1792
      %v1794 = vpop.f32.mrb[0].mxu0
      %v1795 = vadd.f32 %v1522, %v1794
      %1796 = vmatprep.mubr.bf16.mxu0 0
      %1797 = vmatmul.mubr.bf16.gmra.mrb[0].mxu0 %v1668
      %v1798 = vpop.f32.mrb[0].mxu0
      %v1799 = vadd.f32 %v1526, %v1798
      %v1800 = vpop.f32.mrb[0].mxu0
      %v1801 = vadd.f32 %v1528, %v1800
      %v1802 = vpop.f32.mrb[0].mxu0
      %v1803 = vadd.f32 %v1530, %v1802
      %v1804 = vpop.f32.mrb[0].mxu0
      %v1805 = vadd.f32 %v1532, %v1804
      %1806 = vmatprep.mubr.bf16.mxu0 0
      %1807 = vmatmul.mubr.bf16.gmra.mrb[0].mxu0 %v1671
      %v1808 = vpop.f32.mrb[0].mxu0
      %v1809 = vadd.f32 %v1536, %v1808
      %v1810 = vpop.f32.mrb[0].mxu0
      %v1811 = vadd.f32 %v1538, %v1810
      %v1812 = vpop.f32.mrb[0].mxu0
      %v1813 = vadd.f32 %v1540, %v1812
      %v1814 = vpop.f32.mrb[0].mxu0
      %v1815 = vadd.f32 %v1542, %v1814
      %1816 = vmatprep.mubr.bf16.mxu0 0
      %1817 = vmatmul.mubr.bf16.gmra.mrb[0].mxu0 %v1674
      %v1818 = vpop.f32.mrb[0].mxu0
      %v1819 = vadd.f32 %v1546, %v1818
      %v1820 = vpop.f32.mrb[0].mxu0
      %v1821 = vadd.f32 %v1548, %v1820
      %v1822 = vpop.f32.mrb[0].mxu0
      %v1823 = vadd.f32 %v1550, %v1822
      %v1824 = vpop.f32.mrb[0].mxu0
      %v1825 = vadd.f32 %v1552, %v1824
      %1826 = vmatprep.mubr.bf16.mxu0 0
      %1827 = vmatmul.mubr.bf16.gmra.mrb[0].mxu0 %v1677
      %v1828 = vpop.f32.mrb[0].mxu0
      %v1829 = vadd.f32 %v1556, %v1828
      %v1830 = vpop.f32.mrb[0].mxu0
      %v1831 = vadd.f32 %v1558, %v1830
      %v1832 = vpop.f32.mrb[0].mxu0
      %v1833 = vadd.f32 %v1560, %v1832
      %v1834 = vpop.f32.mrb[0].mxu0
      %v1835 = vadd.f32 %v1562, %v1834
      %1836 = vmatprep.mubr.bf16.mxu0 0
      %1837 = vmatmul.mubr.bf16.gmra.mrb[0].mxu0 %v1680
      %v1838 = vpop.f32.mrb[0].mxu0
      %v1839 = vadd.f32 %v1566, %v1838
      %v1840 = vpop.f32.mrb[0].mxu0
      %v1841 = vadd.f32 %v1568, %v1840
      %v1842 = vpop.f32.mrb[0].mxu0
      %v1843 = vadd.f32 %v1570, %v1842
      %v1844 = vpop.f32.mrb[0].mxu0
      %v1845 = vadd.f32 %v1572, %v1844
      %1846 = vmatprep.mubr.bf16.mxu0 0
      %1847 = vmatmul.mubr.bf16.gmra.mrb[0].mxu0 %v1683
      %v1848 = vpop.f32.mrb[0].mxu0
      %v1849 = vadd.f32 %v1576, %v1848
      %v1850 = vpop.f32.mrb[0].mxu0
      %v1851 = vadd.f32 %v1578, %v1850
      %v1852 = vpop.f32.mrb[0].mxu0
      %v1853 = vadd.f32 %v1580, %v1852
      %v1854 = vpop.f32.mrb[0].mxu0
      %v1855 = vadd.f32 %v1582, %v1854
      %1856 = vmatprep.mubr.bf16.mxu0 0
      %1857 = vmatmul.mubr.bf16.gmra.mrb[0].mxu0 %v1686
      %v1858 = vpop.f32.mrb[0].mxu0
      %v1859 = vadd.f32 %v1586, %v1858
      %v1860 = vpop.f32.mrb[0].mxu0
      %v1861 = vadd.f32 %v1588, %v1860
      %v1862 = vpop.f32.mrb[0].mxu0
      %v1863 = vadd.f32 %v1590, %v1862
      %v1864 = vpop.f32.mrb[0].mxu0
      %v1865 = vadd.f32 %v1592, %v1864
      %1866 = vmatprep.mubr.bf16.mxu0 0
      %1867 = vmatmul.mubr.bf16.gmra.mrb[0].mxu0 %v1689
      %v1868 = vpop.f32.mrb[0].mxu0
      %v1869 = vadd.f32 %v1596, %v1868
      %v1870 = vpop.f32.mrb[0].mxu0
      %v1871 = vadd.f32 %v1598, %v1870
      %v1872 = vpop.f32.mrb[0].mxu0
      %v1873 = vadd.f32 %v1600, %v1872
      %v1874 = vpop.f32.mrb[0].mxu0
      %v1875 = vadd.f32 %v1602, %v1874
      %1876 = vmatprep.mubr.bf16.mxu0 0
      %1877 = vmatmul.mubr.bf16.gmra.mrb[0].mxu0 %v1692
      %v1878 = vpop.f32.mrb[0].mxu0
      %v1879 = vadd.f32 %v1606, %v1878
      %v1880 = vpop.f32.mrb[0].mxu0
      %v1881 = vadd.f32 %v1608, %v1880
      %v1882 = vpop.f32.mrb[0].mxu0
      %v1883 = vadd.f32 %v1610, %v1882
      %v1884 = vpop.f32.mrb[0].mxu0
      %v1885 = vadd.f32 %v1612, %v1884
      %1886 = vdwg.mxu0
      %v1887 = vmax.f32 %v1729, %v1731
      %1888 = vmax.xlane.f32.xlu0 %v1887
      %v1889 = vpop.xlane.xlu0 %1888
      %v1890 = vmax.f32 %v1733, %v1735
      %1891 = vmax.xlane.f32.xlu0 %v1890
      %v1892 = vpop.xlane.xlu0 %1891
      %v1893 = vmax.f32 %v1739, %v1741
      %1894 = vmax.xlane.f32.xlu0 %v1893
      %v1895 = vpop.xlane.xlu0 %1894
      %v1896 = vmax.f32 %v1743, %v1745
      %1897 = vmax.xlane.f32.xlu0 %v1896
      %v1898 = vpop.xlane.xlu0 %1897
      %v1899 = vmax.f32 %v1749, %v1751
      %1900 = vmax.xlane.f32.xlu0 %v1899
      %v1901 = vpop.xlane.xlu0 %1900
      %v1902 = vmax.f32 %v1753, %v1755
      %1903 = vmax.xlane.f32.xlu0 %v1902
      %v1904 = vpop.xlane.xlu0 %1903
      %v1905 = vmax.f32 %v1759, %v1761
      %1906 = vmax.xlane.f32.xlu0 %v1905
      %v1907 = vpop.xlane.xlu0 %1906
      %v1908 = vmax.f32 %v1763, %v1765
      %1909 = vmax.xlane.f32.xlu0 %v1908
      %v1910 = vpop.xlane.xlu0 %1909
      %v1911 = vmax.f32 %v1769, %v1771
      %1912 = vmax.xlane.f32.xlu0 %v1911
      %v1913 = vpop.xlane.xlu0 %1912
      %v1914 = vmax.f32 %v1773, %v1775
      %1915 = vmax.xlane.f32.xlu0 %v1914
      %v1916 = vpop.xlane.xlu0 %1915
      %v1917 = vmax.f32 %v1779, %v1781
      %1918 = vmax.xlane.f32.xlu0 %v1917
      %v1919 = vpop.xlane.xlu0 %1918
      %v1920 = vmax.f32 %v1783, %v1785
      %1921 = vmax.xlane.f32.xlu0 %v1920
      %v1922 = vpop.xlane.xlu0 %1921
      %v1923 = vmax.f32 %v1789, %v1791
      %1924 = vmax.xlane.f32.xlu0 %v1923
      %v1925 = vpop.xlane.xlu0 %1924
      %v1926 = vmax.f32 %v1793, %v1795
      %1927 = vmax.xlane.f32.xlu0 %v1926
      %v1928 = vpop.xlane.xlu0 %1927
      %v1929 = vmax.f32 %v1799, %v1801
      %1930 = vmax.xlane.f32.xlu0 %v1929
      %v1931 = vpop.xlane.xlu0 %1930
      %v1932 = vmax.f32 %v1803, %v1805
      %1933 = vmax.xlane.f32.xlu0 %v1932
      %v1934 = vpop.xlane.xlu0 %1933
      %v1935 = vmax.f32 %v1809, %v1811
      %1936 = vmax.xlane.f32.xlu0 %v1935
      %v1937 = vpop.xlane.xlu0 %1936
      %v1938 = vmax.f32 %v1813, %v1815
      %1939 = vmax.xlane.f32.xlu0 %v1938
      %v1940 = vpop.xlane.xlu0 %1939
      %v1941 = vmax.f32 %v1819, %v1821
      %1942 = vmax.xlane.f32.xlu0 %v1941
      %v1943 = vpop.xlane.xlu0 %1942
      %v1944 = vmax.f32 %v1823, %v1825
      %1945 = vmax.xlane.f32.xlu0 %v1944
      %v1946 = vpop.xlane.xlu0 %1945
      %v1947 = vmax.f32 %v1829, %v1831
      %1948 = vmax.xlane.f32.xlu0 %v1947
      %v1949 = vpop.xlane.xlu0 %1948
      %v1950 = vmax.f32 %v1833, %v1835
      %1951 = vmax.xlane.f32.xlu0 %v1950
      %v1952 = vpop.xlane.xlu0 %1951
      %v1953 = vmax.f32 %v1839, %v1841
      %1954 = vmax.xlane.f32.xlu0 %v1953
      %v1955 = vpop.xlane.xlu0 %1954
      %v1956 = vmax.f32 %v1843, %v1845
      %1957 = vmax.xlane.f32.xlu0 %v1956
      %v1958 = vpop.xlane.xlu0 %1957
      %v1959 = vmax.f32 %v1849, %v1851
      %1960 = vmax.xlane.f32.xlu0 %v1959
      %v1961 = vpop.xlane.xlu0 %1960
      %v1962 = vmax.f32 %v1853, %v1855
      %1963 = vmax.xlane.f32.xlu0 %v1962
      %v1964 = vpop.xlane.xlu0 %1963
      %v1965 = vmax.f32 %v1859, %v1861
      %1966 = vmax.xlane.f32.xlu0 %v1965
      %v1967 = vpop.xlane.xlu0 %1966
      %v1968 = vmax.f32 %v1863, %v1865
      %1969 = vmax.xlane.f32.xlu0 %v1968
      %v1970 = vpop.xlane.xlu0 %1969
      %v1971 = vmax.f32 %v1869, %v1871
      %1972 = vmax.xlane.f32.xlu0 %v1971
      %v1973 = vpop.xlane.xlu0 %1972
      %v1974 = vmax.f32 %v1873, %v1875
      %1975 = vmax.xlane.f32.xlu0 %v1974
      %v1976 = vpop.xlane.xlu0 %1975
      %v1977 = vmax.f32 %v1879, %v1881
      %1978 = vmax.xlane.f32.xlu0 %v1977
      %v1979 = vpop.xlane.xlu0 %1978
      %v1980 = vmax.f32 %v1883, %v1885
      %1981 = vmax.xlane.f32.xlu0 %v1980
      %v1982 = vpop.xlane.xlu0 %1981
      %v1983 = vsub.f32 %v1729, %v1889
      %v1984 = vsub.f32 %v1731, %v1889
      %v1985 = vsub.f32 %v1733, %v1892
      %v1986 = vsub.f32 %v1735, %v1892
      %v1987 = vsub.f32 %v1739, %v1895
      %v1988 = vsub.f32 %v1741, %v1895
      %v1989 = vsub.f32 %v1743, %v1898
      %v1990 = vsub.f32 %v1745, %v1898
      %v1991 = vsub.f32 %v1749, %v1901
      %v1992 = vsub.f32 %v1751, %v1901
      %v1993 = vsub.f32 %v1753, %v1904
      %v1994 = vsub.f32 %v1755, %v1904
      %v1995 = vsub.f32 %v1759, %v1907
      %v1996 = vsub.f32 %v1761, %v1907
      %v1997 = vsub.f32 %v1763, %v1910
      %v1998 = vsub.f32 %v1765, %v1910
      %v1999 = vsub.f32 %v1769, %v1913
      %v2000 = vsub.f32 %v1771, %v1913
      %v2001 = vsub.f32 %v1773, %v1916
      %v2002 = vsub.f32 %v1775, %v1916
      %v2003 = vsub.f32 %v1779, %v1919
      %v2004 = vsub.f32 %v1781, %v1919
      %v2005 = vsub.f32 %v1783, %v1922
      %v2006 = vsub.f32 %v1785, %v1922
      %v2007 = vsub.f32 %v1789, %v1925
      %v2008 = vsub.f32 %v1791, %v1925
      %v2009 = vsub.f32 %v1793, %v1928
      %v2010 = vsub.f32 %v1795, %v1928
      %v2011 = vsub.f32 %v1799, %v1931
      %v2012 = vsub.f32 %v1801, %v1931
      %v2013 = vsub.f32 %v1803, %v1934
      %v2014 = vsub.f32 %v1805, %v1934
      %v2015 = vsub.f32 %v1809, %v1937
      %v2016 = vsub.f32 %v1811, %v1937
      %v2017 = vsub.f32 %v1813, %v1940
      %v2018 = vsub.f32 %v1815, %v1940
      %v2019 = vsub.f32 %v1819, %v1943
      %v2020 = vsub.f32 %v1821, %v1943
      %v2021 = vsub.f32 %v1823, %v1946
      %v2022 = vsub.f32 %v1825, %v1946
      %v2023 = vsub.f32 %v1829, %v1949
      %v2024 = vsub.f32 %v1831, %v1949
      %v2025 = vsub.f32 %v1833, %v1952
      %v2026 = vsub.f32 %v1835, %v1952
      %v2027 = vsub.f32 %v1839, %v1955
      %v2028 = vsub.f32 %v1841, %v1955
      %v2029 = vsub.f32 %v1843, %v1958
      %v2030 = vsub.f32 %v1845, %v1958
      %v2031 = vsub.f32 %v1849, %v1961
      %v2032 = vsub.f32 %v1851, %v1961
      %v2033 = vsub.f32 %v1853, %v1964
      %v2034 = vsub.f32 %v1855, %v1964
      %v2035 = vsub.f32 %v1859, %v1967
      %v2036 = vsub.f32 %v1861, %v1967
      %v2037 = vsub.f32 %v1863, %v1970
      %v2038 = vsub.f32 %v1865, %v1970
      %v2039 = vsub.f32 %v1869, %v1973
      %v2040 = vsub.f32 %v1871, %v1973
      %v2041 = vsub.f32 %v1873, %v1976
      %v2042 = vsub.f32 %v1875, %v1976
      %v2043 = vsub.f32 %v1879, %v1979
      %v2044 = vsub.f32 %v1881, %v1979
      %v2045 = vsub.f32 %v1883, %v1982
      %v2046 = vsub.f32 %v1885, %v1982
      %v2047 = vmul.f32 %v1983, 1.442695
      %v2048 = vpow.pop %v2047
      %v2049 = vmul.f32 %v1984, 1.442695
      %v2050 = vpow.pop %v2049
      %v2051 = vmul.f32 %v1985, 1.442695
      %v2052 = vpow.pop %v2051
      %v2053 = vmul.f32 %v1986, 1.442695
      %v2054 = vpow.pop %v2053
      %v2055 = vmul.f32 %v1987, 1.442695
      %v2056 = vpow.pop %v2055
      %v2057 = vmul.f32 %v1988, 1.442695
      %v2058 = vpow.pop %v2057
      %v2059 = vmul.f32 %v1989, 1.442695
      %v2060 = vpow.pop %v2059
      %v2061 = vmul.f32 %v1990, 1.442695
      %v2062 = vpow.pop %v2061
      %v2063 = vmul.f32 %v1991, 1.442695
      %v2064 = vpow.pop %v2063
      %v2065 = vmul.f32 %v1992, 1.442695
      %v2066 = vpow.pop %v2065
      %v2067 = vmul.f32 %v1993, 1.442695
      %v2068 = vpow.pop %v2067
      %v2069 = vmul.f32 %v1994, 1.442695
      %v2070 = vpow.pop %v2069
      %v2071 = vmul.f32 %v1995, 1.442695
      %v2072 = vpow.pop %v2071
      %v2073 = vmul.f32 %v1996, 1.442695
      %v2074 = vpow.pop %v2073
      %v2075 = vmul.f32 %v1997, 1.442695
      %v2076 = vpow.pop %v2075
      %v2077 = vmul.f32 %v1998, 1.442695
      %v2078 = vpow.pop %v2077
      %v2079 = vmul.f32 %v1999, 1.442695
      %v2080 = vpow.pop %v2079
      %v2081 = vmul.f32 %v2000, 1.442695
      %v2082 = vpow.pop %v2081
      %v2083 = vmul.f32 %v2001, 1.442695
      %v2084 = vpow.pop %v2083
      %v2085 = vmul.f32 %v2002, 1.442695
      %v2086 = vpow.pop %v2085
      %v2087 = vmul.f32 %v2003, 1.442695
      %v2088 = vpow.pop %v2087
      %v2089 = vmul.f32 %v2004, 1.442695
      %v2090 = vpow.pop %v2089
      %v2091 = vmul.f32 %v2005, 1.442695
      %v2092 = vpow.pop %v2091
      %v2093 = vmul.f32 %v2006, 1.442695
      %v2094 = vpow.pop %v2093
      %v2095 = vmul.f32 %v2007, 1.442695
      %v2096 = vpow.pop %v2095
      %v2097 = vmul.f32 %v2008, 1.442695
      %v2098 = vpow.pop %v2097
      %v2099 = vmul.f32 %v2009, 1.442695
      %v2100 = vpow.pop %v2099
      %v2101 = vmul.f32 %v2010, 1.442695
      %v2102 = vpow.pop %v2101
      %v2103 = vmul.f32 %v2011, 1.442695
      %v2104 = vpow.pop %v2103
      %v2105 = vmul.f32 %v2012, 1.442695
      %v2106 = vpow.pop %v2105
      %v2107 = vmul.f32 %v2013, 1.442695
      %v2108 = vpow.pop %v2107
      %v2109 = vmul.f32 %v2014, 1.442695
      %v2110 = vpow.pop %v2109
      %v2111 = vmul.f32 %v2015, 1.442695
      %v2112 = vpow.pop %v2111
      %v2113 = vmul.f32 %v2016, 1.442695
      %v2114 = vpow.pop %v2113
      %v2115 = vmul.f32 %v2017, 1.442695
      %v2116 = vpow.pop %v2115
      %v2117 = vmul.f32 %v2018, 1.442695
      %v2118 = vpow.pop %v2117
      %v2119 = vmul.f32 %v2019, 1.442695
      %v2120 = vpow.pop %v2119
      %v2121 = vmul.f32 %v2020, 1.442695
      %v2122 = vpow.pop %v2121
      %v2123 = vmul.f32 %v2021, 1.442695
      %v2124 = vpow.pop %v2123
      %v2125 = vmul.f32 %v2022, 1.442695
      %v2126 = vpow.pop %v2125
      %v2127 = vmul.f32 %v2023, 1.442695
      %v2128 = vpow.pop %v2127
      %v2129 = vmul.f32 %v2024, 1.442695
      %v2130 = vpow.pop %v2129
      %v2131 = vmul.f32 %v2025, 1.442695
      %v2132 = vpow.pop %v2131
      %v2133 = vmul.f32 %v2026, 1.442695
      %v2134 = vpow.pop %v2133
      %v2135 = vmul.f32 %v2027, 1.442695
      %v2136 = vpow.pop %v2135
      %v2137 = vmul.f32 %v2028, 1.442695
      %v2138 = vpow.pop %v2137
      %v2139 = vmul.f32 %v2029, 1.442695
      %v2140 = vpow.pop %v2139
      %v2141 = vmul.f32 %v2030, 1.442695
      %v2142 = vpow.pop %v2141
      %v2143 = vmul.f32 %v2031, 1.442695
      %v2144 = vpow.pop %v2143
      %v2145 = vmul.f32 %v2032, 1.442695
      %v2146 = vpow.pop %v2145
      %v2147 = vmul.f32 %v2033, 1.442695
      %v2148 = vpow.pop %v2147
      %v2149 = vmul.f32 %v2034, 1.442695
      %v2150 = vpow.pop %v2149
      %v2151 = vmul.f32 %v2035, 1.442695
      %v2152 = vpow.pop %v2151
      %v2153 = vmul.f32 %v2036, 1.442695
      %v2154 = vpow.pop %v2153
      %v2155 = vmul.f32 %v2037, 1.442695
      %v2156 = vpow.pop %v2155
      %v2157 = vmul.f32 %v2038, 1.442695
      %v2158 = vpow.pop %v2157
      %v2159 = vmul.f32 %v2039, 1.442695
      %v2160 = vpow.pop %v2159
      %v2161 = vmul.f32 %v2040, 1.442695
      %v2162 = vpow.pop %v2161
      %v2163 = vmul.f32 %v2041, 1.442695
      %v2164 = vpow.pop %v2163
      %v2165 = vmul.f32 %v2042, 1.442695
      %v2166 = vpow.pop %v2165
      %v2167 = vmul.f32 %v2043, 1.442695
      %v2168 = vpow.pop %v2167
      %v2169 = vmul.f32 %v2044, 1.442695
      %v2170 = vpow.pop %v2169
      %v2171 = vmul.f32 %v2045, 1.442695
      %v2172 = vpow.pop %v2171
      %v2173 = vmul.f32 %v2046, 1.442695
      %v2174 = vpow.pop %v2173
      %v2175 = vadd.f32 %v2048, %v2050
      %2176 = vadd.xlane.f32.xlu0 %v2175
      %v2177 = vpop.xlane.xlu0 %2176
      %v2178 = vadd.f32 %v2052, %v2054
      %2179 = vadd.xlane.f32.xlu0 %v2178
      %v2180 = vpop.xlane.xlu0 %2179
      %v2181 = vadd.f32 %v2056, %v2058
      %2182 = vadd.xlane.f32.xlu0 %v2181
      %v2183 = vpop.xlane.xlu0 %2182
      %v2184 = vadd.f32 %v2060, %v2062
      %2185 = vadd.xlane.f32.xlu0 %v2184
      %v2186 = vpop.xlane.xlu0 %2185
      %v2187 = vadd.f32 %v2064, %v2066
      %2188 = vadd.xlane.f32.xlu0 %v2187
      %v2189 = vpop.xlane.xlu0 %2188
      %v2190 = vadd.f32 %v2068, %v2070
      %2191 = vadd.xlane.f32.xlu0 %v2190
      %v2192 = vpop.xlane.xlu0 %2191
      %v2193 = vadd.f32 %v2072, %v2074
      %2194 = vadd.xlane.f32.xlu0 %v2193
      %v2195 = vpop.xlane.xlu0 %2194
      %v2196 = vadd.f32 %v2076, %v2078
      %2197 = vadd.xlane.f32.xlu0 %v2196
      %v2198 = vpop.xlane.xlu0 %2197
      %v2199 = vadd.f32 %v2080, %v2082
      %2200 = vadd.xlane.f32.xlu0 %v2199
      %v2201 = vpop.xlane.xlu0 %2200
      %v2202 = vadd.f32 %v2084, %v2086
      %2203 = vadd.xlane.f32.xlu0 %v2202
      %v2204 = vpop.xlane.xlu0 %2203
      %v2205 = vadd.f32 %v2088, %v2090
      %2206 = vadd.xlane.f32.xlu0 %v2205
      %v2207 = vpop.xlane.xlu0 %2206
      %v2208 = vadd.f32 %v2092, %v2094
      %2209 = vadd.xlane.f32.xlu0 %v2208
      %v2210 = vpop.xlane.xlu0 %2209
      %v2211 = vadd.f32 %v2096, %v2098
      %2212 = vadd.xlane.f32.xlu0 %v2211
      %v2213 = vpop.xlane.xlu0 %2212
      %v2214 = vadd.f32 %v2100, %v2102
      %2215 = vadd.xlane.f32.xlu0 %v2214
      %v2216 = vpop.xlane.xlu0 %2215
      %v2217 = vadd.f32 %v2104, %v2106
      %2218 = vadd.xlane.f32.xlu0 %v2217
      %v2219 = vpop.xlane.xlu0 %2218
      %v2220 = vadd.f32 %v2108, %v2110
      %2221 = vadd.xlane.f32.xlu0 %v2220
      %v2222 = vpop.xlane.xlu0 %2221
      %v2223 = vadd.f32 %v2112, %v2114
      %2224 = vadd.xlane.f32.xlu0 %v2223
      %v2225 = vpop.xlane.xlu0 %2224
      %v2226 = vadd.f32 %v2116, %v2118
      %2227 = vadd.xlane.f32.xlu0 %v2226
      %v2228 = vpop.xlane.xlu0 %2227
      %v2229 = vadd.f32 %v2120, %v2122
      %2230 = vadd.xlane.f32.xlu0 %v2229
      %v2231 = vpop.xlane.xlu0 %2230
      %v2232 = vadd.f32 %v2124, %v2126
      %2233 = vadd.xlane.f32.xlu0 %v2232
      %v2234 = vpop.xlane.xlu0 %2233
      %v2235 = vadd.f32 %v2128, %v2130
      %2236 = vadd.xlane.f32.xlu0 %v2235
      %v2237 = vpop.xlane.xlu0 %2236
      %v2238 = vadd.f32 %v2132, %v2134
      %2239 = vadd.xlane.f32.xlu0 %v2238
      %v2240 = vpop.xlane.xlu0 %2239
      %v2241 = vadd.f32 %v2136, %v2138
      %2242 = vadd.xlane.f32.xlu0 %v2241
      %v2243 = vpop.xlane.xlu0 %2242
      %v2244 = vadd.f32 %v2140, %v2142
      %2245 = vadd.xlane.f32.xlu0 %v2244
      %v2246 = vpop.xlane.xlu0 %2245
      %v2247 = vadd.f32 %v2144, %v2146
      %2248 = vadd.xlane.f32.xlu0 %v2247
      %v2249 = vpop.xlane.xlu0 %2248
      %v2250 = vadd.f32 %v2148, %v2150
      %2251 = vadd.xlane.f32.xlu0 %v2250
      %v2252 = vpop.xlane.xlu0 %2251
      %v2253 = vadd.f32 %v2152, %v2154
      %2254 = vadd.xlane.f32.xlu0 %v2253
      %v2255 = vpop.xlane.xlu0 %2254
      %v2256 = vadd.f32 %v2156, %v2158
      %2257 = vadd.xlane.f32.xlu0 %v2256
      %v2258 = vpop.xlane.xlu0 %2257
      %v2259 = vadd.f32 %v2160, %v2162
      %2260 = vadd.xlane.f32.xlu0 %v2259
      %v2261 = vpop.xlane.xlu0 %2260
      %v2262 = vadd.f32 %v2164, %v2166
      %2263 = vadd.xlane.f32.xlu0 %v2262
      %v2264 = vpop.xlane.xlu0 %2263
      %v2265 = vadd.f32 %v2168, %v2170
      %2266 = vadd.xlane.f32.xlu0 %v2265
      %v2267 = vpop.xlane.xlu0 %2266
      %v2268 = vadd.f32 %v2172, %v2174
      %2269 = vadd.xlane.f32.xlu0 %v2268
      %v2270 = vpop.xlane.xlu0 %2269
      %v2271 = vrcp.pop %v2177
      %v2272 = vrcp.pop %v2180
      %v2273 = vrcp.pop %v2183
      %v2274 = vrcp.pop %v2186
      %v2275 = vrcp.pop %v2189
      %v2276 = vrcp.pop %v2192
      %v2277 = vrcp.pop %v2195
      %v2278 = vrcp.pop %v2198
      %v2279 = vrcp.pop %v2201
      %v2280 = vrcp.pop %v2204
      %v2281 = vrcp.pop %v2207
      %v2282 = vrcp.pop %v2210
      %v2283 = vrcp.pop %v2213
      %v2284 = vrcp.pop %v2216
      %v2285 = vrcp.pop %v2219
      %v2286 = vrcp.pop %v2222
      %v2287 = vrcp.pop %v2225
      %v2288 = vrcp.pop %v2228
      %v2289 = vrcp.pop %v2231
      %v2290 = vrcp.pop %v2234
      %v2291 = vrcp.pop %v2237
      %v2292 = vrcp.pop %v2240
      %v2293 = vrcp.pop %v2243
      %v2294 = vrcp.pop %v2246
      %v2295 = vrcp.pop %v2249
      %v2296 = vrcp.pop %v2252
      %v2297 = vrcp.pop %v2255
      %v2298 = vrcp.pop %v2258
      %v2299 = vrcp.pop %v2261
      %v2300 = vrcp.pop %v2264
      %v2301 = vrcp.pop %v2267
      %v2302 = vrcp.pop %v2270
      %v2303 = vmul.f32 %v2048, %v2271
      %v2304 = vmul.f32 %v2050, %v2271
      %v2305 = vmul.f32 %v2052, %v2272
      %v2306 = vmul.f32 %v2054, %v2272
      %v2307 = vmul.f32 %v2056, %v2273
      %v2308 = vmul.f32 %v2058, %v2273
      %v2309 = vmul.f32 %v2060, %v2274
      %v2310 = vmul.f32 %v2062, %v2274
      %v2311 = vmul.f32 %v2064, %v2275
      %v2312 = vmul.f32 %v2066, %v2275
      %v2313 = vmul.f32 %v2068, %v2276
      %v2314 = vmul.f32 %v2070, %v2276
      %v2315 = vmul.f32 %v2072, %v2277
      %v2316 = vmul.f32 %v2074, %v2277
      %v2317 = vmul.f32 %v2076, %v2278
      %v2318 = vmul.f32 %v2078, %v2278
      %v2319 = vmul.f32 %v2080, %v2279
      %v2320 = vmul.f32 %v2082, %v2279
      %v2321 = vmul.f32 %v2084, %v2280
      %v2322 = vmul.f32 %v2086, %v2280
      %v2323 = vmul.f32 %v2088, %v2281
      %v2324 = vmul.f32 %v2090, %v2281
      %v2325 = vmul.f32 %v2092, %v2282
      %v2326 = vmul.f32 %v2094, %v2282
      %v2327 = vmul.f32 %v2096, %v2283
      %v2328 = vmul.f32 %v2098, %v2283
      %v2329 = vmul.f32 %v2100, %v2284
      %v2330 = vmul.f32 %v2102, %v2284
      %v2331 = vmul.f32 %v2104, %v2285
      %v2332 = vmul.f32 %v2106, %v2285
      %v2333 = vmul.f32 %v2108, %v2286
      %v2334 = vmul.f32 %v2110, %v2286
      %v2335 = vmul.f32 %v2112, %v2287
      %v2336 = vmul.f32 %v2114, %v2287
      %v2337 = vmul.f32 %v2116, %v2288
      %v2338 = vmul.f32 %v2118, %v2288
      %v2339 = vmul.f32 %v2120, %v2289
      %v2340 = vmul.f32 %v2122, %v2289
      %v2341 = vmul.f32 %v2124, %v2290
      %v2342 = vmul.f32 %v2126, %v2290
      %v2343 = vmul.f32 %v2128, %v2291
      %v2344 = vmul.f32 %v2130, %v2291
      %v2345 = vmul.f32 %v2132, %v2292
      %v2346 = vmul.f32 %v2134, %v2292
      %v2347 = vmul.f32 %v2136, %v2293
      %v2348 = vmul.f32 %v2138, %v2293
      %v2349 = vmul.f32 %v2140, %v2294
      %v2350 = vmul.f32 %v2142, %v2294
      %v2351 = vmul.f32 %v2144, %v2295
      %v2352 = vmul.f32 %v2146, %v2295
      %v2353 = vmul.f32 %v2148, %v2296
      %v2354 = vmul.f32 %v2150, %v2296
      %v2355 = vmul.f32 %v2152, %v2297
      %v2356 = vmul.f32 %v2154, %v2297
      %v2357 = vmul.f32 %v2156, %v2298
      %v2358 = vmul.f32 %v2158, %v2298
      %v2359 = vmul.f32 %v2160, %v2299
      %v2360 = vmul.f32 %v2162, %v2299
      %v2361 = vmul.f32 %v2164, %v2300
      %v2362 = vmul.f32 %v2166, %v2300
      %v2363 = vmul.f32 %v2168, %v2301
      %v2364 = vmul.f32 %v2170, %v2301
      %v2365 = vmul.f32 %v2172, %v2302
      %v2366 = vmul.f32 %v2174, %v2302
      %v2367 = vpack.c.bf16 %v2305, %v2303
      %v2368 = vpack.c.bf16 %v2306, %v2304
      %v2369 = vpack.c.bf16 %v2309, %v2307
      %v2370 = vpack.c.bf16 %v2310, %v2308
      %v2371 = vpack.c.bf16 %v2313, %v2311
      %v2372 = vpack.c.bf16 %v2314, %v2312
      %v2373 = vpack.c.bf16 %v2317, %v2315
      %v2374 = vpack.c.bf16 %v2318, %v2316
      %v2375 = vpack.c.bf16 %v2321, %v2319
      %v2376 = vpack.c.bf16 %v2322, %v2320
      %v2377 = vpack.c.bf16 %v2325, %v2323
      %v2378 = vpack.c.bf16 %v2326, %v2324
      %v2379 = vpack.c.bf16 %v2329, %v2327
      %v2380 = vpack.c.bf16 %v2330, %v2328
      %v2381 = vpack.c.bf16 %v2333, %v2331
      %v2382 = vpack.c.bf16 %v2334, %v2332
      %v2383 = vpack.c.bf16 %v2337, %v2335
      %v2384 = vpack.c.bf16 %v2338, %v2336
      %v2385 = vpack.c.bf16 %v2341, %v2339
      %v2386 = vpack.c.bf16 %v2342, %v2340
      %v2387 = vpack.c.bf16 %v2345, %v2343
      %v2388 = vpack.c.bf16 %v2346, %v2344
      %v2389 = vpack.c.bf16 %v2349, %v2347
      %v2390 = vpack.c.bf16 %v2350, %v2348
      %v2391 = vpack.c.bf16 %v2353, %v2351
      %v2392 = vpack.c.bf16 %v2354, %v2352
      %v2393 = vpack.c.bf16 %v2357, %v2355
      %v2394 = vpack.c.bf16 %v2358, %v2356
      %v2395 = vpack.c.bf16 %v2361, %v2359
      %v2396 = vpack.c.bf16 %v2362, %v2360
      %v2397 = vpack.c.bf16 %v2365, %v2363
      %v2398 = vpack.c.bf16 %v2366, %v2364
      %v2399 = vld [vmem:[#allocation2 + $0x100] sm:$0xff]
      %v2400 = vld [vmem:[#allocation2 + $0x108] sm:$0xff]
      %v2401 = vld [vmem:[#allocation2 + $0x120] sm:$0xff]
      %v2402 = vld [vmem:[#allocation2 + $0x128] sm:$0xff]
      %v2403 = vpack.c.bf16 %v2401, %v2399
      %v2404 = vpack.c.bf16 %v2402, %v2400
      %2405 = vmatprep.subr.bf16.mxu0 %v2368
      %2406 = vmatpush1.bf16.xpose.msra.mxu0 %v2367
      %2407 = vmatprep.subr.bf16.mxu0 %v2370
      %2408 = vmatpush1.bf16.xpose.msra.mxu0 %v2369
      %2409 = vmatprep.subr.bf16.mxu0 %v2372
      %2410 = vmatpush1.bf16.xpose.msra.mxu0 %v2371
      %2411 = vmatprep.subr.bf16.mxu0 %v2374
      %2412 = vmatpush1.bf16.xpose.msra.mxu0 %v2373
      %2413 = vmatprep.subr.bf16.mxu0 %v2376
      %2414 = vmatpush1.bf16.xpose.msra.mxu0 %v2375
      %2415 = vmatprep.subr.bf16.mxu0 %v2378
      %2416 = vmatpush1.bf16.xpose.msra.mxu0 %v2377
      %2417 = vmatprep.subr.bf16.mxu0 %v2380
      %2418 = vmatpush1.bf16.xpose.msra.mxu0 %v2379
      %2419 = vmatprep.subr.bf16.mxu0 %v2382
      %2420 = vmatpush1.bf16.xpose.msra.mxu0 %v2381
      %2421 = vmatprep.subr.bf16.mxu0 %v2384
      %2422 = vmatpush1.bf16.xpose.msra.mxu0 %v2383
      %2423 = vmatprep.subr.bf16.mxu0 %v2386
      %2424 = vmatpush1.bf16.xpose.msra.mxu0 %v2385
      %2425 = vmatprep.subr.bf16.mxu0 %v2388
      %2426 = vmatpush1.bf16.xpose.msra.mxu0 %v2387
      %2427 = vmatprep.subr.bf16.mxu0 %v2390
      %2428 = vmatpush1.bf16.xpose.msra.mxu0 %v2389
      %2429 = vmatprep.subr.bf16.mxu0 %v2392
      %2430 = vmatpush1.bf16.xpose.msra.mxu0 %v2391
      %2431 = vmatprep.subr.bf16.mxu0 %v2394
      %2432 = vmatpush1.bf16.xpose.msra.mxu0 %v2393
      %2433 = vmatprep.subr.bf16.mxu0 %v2396
      %2434 = vmatpush1.bf16.xpose.msra.mxu0 %v2395
      %2435 = vmatprep.subr.bf16.mxu0 %v2398
      %2436 = vmatpush1.bf16.xpose.msra.mxu0 %v2397
      %2437 = vmatprep.mubr.bf16.mxu0 %v2404
      %2438 = vmatmul.mubr.bf16.gmra.mrb[0].mxu0 %v2403
      %v2439 = vpop.f32.mrb[0].mxu0
      %v2440 = vadd.f32 0.0, %v2439
      %v2441 = vpop.f32.mrb[0].mxu0
      %v2442 = vadd.f32 0.0, %v2441
      %v2443 = vpop.f32.mrb[0].mxu0
      %v2444 = vadd.f32 0.0, %v2443
      %v2445 = vpop.f32.mrb[0].mxu0
      %v2446 = vadd.f32 0.0, %v2445
      %2447 = vdwg.mxu0
      %2448 = vst [vmem:[#allocation3] sm:$0xff] %v2440
      %2449 = vst [vmem:[#allocation3 + $0x8] sm:$0xff] %v2442
      %2450 = vst [vmem:[#allocation3 + $0x20] sm:$0xff] %v2444
      %2451 = vst [vmem:[#allocation3 + $0x28] sm:$0xff] %v2446
      %v2452 = vld [vmem:[#allocation2 + $0x110] sm:$0xff]
      %v2453 = vld [vmem:[#allocation2 + $0x118] sm:$0xff]
      %v2454 = vld [vmem:[#allocation2 + $0x130] sm:$0xff]
      %v2455 = vld [vmem:[#allocation2 + $0x138] sm:$0xff]
      %v2456 = vpack.c.bf16 %v2454, %v2452
      %v2457 = vpack.c.bf16 %v2455, %v2453
      %2458 = vmatprep.subr.bf16.mxu0 %v2368
      %2459 = vmatpush1.bf16.xpose.msra.mxu0 %v2367
      %2460 = vmatprep.subr.bf16.mxu0 %v2370
      %2461 = vmatpush1.bf16.xpose.msra.mxu0 %v2369
      %2462 = vmatprep.subr.bf16.mxu0 %v2372
      %2463 = vmatpush1.bf16.xpose.msra.mxu0 %v2371
      %2464 = vmatprep.subr.bf16.mxu0 %v2374
      %2465 = vmatpush1.bf16.xpose.msra.mxu0 %v2373
      %2466 = vmatprep.subr.bf16.mxu0 %v2376
      %2467 = vmatpush1.bf16.xpose.msra.mxu0 %v2375
      %2468 = vmatprep.subr.bf16.mxu0 %v2378
      %2469 = vmatpush1.bf16.xpose.msra.mxu0 %v2377
      %2470 = vmatprep.subr.bf16.mxu0 %v2380
      %2471 = vmatpush1.bf16.xpose.msra.mxu0 %v2379
      %2472 = vmatprep.subr.bf16.mxu0 %v2382
      %2473 = vmatpush1.bf16.xpose.msra.mxu0 %v2381
      %2474 = vmatprep.subr.bf16.mxu0 %v2384
      %2475 = vmatpush1.bf16.xpose.msra.mxu0 %v2383
      %2476 = vmatprep.subr.bf16.mxu0 %v2386
      %2477 = vmatpush1.bf16.xpose.msra.mxu0 %v2385
      %2478 = vmatprep.subr.bf16.mxu0 %v2388
      %2479 = vmatpush1.bf16.xpose.msra.mxu0 %v2387
      %2480 = vmatprep.subr.bf16.mxu0 %v2390
      %2481 = vmatpush1.bf16.xpose.msra.mxu0 %v2389
      %2482 = vmatprep.subr.bf16.mxu0 %v2392
      %2483 = vmatpush1.bf16.xpose.msra.mxu0 %v2391
      %2484 = vmatprep.subr.bf16.mxu0 %v2394
      %2485 = vmatpush1.bf16.xpose.msra.mxu0 %v2393
      %2486 = vmatprep.subr.bf16.mxu0 %v2396
      %2487 = vmatpush1.bf16.xpose.msra.mxu0 %v2395
      %2488 = vmatprep.subr.bf16.mxu0 %v2398
      %2489 = vmatpush1.bf16.xpose.msra.mxu0 %v2397
      %2490 = vmatprep.mubr.bf16.mxu0 %v2457
      %2491 = vmatmul.mubr.bf16.gmra.mrb[0].mxu0 %v2456
      %v2492 = vpop.f32.mrb[0].mxu0
      %v2493 = vadd.f32 0.0, %v2492
      %v2494 = vpop.f32.mrb[0].mxu0
      %v2495 = vadd.f32 0.0, %v2494
      %v2496 = vpop.f32.mrb[0].mxu0
      %v2497 = vadd.f32 0.0, %v2496
      %v2498 = vpop.f32.mrb[0].mxu0
      %v2499 = vadd.f32 0.0, %v2498
      %2500 = vdwg.mxu0
      %2501 = vst [vmem:[#allocation3 + $0x10] sm:$0xff] %v2493
      %2502 = vst [vmem:[#allocation3 + $0x18] sm:$0xff] %v2495
      %2503 = vst [vmem:[#allocation3 + $0x30] sm:$0xff] %v2497
      %2504 = vst [vmem:[#allocation3 + $0x38] sm:$0xff] %v2499
      %v2505 = vld [vmem:[#allocation2 + $0x40] sm:$0xff]
      %v2506 = vld [vmem:[#allocation2 + $0x48] sm:$0xff]
      %v2507 = vld [vmem:[#allocation2 + $0x60] sm:$0xff]
      %v2508 = vld [vmem:[#allocation2 + $0x68] sm:$0xff]
      %v2509 = vpack.c.bf16 %v2507, %v2505
      %v2510 = vpack.c.bf16 %v2508, %v2506
      %v2511 = vld [vmem:[#allocation2 + $0xc0] sm:$0xff]
      %v2512 = vld [vmem:[#allocation2 + $0xc8] sm:$0xff]
      %v2513 = vld [vmem:[#allocation2 + $0xe0] sm:$0xff]
      %v2514 = vld [vmem:[#allocation2 + $0xe8] sm:$0xff]
      %v2515 = vpack.c.bf16 %v2513, %v2511
      %v2516 = vpack.c.bf16 %v2514, %v2512
      %v2517 = vld [vmem:[#allocation2 + $0x50] sm:$0xff]
      %v2518 = vld [vmem:[#allocation2 + $0x58] sm:$0xff]
      %v2519 = vld [vmem:[#allocation2 + $0x70] sm:$0xff]
      %v2520 = vld [vmem:[#allocation2 + $0x78] sm:$0xff]
      %v2521 = vpack.c.bf16 %v2519, %v2517
      %v2522 = vpack.c.bf16 %v2520, %v2518
      %v2523 = vld [vmem:[#allocation2 + $0xd0] sm:$0xff]
      %v2524 = vld [vmem:[#allocation2 + $0xd8] sm:$0xff]
      %v2525 = vld [vmem:[#allocation2 + $0xf0] sm:$0xff]
      %v2526 = vld [vmem:[#allocation2 + $0xf8] sm:$0xff]
      %v2527 = vpack.c.bf16 %v2525, %v2523
      %v2528 = vpack.c.bf16 %v2526, %v2524
      %2529 = vxpose.xlu0.c.b16.start [1/8] %v2521, 128
      %2530 = vxpose.xlu0.c.b16.cont [2/8] 0, 128
      %2531 = vxpose.xlu0.c.b16.cont [3/8] 0, 128
      %2532 = vxpose.xlu0.c.b16.cont [4/8] 0, 128
      %2533 = vxpose.xlu0.c.b16.cont [5/8] 0, 128
      %2534 = vxpose.xlu0.c.b16.cont [6/8] 0, 128
      %2535 = vxpose.xlu0.c.b16.cont [7/8] 0, 128
      %2536 = vxpose.xlu0.c.b16.end [8/8] 0, 128
      %v2537 = vpop.trf.xlu0
      %v2538 = vpop.trf.xlu0
      %v2539 = vpop.trf.xlu0
      %v2540 = vpop.trf.xlu0
      %v2541 = vpop.trf.xlu0
      %v2542 = vpop.trf.xlu0
      %v2543 = vpop.trf.xlu0
      %v2544 = vpop.trf.xlu0
      %2545 = vxpose.xlu0.c.b16.start [1/8] %v2522, 128
      %2546 = vxpose.xlu0.c.b16.cont [2/8] 0, 128
      %2547 = vxpose.xlu0.c.b16.cont [3/8] 0, 128
      %2548 = vxpose.xlu0.c.b16.cont [4/8] 0, 128
      %2549 = vxpose.xlu0.c.b16.cont [5/8] 0, 128
      %2550 = vxpose.xlu0.c.b16.cont [6/8] 0, 128
      %2551 = vxpose.xlu0.c.b16.cont [7/8] 0, 128
      %2552 = vxpose.xlu0.c.b16.end [8/8] 0, 128
      %v2553 = vpop.trf.xlu0
      %v2554 = vpop.trf.xlu0
      %v2555 = vpop.trf.xlu0
      %v2556 = vpop.trf.xlu0
      %v2557 = vpop.trf.xlu0
      %v2558 = vpop.trf.xlu0
      %v2559 = vpop.trf.xlu0
      %v2560 = vpop.trf.xlu0
      %v2562 = vsel %vm1372, %v2537, 0
      %v2565 = vsel %vm1372, %v2538, 0
      %v2568 = vsel %vm1372, %v2539, 0
      %v2571 = vsel %vm1372, %v2540, 0
      %v2574 = vsel %vm1372, %v2541, 0
      %v2577 = vsel %vm1372, %v2542, 0
      %v2580 = vsel %vm1372, %v2543, 0
      %v2583 = vsel %vm1372, %v2544, 0
      %v2586 = vsel %vm1372, %v2553, 0
      %v2589 = vsel %vm1372, %v2554, 0
      %v2592 = vsel %vm1372, %v2555, 0
      %v2595 = vsel %vm1372, %v2556, 0
      %v2598 = vsel %vm1372, %v2557, 0
      %v2601 = vsel %vm1372, %v2558, 0
      %v2604 = vsel %vm1372, %v2559, 0
      %v2607 = vsel %vm1372, %v2560, 0
      %2609 = vmatprep.subr.bf16.mxu0 %v2528
      %2610 = vmatpush1.bf16.msra.mxu0 %v2527
      %2611 = vmatprep.subr.bf16.mxu0 0
      %2612 = vmatpush1.bf16.msra.mxu0 0
      %2613 = vmatprep.subr.bf16.mxu0 0
      %2614 = vmatpush1.bf16.msra.mxu0 0
      %2615 = vmatprep.subr.bf16.mxu0 0
      %2616 = vmatpush1.bf16.msra.mxu0 0
      %2617 = vmatprep.subr.bf16.mxu0 0
      %2618 = vmatpush1.bf16.msra.mxu0 0
      %2619 = vmatprep.subr.bf16.mxu0 0
      %2620 = vmatpush1.bf16.msra.mxu0 0
      %2621 = vmatprep.subr.bf16.mxu0 0
      %2622 = vmatpush1.bf16.msra.mxu0 0
      %2623 = vmatprep.subr.bf16.mxu0 0
      %2624 = vmatpush1.bf16.msra.mxu0 0
      %2625 = vmatprep.subr.bf16.mxu0 0
      %2626 = vmatpush1.bf16.msra.mxu0 0
      %2627 = vmatprep.subr.bf16.mxu0 0
      %2628 = vmatpush1.bf16.msra.mxu0 0
      %2629 = vmatprep.subr.bf16.mxu0 0
      %2630 = vmatpush1.bf16.msra.mxu0 0
      %2631 = vmatprep.subr.bf16.mxu0 0
      %2632 = vmatpush1.bf16.msra.mxu0 0
      %2633 = vmatprep.subr.bf16.mxu0 0
      %2634 = vmatpush1.bf16.msra.mxu0 0
      %2635 = vmatprep.subr.bf16.mxu0 0
      %2636 = vmatpush1.bf16.msra.mxu0 0
      %2637 = vmatprep.subr.bf16.mxu0 0
      %2638 = vmatpush1.bf16.msra.mxu0 0
      %2639 = vmatprep.subr.bf16.mxu0 0
      %2640 = vmatpush1.bf16.msra.mxu0 0
      %2641 = vmatprep.mubr.bf16.mxu0 0
      %2642 = vmatmul.mubr.bf16.gmra.mrb[0].mxu0 %v2562
      %v2643 = vpop.f32.mrb[0].mxu0
      %v2644 = vadd.f32 0.0, %v2643
      %v2645 = vpop.f32.mrb[0].mxu0
      %v2646 = vadd.f32 0.0, %v2645
      %v2647 = vpop.f32.mrb[0].mxu0
      %v2648 = vadd.f32 0.0, %v2647
      %v2649 = vpop.f32.mrb[0].mxu0
      %v2650 = vadd.f32 0.0, %v2649
      %2651 = vmatprep.mubr.bf16.mxu0 0
      %2652 = vmatmul.mubr.bf16.gmra.mrb[0].mxu0 %v2565
      %v2653 = vpop.f32.mrb[0].mxu0
      %v2654 = vadd.f32 0.0, %v2653
      %v2655 = vpop.f32.mrb[0].mxu0
      %v2656 = vadd.f32 0.0, %v2655
      %v2657 = vpop.f32.mrb[0].mxu0
      %v2658 = vadd.f32 0.0, %v2657
      %v2659 = vpop.f32.mrb[0].mxu0
      %v2660 = vadd.f32 0.0, %v2659
      %2661 = vmatprep.mubr.bf16.mxu0 0
      %2662 = vmatmul.mubr.bf16.gmra.mrb[0].mxu0 %v2568
      %v2663 = vpop.f32.mrb[0].mxu0
      %v2664 = vadd.f32 0.0, %v2663
      %v2665 = vpop.f32.mrb[0].mxu0
      %v2666 = vadd.f32 0.0, %v2665
      %v2667 = vpop.f32.mrb[0].mxu0
      %v2668 = vadd.f32 0.0, %v2667
      %v2669 = vpop.f32.mrb[0].mxu0
      %v2670 = vadd.f32 0.0, %v2669
      %2671 = vmatprep.mubr.bf16.mxu0 0
      %2672 = vmatmul.mubr.bf16.gmra.mrb[0].mxu0 %v2571
      %v2673 = vpop.f32.mrb[0].mxu0
      %v2674 = vadd.f32 0.0, %v2673
      %v2675 = vpop.f32.mrb[0].mxu0
      %v2676 = vadd.f32 0.0, %v2675
      %v2677 = vpop.f32.mrb[0].mxu0
      %v2678 = vadd.f32 0.0, %v2677
      %v2679 = vpop.f32.mrb[0].mxu0
      %v2680 = vadd.f32 0.0, %v2679
      %2681 = vmatprep.mubr.bf16.mxu0 0
      %2682 = vmatmul.mubr.bf16.gmra.mrb[0].mxu0 %v2574
      %v2683 = vpop.f32.mrb[0].mxu0
      %v2684 = vadd.f32 0.0, %v2683
      %v2685 = vpop.f32.mrb[0].mxu0
      %v2686 = vadd.f32 0.0, %v2685
      %v2687 = vpop.f32.mrb[0].mxu0
      %v2688 = vadd.f32 0.0, %v2687
      %v2689 = vpop.f32.mrb[0].mxu0
      %v2690 = vadd.f32 0.0, %v2689
      %2691 = vmatprep.mubr.bf16.mxu0 0
      %2692 = vmatmul.mubr.bf16.gmra.mrb[0].mxu0 %v2577
      %v2693 = vpop.f32.mrb[0].mxu0
      %v2694 = vadd.f32 0.0, %v2693
      %v2695 = vpop.f32.mrb[0].mxu0
      %v2696 = vadd.f32 0.0, %v2695
      %v2697 = vpop.f32.mrb[0].mxu0
      %v2698 = vadd.f32 0.0, %v2697
      %v2699 = vpop.f32.mrb[0].mxu0
      %v2700 = vadd.f32 0.0, %v2699
      %2701 = vmatprep.mubr.bf16.mxu0 0
      %2702 = vmatmul.mubr.bf16.gmra.mrb[0].mxu0 %v2580
      %v2703 = vpop.f32.mrb[0].mxu0
      %v2704 = vadd.f32 0.0, %v2703
      %v2705 = vpop.f32.mrb[0].mxu0
      %v2706 = vadd.f32 0.0, %v2705
      %v2707 = vpop.f32.mrb[0].mxu0
      %v2708 = vadd.f32 0.0, %v2707
      %v2709 = vpop.f32.mrb[0].mxu0
      %v2710 = vadd.f32 0.0, %v2709
      %2711 = vmatprep.mubr.bf16.mxu0 0
      %2712 = vmatmul.mubr.bf16.gmra.mrb[0].mxu0 %v2583
      %v2713 = vpop.f32.mrb[0].mxu0
      %v2714 = vadd.f32 0.0, %v2713
      %v2715 = vpop.f32.mrb[0].mxu0
      %v2716 = vadd.f32 0.0, %v2715
      %v2717 = vpop.f32.mrb[0].mxu0
      %v2718 = vadd.f32 0.0, %v2717
      %v2719 = vpop.f32.mrb[0].mxu0
      %v2720 = vadd.f32 0.0, %v2719
      %2721 = vmatprep.mubr.bf16.mxu0 0
      %2722 = vmatmul.mubr.bf16.gmra.mrb[0].mxu0 %v2586
      %v2723 = vpop.f32.mrb[0].mxu0
      %v2724 = vadd.f32 0.0, %v2723
      %v2725 = vpop.f32.mrb[0].mxu0
      %v2726 = vadd.f32 0.0, %v2725
      %v2727 = vpop.f32.mrb[0].mxu0
      %v2728 = vadd.f32 0.0, %v2727
      %v2729 = vpop.f32.mrb[0].mxu0
      %v2730 = vadd.f32 0.0, %v2729
      %2731 = vmatprep.mubr.bf16.mxu0 0
      %2732 = vmatmul.mubr.bf16.gmra.mrb[0].mxu0 %v2589
      %v2733 = vpop.f32.mrb[0].mxu0
      %v2734 = vadd.f32 0.0, %v2733
      %v2735 = vpop.f32.mrb[0].mxu0
      %v2736 = vadd.f32 0.0, %v2735
      %v2737 = vpop.f32.mrb[0].mxu0
      %v2738 = vadd.f32 0.0, %v2737
      %v2739 = vpop.f32.mrb[0].mxu0
      %v2740 = vadd.f32 0.0, %v2739
      %2741 = vmatprep.mubr.bf16.mxu0 0
      %2742 = vmatmul.mubr.bf16.gmra.mrb[0].mxu0 %v2592
      %v2743 = vpop.f32.mrb[0].mxu0
      %v2744 = vadd.f32 0.0, %v2743
      %v2745 = vpop.f32.mrb[0].mxu0
      %v2746 = vadd.f32 0.0, %v2745
      %v2747 = vpop.f32.mrb[0].mxu0
      %v2748 = vadd.f32 0.0, %v2747
      %v2749 = vpop.f32.mrb[0].mxu0
      %v2750 = vadd.f32 0.0, %v2749
      %2751 = vmatprep.mubr.bf16.mxu0 0
      %2752 = vmatmul.mubr.bf16.gmra.mrb[0].mxu0 %v2595
      %v2753 = vpop.f32.mrb[0].mxu0
      %v2754 = vadd.f32 0.0, %v2753
      %v2755 = vpop.f32.mrb[0].mxu0
      %v2756 = vadd.f32 0.0, %v2755
      %v2757 = vpop.f32.mrb[0].mxu0
      %v2758 = vadd.f32 0.0, %v2757
      %v2759 = vpop.f32.mrb[0].mxu0
      %v2760 = vadd.f32 0.0, %v2759
      %2761 = vmatprep.mubr.bf16.mxu0 0
      %2762 = vmatmul.mubr.bf16.gmra.mrb[0].mxu0 %v2598
      %v2763 = vpop.f32.mrb[0].mxu0
      %v2764 = vadd.f32 0.0, %v2763
      %v2765 = vpop.f32.mrb[0].mxu0
      %v2766 = vadd.f32 0.0, %v2765
      %v2767 = vpop.f32.mrb[0].mxu0
      %v2768 = vadd.f32 0.0, %v2767
      %v2769 = vpop.f32.mrb[0].mxu0
      %v2770 = vadd.f32 0.0, %v2769
      %2771 = vmatprep.mubr.bf16.mxu0 0
      %2772 = vmatmul.mubr.bf16.gmra.mrb[0].mxu0 %v2601
      %v2773 = vpop.f32.mrb[0].mxu0
      %v2774 = vadd.f32 0.0, %v2773
      %v2775 = vpop.f32.mrb[0].mxu0
      %v2776 = vadd.f32 0.0, %v2775
      %v2777 = vpop.f32.mrb[0].mxu0
      %v2778 = vadd.f32 0.0, %v2777
      %v2779 = vpop.f32.mrb[0].mxu0
      %v2780 = vadd.f32 0.0, %v2779
      %2781 = vmatprep.mubr.bf16.mxu0 0
      %2782 = vmatmul.mubr.bf16.gmra.mrb[0].mxu0 %v2604
      %v2783 = vpop.f32.mrb[0].mxu0
      %v2784 = vadd.f32 0.0, %v2783
      %v2785 = vpop.f32.mrb[0].mxu0
      %v2786 = vadd.f32 0.0, %v2785
      %v2787 = vpop.f32.mrb[0].mxu0
      %v2788 = vadd.f32 0.0, %v2787
      %v2789 = vpop.f32.mrb[0].mxu0
      %v2790 = vadd.f32 0.0, %v2789
      %2791 = vmatprep.mubr.bf16.mxu0 0
      %2792 = vmatmul.mubr.bf16.gmra.mrb[0].mxu0 %v2607
      %v2793 = vpop.f32.mrb[0].mxu0
      %v2794 = vadd.f32 0.0, %v2793
      %v2795 = vpop.f32.mrb[0].mxu0
      %v2796 = vadd.f32 0.0, %v2795
      %v2797 = vpop.f32.mrb[0].mxu0
      %v2798 = vadd.f32 0.0, %v2797
      %v2799 = vpop.f32.mrb[0].mxu0
      %v2800 = vadd.f32 0.0, %v2799
      %2801 = vdwg.mxu0
      %2802 = vxpose.xlu0.c.b16.start [1/8] %v2509, 128
      %2803 = vxpose.xlu0.c.b16.cont [2/8] 0, 128
      %2804 = vxpose.xlu0.c.b16.cont [3/8] 0, 128
      %2805 = vxpose.xlu0.c.b16.cont [4/8] 0, 128
      %2806 = vxpose.xlu0.c.b16.cont [5/8] 0, 128
      %2807 = vxpose.xlu0.c.b16.cont [6/8] 0, 128
      %2808 = vxpose.xlu0.c.b16.cont [7/8] 0, 128
      %2809 = vxpose.xlu0.c.b16.end [8/8] 0, 128
      %v2810 = vpop.trf.xlu0
      %v2811 = vpop.trf.xlu0
      %v2812 = vpop.trf.xlu0
      %v2813 = vpop.trf.xlu0
      %v2814 = vpop.trf.xlu0
      %v2815 = vpop.trf.xlu0
      %v2816 = vpop.trf.xlu0
      %v2817 = vpop.trf.xlu0
      %2818 = vxpose.xlu0.c.b16.start [1/8] %v2510, 128
      %2819 = vxpose.xlu0.c.b16.cont [2/8] 0, 128
      %2820 = vxpose.xlu0.c.b16.cont [3/8] 0, 128
      %2821 = vxpose.xlu0.c.b16.cont [4/8] 0, 128
      %2822 = vxpose.xlu0.c.b16.cont [5/8] 0, 128
      %2823 = vxpose.xlu0.c.b16.cont [6/8] 0, 128
      %2824 = vxpose.xlu0.c.b16.cont [7/8] 0, 128
      %2825 = vxpose.xlu0.c.b16.end [8/8] 0, 128
      %v2826 = vpop.trf.xlu0
      %v2827 = vpop.trf.xlu0
      %v2828 = vpop.trf.xlu0
      %v2829 = vpop.trf.xlu0
      %v2830 = vpop.trf.xlu0
      %v2831 = vpop.trf.xlu0
      %v2832 = vpop.trf.xlu0
      %v2833 = vpop.trf.xlu0
      %v2835 = vsel %vm1372, %v2810, 0
      %v2838 = vsel %vm1372, %v2811, 0
      %v2841 = vsel %vm1372, %v2812, 0
      %v2844 = vsel %vm1372, %v2813, 0
      %v2847 = vsel %vm1372, %v2814, 0
      %v2850 = vsel %vm1372, %v2815, 0
      %v2853 = vsel %vm1372, %v2816, 0
      %v2856 = vsel %vm1372, %v2817, 0
      %v2859 = vsel %vm1372, %v2826, 0
      %v2862 = vsel %vm1372, %v2827, 0
      %v2865 = vsel %vm1372, %v2828, 0
      %v2868 = vsel %vm1372, %v2829, 0
      %v2871 = vsel %vm1372, %v2830, 0
      %v2874 = vsel %vm1372, %v2831, 0
      %v2877 = vsel %vm1372, %v2832, 0
      %v2880 = vsel %vm1372, %v2833, 0
      %2882 = vmatprep.subr.bf16.mxu0 %v2516
      %2883 = vmatpush1.bf16.msra.mxu0 %v2515
      %2884 = vmatprep.subr.bf16.mxu0 0
      %2885 = vmatpush1.bf16.msra.mxu0 0
      %2886 = vmatprep.subr.bf16.mxu0 0
      %2887 = vmatpush1.bf16.msra.mxu0 0
      %2888 = vmatprep.subr.bf16.mxu0 0
      %2889 = vmatpush1.bf16.msra.mxu0 0
      %2890 = vmatprep.subr.bf16.mxu0 0
      %2891 = vmatpush1.bf16.msra.mxu0 0
      %2892 = vmatprep.subr.bf16.mxu0 0
      %2893 = vmatpush1.bf16.msra.mxu0 0
      %2894 = vmatprep.subr.bf16.mxu0 0
      %2895 = vmatpush1.bf16.msra.mxu0 0
      %2896 = vmatprep.subr.bf16.mxu0 0
      %2897 = vmatpush1.bf16.msra.mxu0 0
      %2898 = vmatprep.subr.bf16.mxu0 0
      %2899 = vmatpush1.bf16.msra.mxu0 0
      %2900 = vmatprep.subr.bf16.mxu0 0
      %2901 = vmatpush1.bf16.msra.mxu0 0
      %2902 = vmatprep.subr.bf16.mxu0 0
      %2903 = vmatpush1.bf16.msra.mxu0 0
      %2904 = vmatprep.subr.bf16.mxu0 0
      %2905 = vmatpush1.bf16.msra.mxu0 0
      %2906 = vmatprep.subr.bf16.mxu0 0
      %2907 = vmatpush1.bf16.msra.mxu0 0
      %2908 = vmatprep.subr.bf16.mxu0 0
      %2909 = vmatpush1.bf16.msra.mxu0 0
      %2910 = vmatprep.subr.bf16.mxu0 0
      %2911 = vmatpush1.bf16.msra.mxu0 0
      %2912 = vmatprep.subr.bf16.mxu0 0
      %2913 = vmatpush1.bf16.msra.mxu0 0
      %2914 = vmatprep.mubr.bf16.mxu0 0
      %2915 = vmatmul.mubr.bf16.gmra.mrb[0].mxu0 %v2835
      %v2916 = vpop.f32.mrb[0].mxu0
      %v2917 = vadd.f32 %v2644, %v2916
      %v2918 = vpop.f32.mrb[0].mxu0
      %v2919 = vadd.f32 %v2646, %v2918
      %v2920 = vpop.f32.mrb[0].mxu0
      %v2921 = vadd.f32 %v2648, %v2920
      %v2922 = vpop.f32.mrb[0].mxu0
      %v2923 = vadd.f32 %v2650, %v2922
      %2924 = vmatprep.mubr.bf16.mxu0 0
      %2925 = vmatmul.mubr.bf16.gmra.mrb[0].mxu0 %v2838
      %v2926 = vpop.f32.mrb[0].mxu0
      %v2927 = vadd.f32 %v2654, %v2926
      %v2928 = vpop.f32.mrb[0].mxu0
      %v2929 = vadd.f32 %v2656, %v2928
      %v2930 = vpop.f32.mrb[0].mxu0
      %v2931 = vadd.f32 %v2658, %v2930
      %v2932 = vpop.f32.mrb[0].mxu0
      %v2933 = vadd.f32 %v2660, %v2932
      %2934 = vmatprep.mubr.bf16.mxu0 0
      %2935 = vmatmul.mubr.bf16.gmra.mrb[0].mxu0 %v2841
      %v2936 = vpop.f32.mrb[0].mxu0
      %v2937 = vadd.f32 %v2664, %v2936
      %v2938 = vpop.f32.mrb[0].mxu0
      %v2939 = vadd.f32 %v2666, %v2938
      %v2940 = vpop.f32.mrb[0].mxu0
      %v2941 = vadd.f32 %v2668, %v2940
      %v2942 = vpop.f32.mrb[0].mxu0
      %v2943 = vadd.f32 %v2670, %v2942
      %2944 = vmatprep.mubr.bf16.mxu0 0
      %2945 = vmatmul.mubr.bf16.gmra.mrb[0].mxu0 %v2844
      %v2946 = vpop.f32.mrb[0].mxu0
      %v2947 = vadd.f32 %v2674, %v2946
      %v2948 = vpop.f32.mrb[0].mxu0
      %v2949 = vadd.f32 %v2676, %v2948
      %v2950 = vpop.f32.mrb[0].mxu0
      %v2951 = vadd.f32 %v2678, %v2950
      %v2952 = vpop.f32.mrb[0].mxu0
      %v2953 = vadd.f32 %v2680, %v2952
      %2954 = vmatprep.mubr.bf16.mxu0 0
      %2955 = vmatmul.mubr.bf16.gmra.mrb[0].mxu0 %v2847
      %v2956 = vpop.f32.mrb[0].mxu0
      %v2957 = vadd.f32 %v2684, %v2956
      %v2958 = vpop.f32.mrb[0].mxu0
      %v2959 = vadd.f32 %v2686, %v2958
      %v2960 = vpop.f32.mrb[0].mxu0
      %v2961 = vadd.f32 %v2688, %v2960
      %v2962 = vpop.f32.mrb[0].mxu0
      %v2963 = vadd.f32 %v2690, %v2962
      %2964 = vmatprep.mubr.bf16.mxu0 0
      %2965 = vmatmul.mubr.bf16.gmra.mrb[0].mxu0 %v2850
      %v2966 = vpop.f32.mrb[0].mxu0
      %v2967 = vadd.f32 %v2694, %v2966
      %v2968 = vpop.f32.mrb[0].mxu0
      %v2969 = vadd.f32 %v2696, %v2968
      %v2970 = vpop.f32.mrb[0].mxu0
      %v2971 = vadd.f32 %v2698, %v2970
      %v2972 = vpop.f32.mrb[0].mxu0
      %v2973 = vadd.f32 %v2700, %v2972
      %2974 = vmatprep.mubr.bf16.mxu0 0
      %2975 = vmatmul.mubr.bf16.gmra.mrb[0].mxu0 %v2853
      %v2976 = vpop.f32.mrb[0].mxu0
      %v2977 = vadd.f32 %v2704, %v2976
      %v2978 = vpop.f32.mrb[0].mxu0
      %v2979 = vadd.f32 %v2706, %v2978
      %v2980 = vpop.f32.mrb[0].mxu0
      %v2981 = vadd.f32 %v2708, %v2980
      %v2982 = vpop.f32.mrb[0].mxu0
      %v2983 = vadd.f32 %v2710, %v2982
      %2984 = vmatprep.mubr.bf16.mxu0 0
      %2985 = vmatmul.mubr.bf16.gmra.mrb[0].mxu0 %v2856
      %v2986 = vpop.f32.mrb[0].mxu0
      %v2987 = vadd.f32 %v2714, %v2986
      %v2988 = vpop.f32.mrb[0].mxu0
      %v2989 = vadd.f32 %v2716, %v2988
      %v2990 = vpop.f32.mrb[0].mxu0
      %v2991 = vadd.f32 %v2718, %v2990
      %v2992 = vpop.f32.mrb[0].mxu0
      %v2993 = vadd.f32 %v2720, %v2992
      %2994 = vmatprep.mubr.bf16.mxu0 0
      %2995 = vmatmul.mubr.bf16.gmra.mrb[0].mxu0 %v2859
      %v2996 = vpop.f32.mrb[0].mxu0
      %v2997 = vadd.f32 %v2724, %v2996
      %v2998 = vpop.f32.mrb[0].mxu0
      %v2999 = vadd.f32 %v2726, %v2998
      %v3000 = vpop.f32.mrb[0].mxu0
      %v3001 = vadd.f32 %v2728, %v3000
      %v3002 = vpop.f32.mrb[0].mxu0
      %v3003 = vadd.f32 %v2730, %v3002
      %3004 = vmatprep.mubr.bf16.mxu0 0
      %3005 = vmatmul.mubr.bf16.gmra.mrb[0].mxu0 %v2862
      %v3006 = vpop.f32.mrb[0].mxu0
      %v3007 = vadd.f32 %v2734, %v3006
      %v3008 = vpop.f32.mrb[0].mxu0
      %v3009 = vadd.f32 %v2736, %v3008
      %v3010 = vpop.f32.mrb[0].mxu0
      %v3011 = vadd.f32 %v2738, %v3010
      %v3012 = vpop.f32.mrb[0].mxu0
      %v3013 = vadd.f32 %v2740, %v3012
      %3014 = vmatprep.mubr.bf16.mxu0 0
      %3015 = vmatmul.mubr.bf16.gmra.mrb[0].mxu0 %v2865
      %v3016 = vpop.f32.mrb[0].mxu0
      %v3017 = vadd.f32 %v2744, %v3016
      %v3018 = vpop.f32.mrb[0].mxu0
      %v3019 = vadd.f32 %v2746, %v3018
      %v3020 = vpop.f32.mrb[0].mxu0
      %v3021 = vadd.f32 %v2748, %v3020
      %v3022 = vpop.f32.mrb[0].mxu0
      %v3023 = vadd.f32 %v2750, %v3022
      %3024 = vmatprep.mubr.bf16.mxu0 0
      %3025 = vmatmul.mubr.bf16.gmra.mrb[0].mxu0 %v2868
      %v3026 = vpop.f32.mrb[0].mxu0
      %v3027 = vadd.f32 %v2754, %v3026
      %v3028 = vpop.f32.mrb[0].mxu0
      %v3029 = vadd.f32 %v2756, %v3028
      %v3030 = vpop.f32.mrb[0].mxu0
      %v3031 = vadd.f32 %v2758, %v3030
      %v3032 = vpop.f32.mrb[0].mxu0
      %v3033 = vadd.f32 %v2760, %v3032
      %3034 = vmatprep.mubr.bf16.mxu0 0
      %3035 = vmatmul.mubr.bf16.gmra.mrb[0].mxu0 %v2871
      %v3036 = vpop.f32.mrb[0].mxu0
      %v3037 = vadd.f32 %v2764, %v3036
      %v3038 = vpop.f32.mrb[0].mxu0
      %v3039 = vadd.f32 %v2766, %v3038
      %v3040 = vpop.f32.mrb[0].mxu0
      %v3041 = vadd.f32 %v2768, %v3040
      %v3042 = vpop.f32.mrb[0].mxu0
      %v3043 = vadd.f32 %v2770, %v3042
      %3044 = vmatprep.mubr.bf16.mxu0 0
      %3045 = vmatmul.mubr.bf16.gmra.mrb[0].mxu0 %v2874
      %v3046 = vpop.f32.mrb[0].mxu0
      %v3047 = vadd.f32 %v2774, %v3046
      %v3048 = vpop.f32.mrb[0].mxu0
      %v3049 = vadd.f32 %v2776, %v3048
      %v3050 = vpop.f32.mrb[0].mxu0
      %v3051 = vadd.f32 %v2778, %v3050
      %v3052 = vpop.f32.mrb[0].mxu0
      %v3053 = vadd.f32 %v2780, %v3052
      %3054 = vmatprep.mubr.bf16.mxu0 0
      %3055 = vmatmul.mubr.bf16.gmra.mrb[0].mxu0 %v2877
      %v3056 = vpop.f32.mrb[0].mxu0
      %v3057 = vadd.f32 %v2784, %v3056
      %v3058 = vpop.f32.mrb[0].mxu0
      %v3059 = vadd.f32 %v2786, %v3058
      %v3060 = vpop.f32.mrb[0].mxu0
      %v3061 = vadd.f32 %v2788, %v3060
      %v3062 = vpop.f32.mrb[0].mxu0
      %v3063 = vadd.f32 %v2790, %v3062
      %3064 = vmatprep.mubr.bf16.mxu0 0
      %3065 = vmatmul.mubr.bf16.gmra.mrb[0].mxu0 %v2880
      %v3066 = vpop.f32.mrb[0].mxu0
      %v3067 = vadd.f32 %v2794, %v3066
      %v3068 = vpop.f32.mrb[0].mxu0
      %v3069 = vadd.f32 %v2796, %v3068
      %v3070 = vpop.f32.mrb[0].mxu0
      %v3071 = vadd.f32 %v2798, %v3070
      %v3072 = vpop.f32.mrb[0].mxu0
      %v3073 = vadd.f32 %v2800, %v3072
      %3074 = vdwg.mxu0
      %v3075 = vmax.f32 %v2917, %v2919
      %3076 = vmax.xlane.f32.xlu0 %v3075
      %v3077 = vpop.xlane.xlu0 %3076
      %v3078 = vmax.f32 %v2921, %v2923
      %3079 = vmax.xlane.f32.xlu0 %v3078
      %v3080 = vpop.xlane.xlu0 %3079
      %v3081 = vmax.f32 %v2927, %v2929
      %3082 = vmax.xlane.f32.xlu0 %v3081
      %v3083 = vpop.xlane.xlu0 %3082
      %v3084 = vmax.f32 %v2931, %v2933
      %3085 = vmax.xlane.f32.xlu0 %v3084
      %v3086 = vpop.xlane.xlu0 %3085
      %v3087 = vmax.f32 %v2937, %v2939
      %3088 = vmax.xlane.f32.xlu0 %v3087
      %v3089 = vpop.xlane.xlu0 %3088
      %v3090 = vmax.f32 %v2941, %v2943
      %3091 = vmax.xlane.f32.xlu0 %v3090
      %v3092 = vpop.xlane.xlu0 %3091
      %v3093 = vmax.f32 %v2947, %v2949
      %3094 = vmax.xlane.f32.xlu0 %v3093
      %v3095 = vpop.xlane.xlu0 %3094
      %v3096 = vmax.f32 %v2951, %v2953
      %3097 = vmax.xlane.f32.xlu0 %v3096
      %v3098 = vpop.xlane.xlu0 %3097
      %v3099 = vmax.f32 %v2957, %v2959
      %3100 = vmax.xlane.f32.xlu0 %v3099
      %v3101 = vpop.xlane.xlu0 %3100
      %v3102 = vmax.f32 %v2961, %v2963
      %3103 = vmax.xlane.f32.xlu0 %v3102
      %v3104 = vpop.xlane.xlu0 %3103
      %v3105 = vmax.f32 %v2967, %v2969
      %3106 = vmax.xlane.f32.xlu0 %v3105
      %v3107 = vpop.xlane.xlu0 %3106
      %v3108 = vmax.f32 %v2971, %v2973
      %3109 = vmax.xlane.f32.xlu0 %v3108
      %v3110 = vpop.xlane.xlu0 %3109
      %v3111 = vmax.f32 %v2977, %v2979
      %3112 = vmax.xlane.f32.xlu0 %v3111
      %v3113 = vpop.xlane.xlu0 %3112
      %v3114 = vmax.f32 %v2981, %v2983
      %3115 = vmax.xlane.f32.xlu0 %v3114
      %v3116 = vpop.xlane.xlu0 %3115
      %v3117 = vmax.f32 %v2987, %v2989
      %3118 = vmax.xlane.f32.xlu0 %v3117
      %v3119 = vpop.xlane.xlu0 %3118
      %v3120 = vmax.f32 %v2991, %v2993
      %3121 = vmax.xlane.f32.xlu0 %v3120
      %v3122 = vpop.xlane.xlu0 %3121
      %v3123 = vmax.f32 %v2997, %v2999
      %3124 = vmax.xlane.f32.xlu0 %v3123
      %v3125 = vpop.xlane.xlu0 %3124
      %v3126 = vmax.f32 %v3001, %v3003
      %3127 = vmax.xlane.f32.xlu0 %v3126
      %v3128 = vpop.xlane.xlu0 %3127
      %v3129 = vmax.f32 %v3007, %v3009
      %3130 = vmax.xlane.f32.xlu0 %v3129
      %v3131 = vpop.xlane.xlu0 %3130
      %v3132 = vmax.f32 %v3011, %v3013
      %3133 = vmax.xlane.f32.xlu0 %v3132
      %v3134 = vpop.xlane.xlu0 %3133
      %v3135 = vmax.f32 %v3017, %v3019
      %3136 = vmax.xlane.f32.xlu0 %v3135
      %v3137 = vpop.xlane.xlu0 %3136
      %v3138 = vmax.f32 %v3021, %v3023
      %3139 = vmax.xlane.f32.xlu0 %v3138
      %v3140 = vpop.xlane.xlu0 %3139
      %v3141 = vmax.f32 %v3027, %v3029
      %3142 = vmax.xlane.f32.xlu0 %v3141
      %v3143 = vpop.xlane.xlu0 %3142
      %v3144 = vmax.f32 %v3031, %v3033
      %3145 = vmax.xlane.f32.xlu0 %v3144
      %v3146 = vpop.xlane.xlu0 %3145
      %v3147 = vmax.f32 %v3037, %v3039
      %3148 = vmax.xlane.f32.xlu0 %v3147
      %v3149 = vpop.xlane.xlu0 %3148
      %v3150 = vmax.f32 %v3041, %v3043
      %3151 = vmax.xlane.f32.xlu0 %v3150
      %v3152 = vpop.xlane.xlu0 %3151
      %v3153 = vmax.f32 %v3047, %v3049
      %3154 = vmax.xlane.f32.xlu0 %v3153
      %v3155 = vpop.xlane.xlu0 %3154
      %v3156 = vmax.f32 %v3051, %v3053
      %3157 = vmax.xlane.f32.xlu0 %v3156
      %v3158 = vpop.xlane.xlu0 %3157
      %v3159 = vmax.f32 %v3057, %v3059
      %3160 = vmax.xlane.f32.xlu0 %v3159
      %v3161 = vpop.xlane.xlu0 %3160
      %v3162 = vmax.f32 %v3061, %v3063
      %3163 = vmax.xlane.f32.xlu0 %v3162
      %v3164 = vpop.xlane.xlu0 %3163
      %v3165 = vmax.f32 %v3067, %v3069
      %3166 = vmax.xlane.f32.xlu0 %v3165
      %v3167 = vpop.xlane.xlu0 %3166
      %v3168 = vmax.f32 %v3071, %v3073
      %3169 = vmax.xlane.f32.xlu0 %v3168
      %v3170 = vpop.xlane.xlu0 %3169
      %v3171 = vsub.f32 %v2917, %v3077
      %v3172 = vsub.f32 %v2919, %v3077
      %v3173 = vsub.f32 %v2921, %v3080
      %v3174 = vsub.f32 %v2923, %v3080
      %v3175 = vsub.f32 %v2927, %v3083
      %v3176 = vsub.f32 %v2929, %v3083
      %v3177 = vsub.f32 %v2931, %v3086
      %v3178 = vsub.f32 %v2933, %v3086
      %v3179 = vsub.f32 %v2937, %v3089
      %v3180 = vsub.f32 %v2939, %v3089
      %v3181 = vsub.f32 %v2941, %v3092
      %v3182 = vsub.f32 %v2943, %v3092
      %v3183 = vsub.f32 %v2947, %v3095
      %v3184 = vsub.f32 %v2949, %v3095
      %v3185 = vsub.f32 %v2951, %v3098
      %v3186 = vsub.f32 %v2953, %v3098
      %v3187 = vsub.f32 %v2957, %v3101
      %v3188 = vsub.f32 %v2959, %v3101
      %v3189 = vsub.f32 %v2961, %v3104
      %v3190 = vsub.f32 %v2963, %v3104
      %v3191 = vsub.f32 %v2967, %v3107
      %v3192 = vsub.f32 %v2969, %v3107
      %v3193 = vsub.f32 %v2971, %v3110
      %v3194 = vsub.f32 %v2973, %v3110
      %v3195 = vsub.f32 %v2977, %v3113
      %v3196 = vsub.f32 %v2979, %v3113
      %v3197 = vsub.f32 %v2981, %v3116
      %v3198 = vsub.f32 %v2983, %v3116
      %v3199 = vsub.f32 %v2987, %v3119
      %v3200 = vsub.f32 %v2989, %v3119
      %v3201 = vsub.f32 %v2991, %v3122
      %v3202 = vsub.f32 %v2993, %v3122
      %v3203 = vsub.f32 %v2997, %v3125
      %v3204 = vsub.f32 %v2999, %v3125
      %v3205 = vsub.f32 %v3001, %v3128
      %v3206 = vsub.f32 %v3003, %v3128
      %v3207 = vsub.f32 %v3007, %v3131
      %v3208 = vsub.f32 %v3009, %v3131
      %v3209 = vsub.f32 %v3011, %v3134
      %v3210 = vsub.f32 %v3013, %v3134
      %v3211 = vsub.f32 %v3017, %v3137
      %v3212 = vsub.f32 %v3019, %v3137
      %v3213 = vsub.f32 %v3021, %v3140
      %v3214 = vsub.f32 %v3023, %v3140
      %v3215 = vsub.f32 %v3027, %v3143
      %v3216 = vsub.f32 %v3029, %v3143
      %v3217 = vsub.f32 %v3031, %v3146
      %v3218 = vsub.f32 %v3033, %v3146
      %v3219 = vsub.f32 %v3037, %v3149
      %v3220 = vsub.f32 %v3039, %v3149
      %v3221 = vsub.f32 %v3041, %v3152
      %v3222 = vsub.f32 %v3043, %v3152
      %v3223 = vsub.f32 %v3047, %v3155
      %v3224 = vsub.f32 %v3049, %v3155
      %v3225 = vsub.f32 %v3051, %v3158
      %v3226 = vsub.f32 %v3053, %v3158
      %v3227 = vsub.f32 %v3057, %v3161
      %v3228 = vsub.f32 %v3059, %v3161
      %v3229 = vsub.f32 %v3061, %v3164
      %v3230 = vsub.f32 %v3063, %v3164
      %v3231 = vsub.f32 %v3067, %v3167
      %v3232 = vsub.f32 %v3069, %v3167
      %v3233 = vsub.f32 %v3071, %v3170
      %v3234 = vsub.f32 %v3073, %v3170
      %v3235 = vmul.f32 %v3171, 1.442695
      %v3236 = vpow.pop %v3235
      %v3237 = vmul.f32 %v3172, 1.442695
      %v3238 = vpow.pop %v3237
      %v3239 = vmul.f32 %v3173, 1.442695
      %v3240 = vpow.pop %v3239
      %v3241 = vmul.f32 %v3174, 1.442695
      %v3242 = vpow.pop %v3241
      %v3243 = vmul.f32 %v3175, 1.442695
      %v3244 = vpow.pop %v3243
      %v3245 = vmul.f32 %v3176, 1.442695
      %v3246 = vpow.pop %v3245
      %v3247 = vmul.f32 %v3177, 1.442695
      %v3248 = vpow.pop %v3247
      %v3249 = vmul.f32 %v3178, 1.442695
      %v3250 = vpow.pop %v3249
      %v3251 = vmul.f32 %v3179, 1.442695
      %v3252 = vpow.pop %v3251
      %v3253 = vmul.f32 %v3180, 1.442695
      %v3254 = vpow.pop %v3253
      %v3255 = vmul.f32 %v3181, 1.442695
      %v3256 = vpow.pop %v3255
      %v3257 = vmul.f32 %v3182, 1.442695
      %v3258 = vpow.pop %v3257
      %v3259 = vmul.f32 %v3183, 1.442695
      %v3260 = vpow.pop %v3259
      %v3261 = vmul.f32 %v3184, 1.442695
      %v3262 = vpow.pop %v3261
      %v3263 = vmul.f32 %v3185, 1.442695
      %v3264 = vpow.pop %v3263
      %v3265 = vmul.f32 %v3186, 1.442695
      %v3266 = vpow.pop %v3265
      %v3267 = vmul.f32 %v3187, 1.442695
      %v3268 = vpow.pop %v3267
      %v3269 = vmul.f32 %v3188, 1.442695
      %v3270 = vpow.pop %v3269
      %v3271 = vmul.f32 %v3189, 1.442695
      %v3272 = vpow.pop %v3271
      %v3273 = vmul.f32 %v3190, 1.442695
      %v3274 = vpow.pop %v3273
      %v3275 = vmul.f32 %v3191, 1.442695
      %v3276 = vpow.pop %v3275
      %v3277 = vmul.f32 %v3192, 1.442695
      %v3278 = vpow.pop %v3277
      %v3279 = vmul.f32 %v3193, 1.442695
      %v3280 = vpow.pop %v3279
      %v3281 = vmul.f32 %v3194, 1.442695
      %v3282 = vpow.pop %v3281
      %v3283 = vmul.f32 %v3195, 1.442695
      %v3284 = vpow.pop %v3283
      %v3285 = vmul.f32 %v3196, 1.442695
      %v3286 = vpow.pop %v3285
      %v3287 = vmul.f32 %v3197, 1.442695
      %v3288 = vpow.pop %v3287
      %v3289 = vmul.f32 %v3198, 1.442695
      %v3290 = vpow.pop %v3289
      %v3291 = vmul.f32 %v3199, 1.442695
      %v3292 = vpow.pop %v3291
      %v3293 = vmul.f32 %v3200, 1.442695
      %v3294 = vpow.pop %v3293
      %v3295 = vmul.f32 %v3201, 1.442695
      %v3296 = vpow.pop %v3295
      %v3297 = vmul.f32 %v3202, 1.442695
      %v3298 = vpow.pop %v3297
      %v3299 = vmul.f32 %v3203, 1.442695
      %v3300 = vpow.pop %v3299
      %v3301 = vmul.f32 %v3204, 1.442695
      %v3302 = vpow.pop %v3301
      %v3303 = vmul.f32 %v3205, 1.442695
      %v3304 = vpow.pop %v3303
      %v3305 = vmul.f32 %v3206, 1.442695
      %v3306 = vpow.pop %v3305
      %v3307 = vmul.f32 %v3207, 1.442695
      %v3308 = vpow.pop %v3307
      %v3309 = vmul.f32 %v3208, 1.442695
      %v3310 = vpow.pop %v3309
      %v3311 = vmul.f32 %v3209, 1.442695
      %v3312 = vpow.pop %v3311
      %v3313 = vmul.f32 %v3210, 1.442695
      %v3314 = vpow.pop %v3313
      %v3315 = vmul.f32 %v3211, 1.442695
      %v3316 = vpow.pop %v3315
      %v3317 = vmul.f32 %v3212, 1.442695
      %v3318 = vpow.pop %v3317
      %v3319 = vmul.f32 %v3213, 1.442695
      %v3320 = vpow.pop %v3319
      %v3321 = vmul.f32 %v3214, 1.442695
      %v3322 = vpow.pop %v3321
      %v3323 = vmul.f32 %v3215, 1.442695
      %v3324 = vpow.pop %v3323
      %v3325 = vmul.f32 %v3216, 1.442695
      %v3326 = vpow.pop %v3325
      %v3327 = vmul.f32 %v3217, 1.442695
      %v3328 = vpow.pop %v3327
      %v3329 = vmul.f32 %v3218, 1.442695
      %v3330 = vpow.pop %v3329
      %v3331 = vmul.f32 %v3219, 1.442695
      %v3332 = vpow.pop %v3331
      %v3333 = vmul.f32 %v3220, 1.442695
      %v3334 = vpow.pop %v3333
      %v3335 = vmul.f32 %v3221, 1.442695
      %v3336 = vpow.pop %v3335
      %v3337 = vmul.f32 %v3222, 1.442695
      %v3338 = vpow.pop %v3337
      %v3339 = vmul.f32 %v3223, 1.442695
      %v3340 = vpow.pop %v3339
      %v3341 = vmul.f32 %v3224, 1.442695
      %v3342 = vpow.pop %v3341
      %v3343 = vmul.f32 %v3225, 1.442695
      %v3344 = vpow.pop %v3343
      %v3345 = vmul.f32 %v3226, 1.442695
      %v3346 = vpow.pop %v3345
      %v3347 = vmul.f32 %v3227, 1.442695
      %v3348 = vpow.pop %v3347
      %v3349 = vmul.f32 %v3228, 1.442695
      %v3350 = vpow.pop %v3349
      %v3351 = vmul.f32 %v3229, 1.442695
      %v3352 = vpow.pop %v3351
      %v3353 = vmul.f32 %v3230, 1.442695
      %v3354 = vpow.pop %v3353
      %v3355 = vmul.f32 %v3231, 1.442695
      %v3356 = vpow.pop %v3355
      %v3357 = vmul.f32 %v3232, 1.442695
      %v3358 = vpow.pop %v3357
      %v3359 = vmul.f32 %v3233, 1.442695
      %v3360 = vpow.pop %v3359
      %v3361 = vmul.f32 %v3234, 1.442695
      %v3362 = vpow.pop %v3361
      %v3363 = vadd.f32 %v3236, %v3238
      %3364 = vadd.xlane.f32.xlu0 %v3363
      %v3365 = vpop.xlane.xlu0 %3364
      %v3366 = vadd.f32 %v3240, %v3242
      %3367 = vadd.xlane.f32.xlu0 %v3366
      %v3368 = vpop.xlane.xlu0 %3367
      %v3369 = vadd.f32 %v3244, %v3246
      %3370 = vadd.xlane.f32.xlu0 %v3369
      %v3371 = vpop.xlane.xlu0 %3370
      %v3372 = vadd.f32 %v3248, %v3250
      %3373 = vadd.xlane.f32.xlu0 %v3372
      %v3374 = vpop.xlane.xlu0 %3373
      %v3375 = vadd.f32 %v3252, %v3254
      %3376 = vadd.xlane.f32.xlu0 %v3375
      %v3377 = vpop.xlane.xlu0 %3376
      %v3378 = vadd.f32 %v3256, %v3258
      %3379 = vadd.xlane.f32.xlu0 %v3378
      %v3380 = vpop.xlane.xlu0 %3379
      %v3381 = vadd.f32 %v3260, %v3262
      %3382 = vadd.xlane.f32.xlu0 %v3381
      %v3383 = vpop.xlane.xlu0 %3382
      %v3384 = vadd.f32 %v3264, %v3266
      %3385 = vadd.xlane.f32.xlu0 %v3384
      %v3386 = vpop.xlane.xlu0 %3385
      %v3387 = vadd.f32 %v3268, %v3270
      %3388 = vadd.xlane.f32.xlu0 %v3387
      %v3389 = vpop.xlane.xlu0 %3388
      %v3390 = vadd.f32 %v3272, %v3274
      %3391 = vadd.xlane.f32.xlu0 %v3390
      %v3392 = vpop.xlane.xlu0 %3391
      %v3393 = vadd.f32 %v3276, %v3278
      %3394 = vadd.xlane.f32.xlu0 %v3393
      %v3395 = vpop.xlane.xlu0 %3394
      %v3396 = vadd.f32 %v3280, %v3282
      %3397 = vadd.xlane.f32.xlu0 %v3396
      %v3398 = vpop.xlane.xlu0 %3397
      %v3399 = vadd.f32 %v3284, %v3286
      %3400 = vadd.xlane.f32.xlu0 %v3399
      %v3401 = vpop.xlane.xlu0 %3400
      %v3402 = vadd.f32 %v3288, %v3290
      %3403 = vadd.xlane.f32.xlu0 %v3402
      %v3404 = vpop.xlane.xlu0 %3403
      %v3405 = vadd.f32 %v3292, %v3294
      %3406 = vadd.xlane.f32.xlu0 %v3405
      %v3407 = vpop.xlane.xlu0 %3406
      %v3408 = vadd.f32 %v3296, %v3298
      %3409 = vadd.xlane.f32.xlu0 %v3408
      %v3410 = vpop.xlane.xlu0 %3409
      %v3411 = vadd.f32 %v3300, %v3302
      %3412 = vadd.xlane.f32.xlu0 %v3411
      %v3413 = vpop.xlane.xlu0 %3412
      %v3414 = vadd.f32 %v3304, %v3306
      %3415 = vadd.xlane.f32.xlu0 %v3414
      %v3416 = vpop.xlane.xlu0 %3415
      %v3417 = vadd.f32 %v3308, %v3310
      %3418 = vadd.xlane.f32.xlu0 %v3417
      %v3419 = vpop.xlane.xlu0 %3418
      %v3420 = vadd.f32 %v3312, %v3314
      %3421 = vadd.xlane.f32.xlu0 %v3420
      %v3422 = vpop.xlane.xlu0 %3421
      %v3423 = vadd.f32 %v3316, %v3318
      %3424 = vadd.xlane.f32.xlu0 %v3423
      %v3425 = vpop.xlane.xlu0 %3424
      %v3426 = vadd.f32 %v3320, %v3322
      %3427 = vadd.xlane.f32.xlu0 %v3426
      %v3428 = vpop.xlane.xlu0 %3427
      %v3429 = vadd.f32 %v3324, %v3326
      %3430 = vadd.xlane.f32.xlu0 %v3429
      %v3431 = vpop.xlane.xlu0 %3430
      %v3432 = vadd.f32 %v3328, %v3330
      %3433 = vadd.xlane.f32.xlu0 %v3432
      %v3434 = vpop.xlane.xlu0 %3433
      %v3435 = vadd.f32 %v3332, %v3334
      %3436 = vadd.xlane.f32.xlu0 %v3435
      %v3437 = vpop.xlane.xlu0 %3436
      %v3438 = vadd.f32 %v3336, %v3338
      %3439 = vadd.xlane.f32.xlu0 %v3438
      %v3440 = vpop.xlane.xlu0 %3439
      %v3441 = vadd.f32 %v3340, %v3342
      %3442 = vadd.xlane.f32.xlu0 %v3441
      %v3443 = vpop.xlane.xlu0 %3442
      %v3444 = vadd.f32 %v3344, %v3346
      %3445 = vadd.xlane.f32.xlu0 %v3444
      %v3446 = vpop.xlane.xlu0 %3445
      %v3447 = vadd.f32 %v3348, %v3350
      %3448 = vadd.xlane.f32.xlu0 %v3447
      %v3449 = vpop.xlane.xlu0 %3448
      %v3450 = vadd.f32 %v3352, %v3354
      %3451 = vadd.xlane.f32.xlu0 %v3450
      %v3452 = vpop.xlane.xlu0 %3451
      %v3453 = vadd.f32 %v3356, %v3358
      %3454 = vadd.xlane.f32.xlu0 %v3453
      %v3455 = vpop.xlane.xlu0 %3454
      %v3456 = vadd.f32 %v3360, %v3362
      %3457 = vadd.xlane.f32.xlu0 %v3456
      %v3458 = vpop.xlane.xlu0 %3457
      %v3459 = vrcp.pop %v3365
      %v3460 = vrcp.pop %v3368
      %v3461 = vrcp.pop %v3371
      %v3462 = vrcp.pop %v3374
      %v3463 = vrcp.pop %v3377
      %v3464 = vrcp.pop %v3380
      %v3465 = vrcp.pop %v3383
      %v3466 = vrcp.pop %v3386
      %v3467 = vrcp.pop %v3389
      %v3468 = vrcp.pop %v3392
      %v3469 = vrcp.pop %v3395
      %v3470 = vrcp.pop %v3398
      %v3471 = vrcp.pop %v3401
      %v3472 = vrcp.pop %v3404
      %v3473 = vrcp.pop %v3407
      %v3474 = vrcp.pop %v3410
      %v3475 = vrcp.pop %v3413
      %v3476 = vrcp.pop %v3416
      %v3477 = vrcp.pop %v3419
      %v3478 = vrcp.pop %v3422
      %v3479 = vrcp.pop %v3425
      %v3480 = vrcp.pop %v3428
      %v3481 = vrcp.pop %v3431
      %v3482 = vrcp.pop %v3434
      %v3483 = vrcp.pop %v3437
      %v3484 = vrcp.pop %v3440
      %v3485 = vrcp.pop %v3443
      %v3486 = vrcp.pop %v3446
      %v3487 = vrcp.pop %v3449
      %v3488 = vrcp.pop %v3452
      %v3489 = vrcp.pop %v3455
      %v3490 = vrcp.pop %v3458
      %v3491 = vmul.f32 %v3236, %v3459
      %v3492 = vmul.f32 %v3238, %v3459
      %v3493 = vmul.f32 %v3240, %v3460
      %v3494 = vmul.f32 %v3242, %v3460
      %v3495 = vmul.f32 %v3244, %v3461
      %v3496 = vmul.f32 %v3246, %v3461
      %v3497 = vmul.f32 %v3248, %v3462
      %v3498 = vmul.f32 %v3250, %v3462
      %v3499 = vmul.f32 %v3252, %v3463
      %v3500 = vmul.f32 %v3254, %v3463
      %v3501 = vmul.f32 %v3256, %v3464
      %v3502 = vmul.f32 %v3258, %v3464
      %v3503 = vmul.f32 %v3260, %v3465
      %v3504 = vmul.f32 %v3262, %v3465
      %v3505 = vmul.f32 %v3264, %v3466
      %v3506 = vmul.f32 %v3266, %v3466
      %v3507 = vmul.f32 %v3268, %v3467
      %v3508 = vmul.f32 %v3270, %v3467
      %v3509 = vmul.f32 %v3272, %v3468
      %v3510 = vmul.f32 %v3274, %v3468
      %v3511 = vmul.f32 %v3276, %v3469
      %v3512 = vmul.f32 %v3278, %v3469
      %v3513 = vmul.f32 %v3280, %v3470
      %v3514 = vmul.f32 %v3282, %v3470
      %v3515 = vmul.f32 %v3284, %v3471
      %v3516 = vmul.f32 %v3286, %v3471
      %v3517 = vmul.f32 %v3288, %v3472
      %v3518 = vmul.f32 %v3290, %v3472
      %v3519 = vmul.f32 %v3292, %v3473
      %v3520 = vmul.f32 %v3294, %v3473
      %v3521 = vmul.f32 %v3296, %v3474
      %v3522 = vmul.f32 %v3298, %v3474
      %v3523 = vmul.f32 %v3300, %v3475
      %v3524 = vmul.f32 %v3302, %v3475
      %v3525 = vmul.f32 %v3304, %v3476
      %v3526 = vmul.f32 %v3306, %v3476
      %v3527 = vmul.f32 %v3308, %v3477
      %v3528 = vmul.f32 %v3310, %v3477
      %v3529 = vmul.f32 %v3312, %v3478
      %v3530 = vmul.f32 %v3314, %v3478
      %v3531 = vmul.f32 %v3316, %v3479
      %v3532 = vmul.f32 %v3318, %v3479
      %v3533 = vmul.f32 %v3320, %v3480
      %v3534 = vmul.f32 %v3322, %v3480
      %v3535 = vmul.f32 %v3324, %v3481
      %v3536 = vmul.f32 %v3326, %v3481
      %v3537 = vmul.f32 %v3328, %v3482
      %v3538 = vmul.f32 %v3330, %v3482
      %v3539 = vmul.f32 %v3332, %v3483
      %v3540 = vmul.f32 %v3334, %v3483
      %v3541 = vmul.f32 %v3336, %v3484
      %v3542 = vmul.f32 %v3338, %v3484
      %v3543 = vmul.f32 %v3340, %v3485
      %v3544 = vmul.f32 %v3342, %v3485
      %v3545 = vmul.f32 %v3344, %v3486
      %v3546 = vmul.f32 %v3346, %v3486
      %v3547 = vmul.f32 %v3348, %v3487
      %v3548 = vmul.f32 %v3350, %v3487
      %v3549 = vmul.f32 %v3352, %v3488
      %v3550 = vmul.f32 %v3354, %v3488
      %v3551 = vmul.f32 %v3356, %v3489
      %v3552 = vmul.f32 %v3358, %v3489
      %v3553 = vmul.f32 %v3360, %v3490
      %v3554 = vmul.f32 %v3362, %v3490
      %v3555 = vpack.c.bf16 %v3493, %v3491
      %v3556 = vpack.c.bf16 %v3494, %v3492
      %v3557 = vpack.c.bf16 %v3497, %v3495
      %v3558 = vpack.c.bf16 %v3498, %v3496
      %v3559 = vpack.c.bf16 %v3501, %v3499
      %v3560 = vpack.c.bf16 %v3502, %v3500
      %v3561 = vpack.c.bf16 %v3505, %v3503
      %v3562 = vpack.c.bf16 %v3506, %v3504
      %v3563 = vpack.c.bf16 %v3509, %v3507
      %v3564 = vpack.c.bf16 %v3510, %v3508
      %v3565 = vpack.c.bf16 %v3513, %v3511
      %v3566 = vpack.c.bf16 %v3514, %v3512
      %v3567 = vpack.c.bf16 %v3517, %v3515
      %v3568 = vpack.c.bf16 %v3518, %v3516
      %v3569 = vpack.c.bf16 %v3521, %v3519
      %v3570 = vpack.c.bf16 %v3522, %v3520
      %v3571 = vpack.c.bf16 %v3525, %v3523
      %v3572 = vpack.c.bf16 %v3526, %v3524
      %v3573 = vpack.c.bf16 %v3529, %v3527
      %v3574 = vpack.c.bf16 %v3530, %v3528
      %v3575 = vpack.c.bf16 %v3533, %v3531
      %v3576 = vpack.c.bf16 %v3534, %v3532
      %v3577 = vpack.c.bf16 %v3537, %v3535
      %v3578 = vpack.c.bf16 %v3538, %v3536
      %v3579 = vpack.c.bf16 %v3541, %v3539
      %v3580 = vpack.c.bf16 %v3542, %v3540
      %v3581 = vpack.c.bf16 %v3545, %v3543
      %v3582 = vpack.c.bf16 %v3546, %v3544
      %v3583 = vpack.c.bf16 %v3549, %v3547
      %v3584 = vpack.c.bf16 %v3550, %v3548
      %v3585 = vpack.c.bf16 %v3553, %v3551
      %v3586 = vpack.c.bf16 %v3554, %v3552
      %v3587 = vld [vmem:[#allocation2 + $0x140] sm:$0xff]
      %v3588 = vld [vmem:[#allocation2 + $0x148] sm:$0xff]
      %v3589 = vld [vmem:[#allocation2 + $0x160] sm:$0xff]
      %v3590 = vld [vmem:[#allocation2 + $0x168] sm:$0xff]
      %v3591 = vpack.c.bf16 %v3589, %v3587
      %v3592 = vpack.c.bf16 %v3590, %v3588
      %3593 = vmatprep.subr.bf16.mxu0 %v3556
      %3594 = vmatpush1.bf16.xpose.msra.mxu0 %v3555
      %3595 = vmatprep.subr.bf16.mxu0 %v3558
      %3596 = vmatpush1.bf16.xpose.msra.mxu0 %v3557
      %3597 = vmatprep.subr.bf16.mxu0 %v3560
      %3598 = vmatpush1.bf16.xpose.msra.mxu0 %v3559
      %3599 = vmatprep.subr.bf16.mxu0 %v3562
      %3600 = vmatpush1.bf16.xpose.msra.mxu0 %v3561
      %3601 = vmatprep.subr.bf16.mxu0 %v3564
      %3602 = vmatpush1.bf16.xpose.msra.mxu0 %v3563
      %3603 = vmatprep.subr.bf16.mxu0 %v3566
      %3604 = vmatpush1.bf16.xpose.msra.mxu0 %v3565
      %3605 = vmatprep.subr.bf16.mxu0 %v3568
      %3606 = vmatpush1.bf16.xpose.msra.mxu0 %v3567
      %3607 = vmatprep.subr.bf16.mxu0 %v3570
      %3608 = vmatpush1.bf16.xpose.msra.mxu0 %v3569
      %3609 = vmatprep.subr.bf16.mxu0 %v3572
      %3610 = vmatpush1.bf16.xpose.msra.mxu0 %v3571
      %3611 = vmatprep.subr.bf16.mxu0 %v3574
      %3612 = vmatpush1.bf16.xpose.msra.mxu0 %v3573
      %3613 = vmatprep.subr.bf16.mxu0 %v3576
      %3614 = vmatpush1.bf16.xpose.msra.mxu0 %v3575
      %3615 = vmatprep.subr.bf16.mxu0 %v3578
      %3616 = vmatpush1.bf16.xpose.msra.mxu0 %v3577
      %3617 = vmatprep.subr.bf16.mxu0 %v3580
      %3618 = vmatpush1.bf16.xpose.msra.mxu0 %v3579
      %3619 = vmatprep.subr.bf16.mxu0 %v3582
      %3620 = vmatpush1.bf16.xpose.msra.mxu0 %v3581
      %3621 = vmatprep.subr.bf16.mxu0 %v3584
      %3622 = vmatpush1.bf16.xpose.msra.mxu0 %v3583
      %3623 = vmatprep.subr.bf16.mxu0 %v3586
      %3624 = vmatpush1.bf16.xpose.msra.mxu0 %v3585
      %3625 = vmatprep.mubr.bf16.mxu0 %v3592
      %3626 = vmatmul.mubr.bf16.gmra.mrb[0].mxu0 %v3591
      %v3627 = vpop.f32.mrb[0].mxu0
      %v3628 = vadd.f32 0.0, %v3627
      %v3629 = vpop.f32.mrb[0].mxu0
      %v3630 = vadd.f32 0.0, %v3629
      %v3631 = vpop.f32.mrb[0].mxu0
      %v3632 = vadd.f32 0.0, %v3631
      %v3633 = vpop.f32.mrb[0].mxu0
      %v3634 = vadd.f32 0.0, %v3633
      %3635 = vdwg.mxu0
      %3636 = vst [vmem:[#allocation3 + $0x40] sm:$0xff] %v3628
      %3637 = vst [vmem:[#allocation3 + $0x48] sm:$0xff] %v3630
      %3638 = vst [vmem:[#allocation3 + $0x60] sm:$0xff] %v3632
      %3639 = vst [vmem:[#allocation3 + $0x68] sm:$0xff] %v3634
      %v3640 = vld [vmem:[#allocation2 + $0x150] sm:$0xff]
      %v3641 = vld [vmem:[#allocation2 + $0x158] sm:$0xff]
      %v3642 = vld [vmem:[#allocation2 + $0x170] sm:$0xff]
      %v3643 = vld [vmem:[#allocation2 + $0x178] sm:$0xff]
      %v3644 = vpack.c.bf16 %v3642, %v3640
      %v3645 = vpack.c.bf16 %v3643, %v3641
      %3646 = vmatprep.subr.bf16.mxu0 %v3556
      %3647 = vmatpush1.bf16.xpose.msra.mxu0 %v3555
      %3648 = vmatprep.subr.bf16.mxu0 %v3558
      %3649 = vmatpush1.bf16.xpose.msra.mxu0 %v3557
      %3650 = vmatprep.subr.bf16.mxu0 %v3560
      %3651 = vmatpush1.bf16.xpose.msra.mxu0 %v3559
      %3652 = vmatprep.subr.bf16.mxu0 %v3562
      %3653 = vmatpush1.bf16.xpose.msra.mxu0 %v3561
      %3654 = vmatprep.subr.bf16.mxu0 %v3564
      %3655 = vmatpush1.bf16.xpose.msra.mxu0 %v3563
      %3656 = vmatprep.subr.bf16.mxu0 %v3566
      %3657 = vmatpush1.bf16.xpose.msra.mxu0 %v3565
      %3658 = vmatprep.subr.bf16.mxu0 %v3568
      %3659 = vmatpush1.bf16.xpose.msra.mxu0 %v3567
      %3660 = vmatprep.subr.bf16.mxu0 %v3570
      %3661 = vmatpush1.bf16.xpose.msra.mxu0 %v3569
      %3662 = vmatprep.subr.bf16.mxu0 %v3572
      %3663 = vmatpush1.bf16.xpose.msra.mxu0 %v3571
      %3664 = vmatprep.subr.bf16.mxu0 %v3574
      %3665 = vmatpush1.bf16.xpose.msra.mxu0 %v3573
      %3666 = vmatprep.subr.bf16.mxu0 %v3576
      %3667 = vmatpush1.bf16.xpose.msra.mxu0 %v3575
      %3668 = vmatprep.subr.bf16.mxu0 %v3578
      %3669 = vmatpush1.bf16.xpose.msra.mxu0 %v3577
      %3670 = vmatprep.subr.bf16.mxu0 %v3580
      %3671 = vmatpush1.bf16.xpose.msra.mxu0 %v3579
      %3672 = vmatprep.subr.bf16.mxu0 %v3582
      %3673 = vmatpush1.bf16.xpose.msra.mxu0 %v3581
      %3674 = vmatprep.subr.bf16.mxu0 %v3584
      %3675 = vmatpush1.bf16.xpose.msra.mxu0 %v3583
      %3676 = vmatprep.subr.bf16.mxu0 %v3586
      %3677 = vmatpush1.bf16.xpose.msra.mxu0 %v3585
      %3678 = vmatprep.mubr.bf16.mxu0 %v3645
      %3679 = vmatmul.mubr.bf16.gmra.mrb[0].mxu0 %v3644
      %v3680 = vpop.f32.mrb[0].mxu0
      %v3681 = vadd.f32 0.0, %v3680
      %v3682 = vpop.f32.mrb[0].mxu0
      %v3683 = vadd.f32 0.0, %v3682
      %v3684 = vpop.f32.mrb[0].mxu0
      %v3685 = vadd.f32 0.0, %v3684
      %v3686 = vpop.f32.mrb[0].mxu0
      %v3687 = vadd.f32 0.0, %v3686
      %3688 = vdwg.mxu0
      %3689 = vst [vmem:[#allocation3 + $0x50] sm:$0xff] %v3681
      %3690 = vst [vmem:[#allocation3 + $0x58] sm:$0xff] %v3683
      %3691 = vst [vmem:[#allocation3 + $0x70] sm:$0xff] %v3685
      %3692 = vst [vmem:[#allocation3 + $0x78] sm:$0xff] %v3687
      %v3693 = vld [vmem:[%s3] sm:$0xf]
      %v3694 = vld [vmem:[%s3 + $0x4] sm:$0xf]
      %v3695 = vld [vmem:[%s3 + $0x8] sm:$0xf]
      %v3696 = vld [vmem:[%s3 + $0xc] sm:$0xf]
      %v3697 = vld [vmem:[#allocation3] sm:$0xff]
      %v3698 = vld [vmem:[#allocation3 + $0x8] sm:$0xff]
      %v3699 = vld [vmem:[#allocation3 + $0x10] sm:$0xff]
      %v3700 = vld [vmem:[#allocation3 + $0x18] sm:$0xff]
      %v3701 = vld [vmem:[#allocation3 + $0x20] sm:$0xff]
      %v3702 = vld [vmem:[#allocation3 + $0x28] sm:$0xff]
      %v3703 = vld [vmem:[#allocation3 + $0x30] sm:$0xff]
      %v3704 = vld [vmem:[#allocation3 + $0x38] sm:$0xff]
      %v3705 = vld [vmem:[#allocation3 + $0x40] sm:$0xff]
      %v3706 = vld [vmem:[#allocation3 + $0x48] sm:$0xff]
      %v3707 = vld [vmem:[#allocation3 + $0x50] sm:$0xff]
      %v3708 = vld [vmem:[#allocation3 + $0x58] sm:$0xff]
      %v3709 = vld [vmem:[#allocation3 + $0x60] sm:$0xff]
      %v3710 = vld [vmem:[#allocation3 + $0x68] sm:$0xff]
      %v3711 = vld [vmem:[#allocation3 + $0x70] sm:$0xff]
      %v3712 = vld [vmem:[#allocation3 + $0x78] sm:$0xff]
      %v3713 = vpack.c.bf16 %v3701, %v3697
      %v3714 = vpack.c.bf16 %v3702, %v3698
      %v3715 = vpack.c.bf16 %v3703, %v3699
      %v3716 = vpack.c.bf16 %v3704, %v3700
      %v3717 = vpack.c.bf16 %v3709, %v3705
      %v3718 = vpack.c.bf16 %v3710, %v3706
      %v3719 = vpack.c.bf16 %v3711, %v3707
      %v3720 = vpack.c.bf16 %v3712, %v3708
      %v3721 = vld [vmem:[%s4] sm:$0xff]
      %v3722 = vld [vmem:[%s4 + $0x8] sm:$0xff]
      %v3723 = vld [vmem:[%s4 + $0x10] sm:$0xff]
      %v3724 = vld [vmem:[%s4 + $0x18] sm:$0xff]
      %3726 = vset.pattern.permute.xlu0 0
      %3727 = vperm.xlu0 %3726, %v3721
      %v3728 = vpop.permute.xlu0 %3727
      %3731 = vset.pattern.permute.xlu0 0
      %3732 = vperm.xlu0 %3731, %v3722
      %v3733 = vpop.permute.xlu0 %3732
      %3736 = vset.pattern.permute.xlu0 0
      %3737 = vperm.xlu0 %3736, %v3723
      %v3738 = vpop.permute.xlu0 %3737
      %3741 = vset.pattern.permute.xlu0 0
      %3742 = vperm.xlu0 %3741, %v3724
      %v3743 = vpop.permute.xlu0 %3742
      %v3749 = vunpack.c.l.b16 %v3693
      %v3750 = vunpack.c.l.b16 %v3694
      %v3751 = vunpack.c.l.b16 %v3695
      %v3752 = vunpack.c.l.b16 %v3696
      %v3753 = vpack.c.b16 %v3750, %v3749
      %v3754 = vpack.c.b16 %v3752, %v3751
      %v3756 = vsel %vm410, %v3753, 0
      %v3759 = vsel %vm410, %v3754, 0
      %3761 = vmatprep.subr.bf16.mxu0 %v3714
      %3762 = vmatpush1.bf16.msra.mxu0 %v3713
      %3763 = vmatprep.subr.bf16.mxu0 %v3718
      %3764 = vmatpush1.bf16.msra.mxu0 %v3717
      %3765 = vmatprep.subr.bf16.mxu0 0
      %3766 = vmatpush1.bf16.msra.mxu0 0
      %3767 = vmatprep.subr.bf16.mxu0 0
      %3768 = vmatpush1.bf16.msra.mxu0 0
      %3769 = vmatprep.subr.bf16.mxu0 0
      %3770 = vmatpush1.bf16.msra.mxu0 0
      %3771 = vmatprep.subr.bf16.mxu0 0
      %3772 = vmatpush1.bf16.msra.mxu0 0
      %3773 = vmatprep.subr.bf16.mxu0 0
      %3774 = vmatpush1.bf16.msra.mxu0 0
      %3775 = vmatprep.subr.bf16.mxu0 0
      %3776 = vmatpush1.bf16.msra.mxu0 0
      %3777 = vmatprep.subr.bf16.mxu0 0
      %3778 = vmatpush1.bf16.msra.mxu0 0
      %3779 = vmatprep.subr.bf16.mxu0 0
      %3780 = vmatpush1.bf16.msra.mxu0 0
      %3781 = vmatprep.subr.bf16.mxu0 0
      %3782 = vmatpush1.bf16.msra.mxu0 0
      %3783 = vmatprep.subr.bf16.mxu0 0
      %3784 = vmatpush1.bf16.msra.mxu0 0
      %3785 = vmatprep.subr.bf16.mxu0 0
      %3786 = vmatpush1.bf16.msra.mxu0 0
      %3787 = vmatprep.subr.bf16.mxu0 0
      %3788 = vmatpush1.bf16.msra.mxu0 0
      %3789 = vmatprep.subr.bf16.mxu0 0
      %3790 = vmatpush1.bf16.msra.mxu0 0
      %3791 = vmatprep.subr.bf16.mxu0 0
      %3792 = vmatpush1.bf16.msra.mxu0 0
      %3793 = vmatprep.mubr.bf16.mxu0 0
      %3794 = vmatmul.mubr.bf16.gmra.mrb[0].mxu0 %v3756
      %v3795 = vpop.f32.mrb[0].mxu0
      %v3796 = vadd.f32 %v3728, %v3795
      %v3797 = vpop.f32.mrb[0].mxu0
      %v3798 = vadd.f32 %v3728, %v3797
      %v3799 = vpop.f32.mrb[0].mxu0
      %v3800 = vadd.f32 %v3733, %v3799
      %v3801 = vpop.f32.mrb[0].mxu0
      %v3802 = vadd.f32 %v3733, %v3801
      %3803 = vmatprep.mubr.bf16.mxu0 0
      %3804 = vmatmul.mubr.bf16.gmra.mrb[0].mxu0 %v3759
      %v3805 = vpop.f32.mrb[0].mxu0
      %v3806 = vadd.f32 %v3738, %v3805
      %v3807 = vpop.f32.mrb[0].mxu0
      %v3808 = vadd.f32 %v3738, %v3807
      %v3809 = vpop.f32.mrb[0].mxu0
      %v3810 = vadd.f32 %v3743, %v3809
      %v3811 = vpop.f32.mrb[0].mxu0
      %v3812 = vadd.f32 %v3743, %v3811
      %3813 = vdwg.mxu0
      %3814 = vmatprep.subr.bf16.mxu0 %v3716
      %3815 = vmatpush1.bf16.msra.mxu0 %v3715
      %3816 = vmatprep.subr.bf16.mxu0 %v3720
      %3817 = vmatpush1.bf16.msra.mxu0 %v3719
      %3818 = vmatprep.subr.bf16.mxu0 0
      %3819 = vmatpush1.bf16.msra.mxu0 0
      %3820 = vmatprep.subr.bf16.mxu0 0
      %3821 = vmatpush1.bf16.msra.mxu0 0
      %3822 = vmatprep.subr.bf16.mxu0 0
      %3823 = vmatpush1.bf16.msra.mxu0 0
      %3824 = vmatprep.subr.bf16.mxu0 0
      %3825 = vmatpush1.bf16.msra.mxu0 0
      %3826 = vmatprep.subr.bf16.mxu0 0
      %3827 = vmatpush1.bf16.msra.mxu0 0
      %3828 = vmatprep.subr.bf16.mxu0 0
      %3829 = vmatpush1.bf16.msra.mxu0 0
      %3830 = vmatprep.subr.bf16.mxu0 0
      %3831 = vmatpush1.bf16.msra.mxu0 0
      %3832 = vmatprep.subr.bf16.mxu0 0
      %3833 = vmatpush1.bf16.msra.mxu0 0
      %3834 = vmatprep.subr.bf16.mxu0 0
      %3835 = vmatpush1.bf16.msra.mxu0 0
      %3836 = vmatprep.subr.bf16.mxu0 0
      %3837 = vmatpush1.bf16.msra.mxu0 0
      %3838 = vmatprep.subr.bf16.mxu0 0
      %3839 = vmatpush1.bf16.msra.mxu0 0
      %3840 = vmatprep.subr.bf16.mxu0 0
      %3841 = vmatpush1.bf16.msra.mxu0 0
      %3842 = vmatprep.subr.bf16.mxu0 0
      %3843 = vmatpush1.bf16.msra.mxu0 0
      %3844 = vmatprep.subr.bf16.mxu0 0
      %3845 = vmatpush1.bf16.msra.mxu0 0
      %3846 = vmatprep.mubr.bf16.mxu0 0
      %3847 = vmatmul.mubr.bf16.gmra.mrb[0].mxu0 %v3756
      %v3848 = vpop.f32.mrb[0].mxu0
      %v3849 = vadd.f32 %v3728, %v3848
      %v3850 = vpop.f32.mrb[0].mxu0
      %v3851 = vadd.f32 %v3728, %v3850
      %v3852 = vpop.f32.mrb[0].mxu0
      %v3853 = vadd.f32 %v3733, %v3852
      %v3854 = vpop.f32.mrb[0].mxu0
      %v3855 = vadd.f32 %v3733, %v3854
      %3856 = vmatprep.mubr.bf16.mxu0 0
      %3857 = vmatmul.mubr.bf16.gmra.mrb[0].mxu0 %v3759
      %v3858 = vpop.f32.mrb[0].mxu0
      %v3859 = vadd.f32 %v3738, %v3858
      %v3860 = vpop.f32.mrb[0].mxu0
      %v3861 = vadd.f32 %v3738, %v3860
      %v3862 = vpop.f32.mrb[0].mxu0
      %v3863 = vadd.f32 %v3743, %v3862
      %v3864 = vpop.f32.mrb[0].mxu0
      %v3865 = vadd.f32 %v3743, %v3864
      %3866 = vdwg.mxu0
      %v3867 = vld [vmem:[%s327] sm:$0xff]
      %v3868 = vld [vmem:[%s327 + $0x8] sm:$0xff]
      %v3869 = vld [vmem:[%s327 + $0x10] sm:$0xff]
      %v3870 = vld [vmem:[%s327 + $0x18] sm:$0xff]
      %v3871 = vld [vmem:[%s327 + $0x20] sm:$0xff]
      %v3872 = vld [vmem:[%s327 + $0x28] sm:$0xff]
      %v3873 = vld [vmem:[%s327 + $0x30] sm:$0xff]
      %v3874 = vld [vmem:[%s327 + $0x38] sm:$0xff]
      %v3875 = vld [vmem:[%s327 + $0x40] sm:$0xff]
      %v3876 = vld [vmem:[%s327 + $0x48] sm:$0xff]
      %v3877 = vld [vmem:[%s327 + $0x50] sm:$0xff]
      %v3878 = vld [vmem:[%s327 + $0x58] sm:$0xff]
      %v3879 = vld [vmem:[%s327 + $0x60] sm:$0xff]
      %v3880 = vld [vmem:[%s327 + $0x68] sm:$0xff]
      %v3881 = vld [vmem:[%s327 + $0x70] sm:$0xff]
      %v3882 = vld [vmem:[%s327 + $0x78] sm:$0xff]
      %v3883 = vadd.f32 %v3867, %v3796
      %v3884 = vadd.f32 %v3868, %v3798
      %v3885 = vadd.f32 %v3869, %v3849
      %v3886 = vadd.f32 %v3870, %v3851
      %v3887 = vadd.f32 %v3871, %v3800
      %v3888 = vadd.f32 %v3872, %v3802
      %v3889 = vadd.f32 %v3873, %v3853
      %v3890 = vadd.f32 %v3874, %v3855
      %v3891 = vadd.f32 %v3875, %v3806
      %v3892 = vadd.f32 %v3876, %v3808
      %v3893 = vadd.f32 %v3877, %v3859
      %v3894 = vadd.f32 %v3878, %v3861
      %v3895 = vadd.f32 %v3879, %v3810
      %v3896 = vadd.f32 %v3880, %v3812
      %v3897 = vadd.f32 %v3881, %v3863
      %v3898 = vadd.f32 %v3882, %v3865
      %3899 = vst [vmem:[%s332] sm:$0xff] %v3883
      %3900 = vst [vmem:[%s332 + $0x8] sm:$0xff] %v3884
      %3901 = vst [vmem:[%s332 + $0x10] sm:$0xff] %v3885
      %3902 = vst [vmem:[%s332 + $0x18] sm:$0xff] %v3886
      %3903 = vst [vmem:[%s332 + $0x20] sm:$0xff] %v3887
      %3904 = vst [vmem:[%s332 + $0x28] sm:$0xff] %v3888
      %3905 = vst [vmem:[%s332 + $0x30] sm:$0xff] %v3889
      %3906 = vst [vmem:[%s332 + $0x38] sm:$0xff] %v3890
      %3907 = vst [vmem:[%s332 + $0x40] sm:$0xff] %v3891
      %3908 = vst [vmem:[%s332 + $0x48] sm:$0xff] %v3892
      %3909 = vst [vmem:[%s332 + $0x50] sm:$0xff] %v3893
      %3910 = vst [vmem:[%s332 + $0x58] sm:$0xff] %v3894
      %3911 = vst [vmem:[%s332 + $0x60] sm:$0xff] %v3895
      %3912 = vst [vmem:[%s332 + $0x68] sm:$0xff] %v3896
      %3913 = vst [vmem:[%s332 + $0x70] sm:$0xff] %v3897
      %3914 = vst [vmem:[%s332 + $0x78] sm:$0xff] %v3898
      %p3915 = scmp.lt.s32.totalorder %s20, 1
      %s3916 = scalar_select %p3915, %s20, 1
      %s3917 = smul.addr %s3916, 16
      %s3918 = smul.addr %s3917, 8
      %s3919 = scalar_lea.vmem %s9, %s3918
      // Predicated region
      $region57: #{attn_block_3d.1} parent=55 // pred_check
        %p3920 = pneg %p232
      $region58: #{attn_block_3d.1} parent=55 // pred_check_branch
        %3922 = sbr.rel (%p3920) target = $region60
      $region59: #{attn_block_3d.1} parent=55 // pred_region
        _
      $region60: #{attn_block_3d.1} parent=55 // pred_fallthru
        _
    $region56: #{attn_block_3d.1} parent=5 // pred_fallthru
      _
    %p3923 = scmp.le.s32.totalorder 2, %s15
    // Predicated region
    $region61: #{attn_block_3d.1} parent=5 // pred_check
      %p3924 = pneg %p3923
    $region62: #{attn_block_3d.1} parent=5 // pred_check_branch
      %3926 = sbr.rel (%p3924) target = $region64
    $region63: #{attn_block_3d.1} parent=5 // pred_region
      %s3927 = ssub.s32 %s15, 2
      // Predicated region
      $region65: #{attn_block_3d.1} parent=63 // pred_check
        %p3928 = pneg %p238
      $region66: #{attn_block_3d.1} parent=63 // pred_check_branch
        %3930 = sbr.rel (%p3928) target = $region68
      $region67: #{attn_block_3d.1} parent=63 // pred_region
        %p3931 = scmp.lt.s32.totalorder %s21, 1
        %s3932 = scalar_select %p3931, %s21, 1
        %s3933 = smul.addr %s3932, 16
        %s3934 = smul.addr %s3933, 8
        %s3935 = scalar_lea.vmem %s9, %s3934
      $region68: #{attn_block_3d.1} parent=63 // pred_fallthru
        _
    $region64: #{attn_block_3d.1} parent=5 // pred_fallthru
      _
  $region6: #{attn_block_3d.1} parent=0 // loop_footer
    %s19 = sadd.s32 1, %s15
  $region7: #{attn_block_3d.1} parent=0 // loop_footer_branch
    %14 = sbr.rel target = $region3
  $region8: #{attn_block_3d.1} parent=0 // loop_exit
    _

</llo_original>
